<compile_context>
chip_gen: v7x
topology: tpu7x:2x2x1
jax: 0.10.0
libtpu: 0.0.40
codegen_flags: <defaults>
</compile_context>

<pallas_src>
import jax
import jax.numpy as jnp
from jax.experimental import pallas as pl
from jax.experimental.pallas import tpu as pltpu


IN_DIM = 1000            # module input features (after nn.Flatten)
H1, H2, H3 = 1024, 256, 64
NUM_CLASSES = 6          # Braak-stage style classifier head
HEAD_PAD = 128           # lane-dense padded logit width
MAX_BATCH_TILE = 512     # large-batch tile (amortizes per-step overhead)


def mlp_kernel(x_ref,
               w1_ref, b1_ref,
               w2_ref, b2_ref,
               w3_ref, b3_ref,
               w4_ref, b4_ref,
               out_ref):
    # x tile: (tile, 1000) f32 -> bf16 cast in-kernel (VPU op, hidden under MXU).
    x = x_ref[...].astype(jnp.bfloat16)

    # Layer 1 (dominant): bf16 MXU matmul, f32 accumulation.
    h = jnp.dot(x, w1_ref[...], preferred_element_type=jnp.float32) + b1_ref[...]
    h = jnp.maximum(h, 0.0).astype(jnp.bfloat16)

    # Layer 2: bf16 MXU matmul, f32 accumulation.
    h = jnp.dot(h, w2_ref[...], preferred_element_type=jnp.float32) + b2_ref[...]
    h = jnp.maximum(h, 0.0)                       # stays f32 from here on

    # Layers 3-4 are tiny; keep them f32 for tighter parity with the f32 module.
    h = jnp.dot(h, w3_ref[...], preferred_element_type=jnp.float32) + b3_ref[...]
    h = jnp.maximum(h, 0.0)

    logits = jnp.dot(h, w4_ref[...], preferred_element_type=jnp.float32) + b4_ref[...]
    out_ref[...] = logits.astype(out_ref.dtype)   # (tile, HEAD_PAD) f32, lane-dense


def _round_up(n, m):
    return ((n + m - 1) // m) * m


def _choose_batch_tile(B):
    """Pick a batch tile: clamp for tiny batches, split so v7x's 2 TCs get work."""
    B = max(B, 1)
    tile = min(MAX_BATCH_TILE, _round_up(B, 8))   # 8-row sublane granularity
    b_pad = _round_up(B, tile)
    # Single grid step but >= 512 padded rows: split in two (no extra padding)
    # so the "parallel" batch axis spans both v7x TensorCores.
    if b_pad // tile == 1 and b_pad >= 512 and b_pad % 256 == 0:
        tile = b_pad // 2
    return tile, b_pad


def init_params(key, num_classes=NUM_CLASSES):
    """Deterministic synthetic parameters, PyTorch nn.Linear-style uniform init.

    Stored as (in_features, out_features) == W.T relative to PyTorch's (out, in).
    """
    dims = [(IN_DIM, H1), (H1, H2), (H2, H3), (H3, num_classes)]
    params = {}
    for idx, (fan_in, fan_out) in enumerate(dims, start=1):
        key, kw, kb = jax.random.split(key, 3)
        bound = 1.0 / jnp.sqrt(fan_in)
        params[f"w{idx}"] = jax.random.uniform(
            kw, (fan_in, fan_out), jnp.float32, -bound, bound)
        params[f"b{idx}"] = jax.random.uniform(
            kb, (1, fan_out), jnp.float32, -bound, bound)
    return params


def prepare_kernel_params(params):
    """Cast/pad natural f32 params into kernel layout.

    Layers 1-2: bf16 weights (MXU-heavy). Layers 3-4: f32 (tiny; head padded to
    a lane-dense 128-wide slab). Biases stay f32 with shape (1, out).
    """
    num_classes = params["w4"].shape[1]
    assert num_classes <= HEAD_PAD
    w4 = jnp.pad(params["w4"], ((0, 0), (0, HEAD_PAD - num_classes)))
    b4 = jnp.pad(params["b4"], ((0, 0), (0, HEAD_PAD - num_classes)))
    return dict(
        w1=params["w1"].astype(jnp.bfloat16), b1=params["b1"].astype(jnp.float32),
        w2=params["w2"].astype(jnp.bfloat16), b2=params["b2"].astype(jnp.float32),
        w3=params["w3"].astype(jnp.float32),  b3=params["b3"].astype(jnp.float32),
        w4=w4.astype(jnp.float32),            b4=b4.astype(jnp.float32),
    )


def mlp_forward(x, kparams, *, num_classes=NUM_CLASSES):
    """x: (B, ...) with prod(...) == 1000 (nn.Flatten). Returns (B, num_classes) f32."""
    B = x.shape[0]
    x = x.reshape(B, -1).astype(jnp.float32)                 # nn.Flatten
    assert x.shape[1] == IN_DIM

    batch_tile, b_pad = _choose_batch_tile(B)
    if b_pad != B:                                           # row-only pad (cheap / elided)
        x = jnp.pad(x, ((0, b_pad - B), (0, 0)))

    w1, b1 = kparams["w1"], kparams["b1"]
    w2, b2 = kparams["w2"], kparams["b2"]
    w3, b3 = kparams["w3"], kparams["b3"]
    w4, b4 = kparams["w4"], kparams["b4"]
    weights = (w1, b1, w2, b2, w3, b3, w4, b4)

    def invariant(a):
        # Grid-invariant block: DMA'd once, single-buffered (no duplicate copy).
        return pl.BlockSpec(a.shape, lambda i: (0, 0), pipeline_mode=pl.Buffered(1))

    # Right-size the VMEM budget: 2x weights (safety if single-buffering is
    # ignored) + double-buffered x/out tiles + activation scratch + headroom.
    weight_bytes = sum(a.size * a.dtype.itemsize for a in weights)
    x_tile_bytes = batch_tile * IN_DIM * 4
    out_tile_bytes = batch_tile * HEAD_PAD * 4
    act_bytes = batch_tile * (H1 + H2 + H3) * 4
    vmem_limit = int(min(
        2 * weight_bytes + 2 * (x_tile_bytes + out_tile_bytes) + 2 * act_bytes
        + (4 << 20),
        64 << 20))

    flops = 2 * b_pad * (IN_DIM * H1 + H1 * H2 + H2 * H3 + H3 * HEAD_PAD)
    bytes_accessed = (x.size * 4 + weight_bytes + b_pad * HEAD_PAD * 4)

    out = pl.pallas_call(
        mlp_kernel,
        out_shape=jax.ShapeDtypeStruct((b_pad, HEAD_PAD), jnp.float32),
        grid_spec=pltpu.PrefetchScalarGridSpec(
            num_scalar_prefetch=0,
            grid=(b_pad // batch_tile,),
            in_specs=[
                pl.BlockSpec((batch_tile, IN_DIM), lambda i: (i, 0)),   # x tile
                invariant(w1), invariant(b1),
                invariant(w2), invariant(b2),
                invariant(w3), invariant(b3),
                invariant(w4), invariant(b4),
            ],
            out_specs=pl.BlockSpec((batch_tile, HEAD_PAD), lambda i: (i, 0)),
        ),
        compiler_params=pltpu.CompilerParams(
            dimension_semantics=("parallel",),     # batch splits across TCs (v7x)
            vmem_limit_bytes=vmem_limit,
        ),
        cost_estimate=pl.CostEstimate(
            flops=flops, transcendentals=0, bytes_accessed=bytes_accessed),
    )(x, w1, b1, w2, b2, w3, b3, w4, b4)

    return out[:B, :num_classes]


def reference_forward(x, params):
    """Pure-jnp reference mirroring the kernel numerics: layers 1-2 bf16
    weights/activations with f32 accumulation, layers 3-4 f32."""
    B = x.shape[0]
    h = x.reshape(B, -1).astype(jnp.bfloat16)
    h = jnp.dot(h, params["w1"].astype(jnp.bfloat16),
                preferred_element_type=jnp.float32) + params["b1"]
    h = jnp.maximum(h, 0.0).astype(jnp.bfloat16)
    h = jnp.dot(h, params["w2"].astype(jnp.bfloat16),
                preferred_element_type=jnp.float32) + params["b2"]
    h = jnp.maximum(h, 0.0)
    h = jnp.dot(h, params["w3"], preferred_element_type=jnp.float32) + params["b3"]
    h = jnp.maximum(h, 0.0)
    return jnp.dot(h, params["w4"], preferred_element_type=jnp.float32) + params["b4"]


if __name__ == "__main__":
    key = jax.random.PRNGKey(0)
    key, kx = jax.random.split(key)

    # Small input consistent with the module: Flatten -> Linear(1000, ...).
    B = 4
    x = jax.random.normal(kx, (B, 10, 100), jnp.float32)    # flattens to (4, 1000)

    params = init_params(key)
    kparams = prepare_kernel_params(params)

    out = jax.block_until_ready(mlp_forward(x, kparams))
    ref = reference_forward(x, params)

    assert out.shape == (B, NUM_CLASSES)
    assert jnp.allclose(out, ref, atol=2e-2, rtol=2e-2), (
        "max abs err", float(jnp.max(jnp.abs(out - ref))))

    print("KERNEL_OK")
</pallas_src>

<mosaic_0001>
module attributes {stable_mosaic.version = 11 : i64} {
  func.func @mlp_kernel(%arg0: i32, %arg1: memref<8x1000xf32, #tpu.memory_space<vmem>>, %arg2: memref<1000x1024xbf16, #tpu.memory_space<vmem>>, %arg3: memref<1x1024xf32, #tpu.memory_space<vmem>>, %arg4: memref<1024x256xbf16, #tpu.memory_space<vmem>>, %arg5: memref<1x256xf32, #tpu.memory_space<vmem>>, %arg6: memref<256x64xf32, #tpu.memory_space<vmem>>, %arg7: memref<1x64xf32, #tpu.memory_space<vmem>>, %arg8: memref<64x128xf32, #tpu.memory_space<vmem>>, %arg9: memref<1x128xf32, #tpu.memory_space<vmem>>, %arg10: memref<8x128xf32, #tpu.memory_space<vmem>>) attributes {dimension_semantics = [#tpu.dimension_semantics<parallel>], iteration_bounds = array<i64: 1>, scalar_prefetch = 0 : i64, scratch_operands = 0 : i64, tpu.core_type = #tpu.core_type<tc>, window_params = [{transform_indices = @transform_0, window_bounds = array<i64: 8, 1000>}, {pipeline_mode = #tpu.pipeline_mode<synchronous>, transform_indices = @transform_1, window_bounds = array<i64: 1000, 1024>}, {pipeline_mode = #tpu.pipeline_mode<synchronous>, transform_indices = @transform_2, window_bounds = array<i64: 1, 1024>}, {pipeline_mode = #tpu.pipeline_mode<synchronous>, transform_indices = @transform_3, window_bounds = array<i64: 1024, 256>}, {pipeline_mode = #tpu.pipeline_mode<synchronous>, transform_indices = @transform_4, window_bounds = array<i64: 1, 256>}, {pipeline_mode = #tpu.pipeline_mode<synchronous>, transform_indices = @transform_5, window_bounds = array<i64: 256, 64>}, {pipeline_mode = #tpu.pipeline_mode<synchronous>, transform_indices = @transform_6, window_bounds = array<i64: 1, 64>}, {pipeline_mode = #tpu.pipeline_mode<synchronous>, transform_indices = @transform_7, window_bounds = array<i64: 64, 128>}, {pipeline_mode = #tpu.pipeline_mode<synchronous>, transform_indices = @transform_8, window_bounds = array<i64: 1, 128>}, {transform_indices = @transform_9, window_bounds = array<i64: 8, 128>}]} {
    %c0 = arith.constant 0 : index
    %c0_0 = arith.constant 0 : index
    %0 = vector.load %arg1[%c0, %c0_0] : memref<8x1000xf32, #tpu.memory_space<vmem>>, vector<8x1000xf32>
    %1 = arith.truncf %0 : vector<8x1000xf32> to vector<8x1000xbf16>
    %c0_1 = arith.constant 0 : index
    %c0_2 = arith.constant 0 : index
    %2 = vector.load %arg2[%c0_1, %c0_2] : memref<1000x1024xbf16, #tpu.memory_space<vmem>>, vector<1000x1024xbf16>
    %cst = arith.constant dense<0.000000e+00> : vector<8x1024xf32>
    %3 = tpu.matmul %1, %2, %cst {dimension_numbers = #tpu.dot_dimension_numbers<[1], [0], [0], [1], [0, 0, 1, 1], [], []>} : vector<8x1000xbf16>, vector<1000x1024xbf16>, vector<8x1024xf32> -> vector<8x1024xf32>
    %c0_3 = arith.constant 0 : index
    %c0_4 = arith.constant 0 : index
    %4 = vector.load %arg3[%c0_3, %c0_4] : memref<1x1024xf32, #tpu.memory_space<vmem>>, vector<1x1024xf32>
    %5 = vector.broadcast %4 : vector<1x1024xf32> to vector<8x1024xf32>
    %6 = arith.addf %3, %5 : vector<8x1024xf32>
    %cst_5 = arith.constant 0.000000e+00 : f32
    %7 = vector.broadcast %cst_5 : f32 to vector<8x1024xf32>
    %8 = arith.maximumf %6, %7 : vector<8x1024xf32>
    %9 = arith.truncf %8 : vector<8x1024xf32> to vector<8x1024xbf16>
    %c0_6 = arith.constant 0 : index
    %c0_7 = arith.constant 0 : index
    %10 = vector.load %arg4[%c0_6, %c0_7] : memref<1024x256xbf16, #tpu.memory_space<vmem>>, vector<1024x256xbf16>
    %cst_8 = arith.constant dense<0.000000e+00> : vector<8x256xf32>
    %11 = tpu.matmul %9, %10, %cst_8 {dimension_numbers = #tpu.dot_dimension_numbers<[1], [0], [0], [1], [0, 0, 1, 1], [], []>} : vector<8x1024xbf16>, vector<1024x256xbf16>, vector<8x256xf32> -> vector<8x256xf32>
    %c0_9 = arith.constant 0 : index
    %c0_10 = arith.constant 0 : index
    %12 = vector.load %arg5[%c0_9, %c0_10] : memref<1x256xf32, #tpu.memory_space<vmem>>, vector<1x256xf32>
    %13 = vector.broadcast %12 : vector<1x256xf32> to vector<8x256xf32>
    %14 = arith.addf %11, %13 : vector<8x256xf32>
    %cst_11 = arith.constant 0.000000e+00 : f32
    %15 = vector.broadcast %cst_11 : f32 to vector<8x256xf32>
    %16 = arith.maximumf %14, %15 : vector<8x256xf32>
    %c0_12 = arith.constant 0 : index
    %c0_13 = arith.constant 0 : index
    %17 = vector.load %arg6[%c0_12, %c0_13] : memref<256x64xf32, #tpu.memory_space<vmem>>, vector<256x64xf32>
    %cst_14 = arith.constant dense<0.000000e+00> : vector<8x64xf32>
    %18 = tpu.matmul %16, %17, %cst_14 {dimension_numbers = #tpu.dot_dimension_numbers<[1], [0], [0], [1], [0, 0, 1, 1], [], []>} : vector<8x256xf32>, vector<256x64xf32>, vector<8x64xf32> -> vector<8x64xf32>
    %c0_15 = arith.constant 0 : index
    %c0_16 = arith.constant 0 : index
    %19 = vector.load %arg7[%c0_15, %c0_16] : memref<1x64xf32, #tpu.memory_space<vmem>>, vector<1x64xf32>
    %20 = vector.broadcast %19 : vector<1x64xf32> to vector<8x64xf32>
    %21 = arith.addf %18, %20 : vector<8x64xf32>
    %cst_17 = arith.constant 0.000000e+00 : f32
    %22 = vector.broadcast %cst_17 : f32 to vector<8x64xf32>
    %23 = arith.maximumf %21, %22 : vector<8x64xf32>
    %c0_18 = arith.constant 0 : index
    %c0_19 = arith.constant 0 : index
    %24 = vector.load %arg8[%c0_18, %c0_19] : memref<64x128xf32, #tpu.memory_space<vmem>>, vector<64x128xf32>
    %cst_20 = arith.constant dense<0.000000e+00> : vector<8x128xf32>
    %25 = tpu.matmul %23, %24, %cst_20 {dimension_numbers = #tpu.dot_dimension_numbers<[1], [0], [0], [1], [0, 0, 1, 1], [], []>} : vector<8x64xf32>, vector<64x128xf32>, vector<8x128xf32> -> vector<8x128xf32>
    %c0_21 = arith.constant 0 : index
    %c0_22 = arith.constant 0 : index
    %26 = vector.load %arg9[%c0_21, %c0_22] : memref<1x128xf32, #tpu.memory_space<vmem>>, vector<1x128xf32>
    %27 = vector.broadcast %26 : vector<1x128xf32> to vector<8x128xf32>
    %28 = arith.addf %25, %27 : vector<8x128xf32>
    %c0_23 = arith.constant 0 : index
    %c0_24 = arith.constant 0 : index
    %29 = vector.load %arg10[%c0_23, %c0_24] : memref<8x128xf32, #tpu.memory_space<vmem>>, vector<8x128xf32>
    tpu.vector_store %arg10[%c0_23, %c0_24], %28 {strides = array<i32>} : memref<8x128xf32, #tpu.memory_space<vmem>>, vector<8x128xf32>,
    return
  }
  func.func @transform_0(%arg0: i32) -> (i32, i32) {
    %c0_i32 = arith.constant 0 : i32
    %c0_i32_0 = arith.constant 0 : i32
    return %arg0, %c0_i32 : i32, i32
  }
  func.func @transform_1(%arg0: i32) -> (i32, i32) {
    %c0_i32 = arith.constant 0 : i32
    %c0_i32_0 = arith.constant 0 : i32
    %c0_i32_1 = arith.constant 0 : i32
    return %c0_i32, %c0_i32_0 : i32, i32
  }
  func.func @transform_2(%arg0: i32) -> (i32, i32) {
    %c0_i32 = arith.constant 0 : i32
    %c0_i32_0 = arith.constant 0 : i32
    %c0_i32_1 = arith.constant 0 : i32
    return %c0_i32, %c0_i32_0 : i32, i32
  }
  func.func @transform_3(%arg0: i32) -> (i32, i32) {
    %c0_i32 = arith.constant 0 : i32
    %c0_i32_0 = arith.constant 0 : i32
    %c0_i32_1 = arith.constant 0 : i32
    return %c0_i32, %c0_i32_0 : i32, i32
  }
  func.func @transform_4(%arg0: i32) -> (i32, i32) {
    %c0_i32 = arith.constant 0 : i32
    %c0_i32_0 = arith.constant 0 : i32
    %c0_i32_1 = arith.constant 0 : i32
    return %c0_i32, %c0_i32_0 : i32, i32
  }
  func.func @transform_5(%arg0: i32) -> (i32, i32) {
    %c0_i32 = arith.constant 0 : i32
    %c0_i32_0 = arith.constant 0 : i32
    %c0_i32_1 = arith.constant 0 : i32
    return %c0_i32, %c0_i32_0 : i32, i32
  }
  func.func @transform_6(%arg0: i32) -> (i32, i32) {
    %c0_i32 = arith.constant 0 : i32
    %c0_i32_0 = arith.constant 0 : i32
    %c0_i32_1 = arith.constant 0 : i32
    return %c0_i32, %c0_i32_0 : i32, i32
  }
  func.func @transform_7(%arg0: i32) -> (i32, i32) {
    %c0_i32 = arith.constant 0 : i32
    %c0_i32_0 = arith.constant 0 : i32
    %c0_i32_1 = arith.constant 0 : i32
    return %c0_i32, %c0_i32_0 : i32, i32
  }
  func.func @transform_8(%arg0: i32) -> (i32, i32) {
    %c0_i32 = arith.constant 0 : i32
    %c0_i32_0 = arith.constant 0 : i32
    %c0_i32_1 = arith.constant 0 : i32
    return %c0_i32, %c0_i32_0 : i32, i32
  }
  func.func @transform_9(%arg0: i32) -> (i32, i32) {
    %c0_i32 = arith.constant 0 : i32
    %c0_i32_0 = arith.constant 0 : i32
    return %arg0, %c0_i32 : i32, i32
  }
}

</mosaic_0001>

<llo_original>
// kernel: tpu_custom_call.1
$region0: #{tpu_custom_call.1}
  #allocation0 [shape = 'u32[]', space=smem, size = 0x4, offset = 0x4, fixed_abs, tag = 'smem constant byte address 0x4 - core index']
  #allocation1 [shape = 'u32[144,128]{1,0:T(1,128)}', space=vmem, size = 0x12000, scoped, tag = 'internal scratch']
  %s0 = inlined_call_operand.hbm [shape: f32[8,1000], index: 0, kind: input, shape index: {}]
  %s1 = inlined_call_operand.hbm [shape: bf16[1000,1024], index: 1, kind: input, shape index: {}]
  %s2 = inlined_call_operand.hbm [shape: f32[1,1024], index: 2, kind: input, shape index: {}]
  %s3 = inlined_call_operand.hbm [shape: bf16[1024,256], index: 3, kind: input, shape index: {}]
  %s4 = inlined_call_operand.hbm [shape: f32[1,256], index: 4, kind: input, shape index: {}]
  %s5 = inlined_call_operand.vmem [shape: f32[256,64], index: 5, kind: input, shape index: {}]
  %s6 = inlined_call_operand.hbm [shape: f32[1,64], index: 6, kind: input, shape index: {}]
  %s7 = inlined_call_operand.hbm [shape: f32[64,128], index: 7, kind: input, shape index: {}]
  %s8 = inlined_call_operand.hbm [shape: f32[1,128], index: 8, kind: input, shape index: {}]
  %s9 = inlined_call_operand.hbm [shape: f32[8,128], index: 9, kind: output, shape index: {}]
  %s10 = sld [smem:[#allocation0]]
  $region78: #{tpu_custom_call.1} parent=0
    _
  %s12 = ssub.s32 1, %s10
  %s13 = scalar_select 0, %s12, %s10
  $region1: #{tpu_custom_call.1} parent=0
    #allocation2 [shape = 'u8[32768]{0}', space=vmem, size = 0x8000, scoped, tag = 'input window, operand 0, single buffered']
    #allocation3 [shape = 's32[1]{0}', space=sflag, size = 0x4, scoped, tag = 'scoped memory for tpu_custom_call.1']
    #allocation4 [shape = 's32[1]{0}', space=sflag, size = 0x4, scoped, tag = 'scoped memory for tpu_custom_call.1']
    #allocation5 [shape = 'u8[2048000]{0}', space=vmem, size = 0x1f4000, scoped, tag = 'input window, operand 1, single buffered']
    #allocation6 [shape = 's32[1]{0}', space=sflag, size = 0x4, scoped, tag = 'scoped memory for tpu_custom_call.1']
    #allocation7 [shape = 'u8[4096]{0}', space=vmem, size = 0x1000, scoped, tag = 'input window, operand 2, single buffered']
    #allocation8 [shape = 'u8[524288]{0}', space=vmem, size = 0x80000, scoped, tag = 'input window, operand 3, single buffered']
    #allocation9 [shape = 's32[1]{0}', space=sflag, size = 0x4, scoped, tag = 'scoped memory for tpu_custom_call.1']
    #allocation10 [shape = 'u8[1024]{0}', space=vmem, size = 0x400, scoped, tag = 'input window, operand 4, single buffered']
    #allocation11 [shape = 'u8[512]{0}', space=vmem, size = 0x400, scoped, tag = 'input window, operand 6, single buffered']
    #allocation12 [shape = 's32[1]{0}', space=sflag, size = 0x4, scoped, tag = 'scoped memory for tpu_custom_call.1']
    #allocation13 [shape = 'u8[32768]{0}', space=vmem, size = 0x8000, scoped, tag = 'input window, operand 7, single buffered']
    #allocation14 [shape = 'u8[512]{0}', space=vmem, size = 0x400, scoped, tag = 'input window, operand 8, single buffered']
    #allocation15 [shape = 's32[1]{0}', space=sflag, size = 0x4, scoped, tag = 'scoped memory for tpu_custom_call.1']
    #allocation16 [shape = 'u8[4096]{0}', space=vmem, size = 0x1000, scoped, tag = 'output window, operand 0, single buffered']
    %14 = vsyncpa [#allocation3], 0
    %15 = vsyncpa [#allocation6], 0
    %16 = vsyncpa [#allocation9], 0
    %17 = vsyncpa [#allocation12], 0
    %18 = vsyncpa [#allocation15], 0
    %19 = vsyncpa [#allocation4], 0
    // Predicated region
    $region2: #{tpu_custom_call.1} parent=1 // pred_check
      _
    $region3: #{tpu_custom_call.1} parent=1 // pred_check_branch
      %21 = sbr.rel (0) target = $region5
    $region4: #{tpu_custom_call.1} parent=1 // pred_region
      %s23 = ssub.s32 1024, 1024
      %24 = vsyncadd [#allocation3], %s23
      %s26 = sshll.u32 [#allocation2], 4
      %s27 = int_to_ptr.vmem [resolvable:$true] %s26
      %29 = dma.hbm_to_vmem [thread:$0]  %s0, 1024, %s27, [#allocation3]
    $region5: #{tpu_custom_call.1} parent=1 // pred_fallthru
      _
    // Predicated region
    $region6: #{tpu_custom_call.1} parent=1 // pred_check
      _
    $region7: #{tpu_custom_call.1} parent=1 // pred_check_branch
      %31 = sbr.rel (0) target = $region9
    $region8: #{tpu_custom_call.1} parent=1 // pred_region
      %s33 = ssub.s32 64000, 64000
      %34 = vsyncadd [#allocation6], %s33
      %s35 = sshll.u32 [#allocation5], 4
      %s36 = int_to_ptr.vmem [resolvable:$true] %s35
      %41 = dma.hbm_to_vmem [thread:$0]  %s1, 64000, %s36, [#allocation6], 512, 512, 32
    $region9: #{tpu_custom_call.1} parent=1 // pred_fallthru
      _
    // Predicated region
    $region10: #{tpu_custom_call.1} parent=1 // pred_check
      _
    $region11: #{tpu_custom_call.1} parent=1 // pred_check_branch
      %43 = sbr.rel (0) target = $region13
    $region12: #{tpu_custom_call.1} parent=1 // pred_region
      %s45 = ssub.s32 128, 128
      %46 = vsyncadd [#allocation6], %s45
      %s48 = sshll.u32 [#allocation7], 4
      %s49 = int_to_ptr.vmem [resolvable:$true] %s48
      %51 = dma.hbm_to_vmem [thread:$0]  %s2, 128, %s49, [#allocation6]
    $region13: #{tpu_custom_call.1} parent=1 // pred_fallthru
      _
    // Predicated region
    $region14: #{tpu_custom_call.1} parent=1 // pred_check
      _
    $region15: #{tpu_custom_call.1} parent=1 // pred_check_branch
      %53 = sbr.rel (0) target = $region17
    $region16: #{tpu_custom_call.1} parent=1 // pred_region
      %s55 = ssub.s32 16384, 16384
      %56 = vsyncadd [#allocation9], %s55
      %s57 = sshll.u32 [#allocation8], 4
      %s58 = int_to_ptr.vmem [resolvable:$true] %s57
      %63 = dma.hbm_to_vmem [thread:$0]  %s3, 16384, %s58, [#allocation9], 128, 128, 8
    $region17: #{tpu_custom_call.1} parent=1 // pred_fallthru
      _
    // Predicated region
    $region18: #{tpu_custom_call.1} parent=1 // pred_check
      _
    $region19: #{tpu_custom_call.1} parent=1 // pred_check_branch
      %65 = sbr.rel (0) target = $region21
    $region20: #{tpu_custom_call.1} parent=1 // pred_region
      %s67 = ssub.s32 32, 32
      %68 = vsyncadd [#allocation9], %s67
      %s70 = sshll.u32 [#allocation10], 4
      %s71 = int_to_ptr.vmem [resolvable:$true] %s70
      %73 = dma.hbm_to_vmem [thread:$0]  %s4, 32, %s71, [#allocation9]
    $region21: #{tpu_custom_call.1} parent=1 // pred_fallthru
      _
    // Predicated region
    $region22: #{tpu_custom_call.1} parent=1 // pred_check
      _
    $region23: #{tpu_custom_call.1} parent=1 // pred_check_branch
      %75 = sbr.rel (0) target = $region25
    $region24: #{tpu_custom_call.1} parent=1 // pred_region
      _
    $region25: #{tpu_custom_call.1} parent=1 // pred_fallthru
      _
    // Predicated region
    $region26: #{tpu_custom_call.1} parent=1 // pred_check
      _
    $region27: #{tpu_custom_call.1} parent=1 // pred_check_branch
      %77 = sbr.rel (0) target = $region29
    $region28: #{tpu_custom_call.1} parent=1 // pred_region
      %s79 = ssub.s32 16, 16
      %80 = vsyncadd [#allocation12], %s79
      %s82 = sshll.u32 [#allocation11], 4
      %s83 = int_to_ptr.vmem [resolvable:$true] %s82
      %85 = dma.hbm_to_vmem [thread:$0]  %s6, 16, %s83, [#allocation12]
    $region29: #{tpu_custom_call.1} parent=1 // pred_fallthru
      _
    // Predicated region
    $region30: #{tpu_custom_call.1} parent=1 // pred_check
      _
    $region31: #{tpu_custom_call.1} parent=1 // pred_check_branch
      %87 = sbr.rel (0) target = $region33
    $region32: #{tpu_custom_call.1} parent=1 // pred_region
      %s89 = ssub.s32 1024, 1024
      %90 = vsyncadd [#allocation12], %s89
      %s91 = sshll.u32 [#allocation13], 4
      %s92 = int_to_ptr.vmem [resolvable:$true] %s91
      %97 = dma.hbm_to_vmem [thread:$0]  %s7, 1024, %s92, [#allocation12], 128, 128, 8
    $region33: #{tpu_custom_call.1} parent=1 // pred_fallthru
      _
    // Predicated region
    $region34: #{tpu_custom_call.1} parent=1 // pred_check
      _
    $region35: #{tpu_custom_call.1} parent=1 // pred_check_branch
      %99 = sbr.rel (0) target = $region37
    $region36: #{tpu_custom_call.1} parent=1 // pred_region
      %s101 = ssub.s32 16, 16
      %102 = vsyncadd [#allocation15], %s101
      %s104 = sshll.u32 [#allocation14], 4
      %s105 = int_to_ptr.vmem [resolvable:$true] %s104
      %107 = dma.hbm_to_vmem [thread:$0]  %s8, 16, %s105, [#allocation15]
    $region37: #{tpu_custom_call.1} parent=1 // pred_fallthru
      _
    // Predicated region
    $region38: #{tpu_custom_call.1} parent=1 // pred_check
      _
    $region39: #{tpu_custom_call.1} parent=1 // pred_check_branch
      %109 = sbr.rel (0) target = $region41
    $region40: #{tpu_custom_call.1} parent=1 // pred_region
      %110 = dma.done [#allocation3], 1024
    $region41: #{tpu_custom_call.1} parent=1 // pred_fallthru
      _
    // Predicated region
    $region42: #{tpu_custom_call.1} parent=1 // pred_check
      _
    $region43: #{tpu_custom_call.1} parent=1 // pred_check_branch
      %112 = sbr.rel (0) target = $region45
    $region44: #{tpu_custom_call.1} parent=1 // pred_region
      %113 = dma.done [#allocation6], 64000
    $region45: #{tpu_custom_call.1} parent=1 // pred_fallthru
      _
    // Predicated region
    $region46: #{tpu_custom_call.1} parent=1 // pred_check
      _
    $region47: #{tpu_custom_call.1} parent=1 // pred_check_branch
      %115 = sbr.rel (0) target = $region49
    $region48: #{tpu_custom_call.1} parent=1 // pred_region
      %116 = dma.done [#allocation6], 128
    $region49: #{tpu_custom_call.1} parent=1 // pred_fallthru
      _
    // Predicated region
    $region50: #{tpu_custom_call.1} parent=1 // pred_check
      _
    $region51: #{tpu_custom_call.1} parent=1 // pred_check_branch
      %118 = sbr.rel (0) target = $region53
    $region52: #{tpu_custom_call.1} parent=1 // pred_region
      %119 = dma.done [#allocation9], 16384
    $region53: #{tpu_custom_call.1} parent=1 // pred_fallthru
      _
    // Predicated region
    $region54: #{tpu_custom_call.1} parent=1 // pred_check
      _
    $region55: #{tpu_custom_call.1} parent=1 // pred_check_branch
      %121 = sbr.rel (0) target = $region57
    $region56: #{tpu_custom_call.1} parent=1 // pred_region
      %122 = dma.done [#allocation9], 32
    $region57: #{tpu_custom_call.1} parent=1 // pred_fallthru
      _
    // Predicated region
    $region58: #{tpu_custom_call.1} parent=1 // pred_check
      _
    $region59: #{tpu_custom_call.1} parent=1 // pred_check_branch
      %124 = sbr.rel (0) target = $region61
    $region60: #{tpu_custom_call.1} parent=1 // pred_region
      %125 = dma.done [#allocation12], 16
    $region61: #{tpu_custom_call.1} parent=1 // pred_fallthru
      _
    // Predicated region
    $region62: #{tpu_custom_call.1} parent=1 // pred_check
      _
    $region63: #{tpu_custom_call.1} parent=1 // pred_check_branch
      %127 = sbr.rel (0) target = $region65
    $region64: #{tpu_custom_call.1} parent=1 // pred_region
      %128 = dma.done [#allocation12], 1024
    $region65: #{tpu_custom_call.1} parent=1 // pred_fallthru
      _
    // Predicated region
    $region66: #{tpu_custom_call.1} parent=1 // pred_check
      _
    $region67: #{tpu_custom_call.1} parent=1 // pred_check_branch
      %130 = sbr.rel (0) target = $region69
    $region68: #{tpu_custom_call.1} parent=1 // pred_region
      %131 = dma.done [#allocation15], 16
    $region69: #{tpu_custom_call.1} parent=1 // pred_fallthru
      _
    %v133 = vld [vmem:[#allocation2] sm:$0xff]
    %v134 = vld [vmem:[#allocation2 + $0x8] sm:$0xff]
    %v135 = vld [vmem:[#allocation2 + $0x10] sm:$0xff]
    %v136 = vld [vmem:[#allocation2 + $0x18] sm:$0xff]
    %v137 = vld [vmem:[#allocation2 + $0x20] sm:$0xff]
    %v138 = vld [vmem:[#allocation2 + $0x28] sm:$0xff]
    %v139 = vld [vmem:[#allocation2 + $0x30] sm:$0xff]
    %v140 = vld [vmem:[#allocation2 + $0x38] sm:$0xff]
    %v141 = vpack.c.bf16 %v133, %v133
    %v142 = vpack.c.bf16 %v134, %v134
    %v143 = vpack.c.bf16 %v135, %v135
    %v144 = vpack.c.bf16 %v136, %v136
    %v145 = vpack.c.bf16 %v137, %v137
    %v146 = vpack.c.bf16 %v138, %v138
    %v147 = vpack.c.bf16 %v139, %v139
    %v148 = vpack.c.bf16 %v140, %v140
    %v149 = vld [vmem:[#allocation5] sm:$0xff]
    %v150 = vld [vmem:[#allocation5 + $0x8] sm:$0xff]
    %v151 = vld [vmem:[#allocation5 + $0x10] sm:$0xff]
    %v152 = vld [vmem:[#allocation5 + $0x18] sm:$0xff]
    %v153 = vld [vmem:[#allocation5 + $0x20] sm:$0xff]
    %v154 = vld [vmem:[#allocation5 + $0x28] sm:$0xff]
    %v155 = vld [vmem:[#allocation5 + $0x30] sm:$0xff]
    %v156 = vld [vmem:[#allocation5 + $0x38] sm:$0xff]
    %v157 = vld [vmem:[#allocation5 + $0x40] sm:$0xff]
    %v158 = vld [vmem:[#allocation5 + $0x48] sm:$0xff]
    %v159 = vld [vmem:[#allocation5 + $0x50] sm:$0xff]
    %v160 = vld [vmem:[#allocation5 + $0x58] sm:$0xff]
    %v161 = vld [vmem:[#allocation5 + $0x60] sm:$0xff]
    %v162 = vld [vmem:[#allocation5 + $0x68] sm:$0xff]
    %v163 = vld [vmem:[#allocation5 + $0x70] sm:$0xff]
    %v164 = vld [vmem:[#allocation5 + $0x78] sm:$0xff]
    %v165 = vld [vmem:[#allocation5 + $0x80] sm:$0xff]
    %v166 = vld [vmem:[#allocation5 + $0x88] sm:$0xff]
    %v167 = vld [vmem:[#allocation5 + $0x90] sm:$0xff]
    %v168 = vld [vmem:[#allocation5 + $0x98] sm:$0xff]
    %v169 = vld [vmem:[#allocation5 + $0xa0] sm:$0xff]
    %v170 = vld [vmem:[#allocation5 + $0xa8] sm:$0xff]
    %v171 = vld [vmem:[#allocation5 + $0xb0] sm:$0xff]
    %v172 = vld [vmem:[#allocation5 + $0xb8] sm:$0xff]
    %v173 = vld [vmem:[#allocation5 + $0xc0] sm:$0xff]
    %v174 = vld [vmem:[#allocation5 + $0xc8] sm:$0xff]
    %v175 = vld [vmem:[#allocation5 + $0xd0] sm:$0xff]
    %v176 = vld [vmem:[#allocation5 + $0xd8] sm:$0xff]
    %v177 = vld [vmem:[#allocation5 + $0xe0] sm:$0xff]
    %v178 = vld [vmem:[#allocation5 + $0xe8] sm:$0xff]
    %v179 = vld [vmem:[#allocation5 + $0xf0] sm:$0xff]
    %v180 = vld [vmem:[#allocation5 + $0xf8] sm:$0xff]
    %v181 = vld [vmem:[#allocation5 + $0x100] sm:$0xff]
    %v182 = vld [vmem:[#allocation5 + $0x108] sm:$0xff]
    %v183 = vld [vmem:[#allocation5 + $0x110] sm:$0xff]
    %v184 = vld [vmem:[#allocation5 + $0x118] sm:$0xff]
    %v185 = vld [vmem:[#allocation5 + $0x120] sm:$0xff]
    %v186 = vld [vmem:[#allocation5 + $0x128] sm:$0xff]
    %v187 = vld [vmem:[#allocation5 + $0x130] sm:$0xff]
    %v188 = vld [vmem:[#allocation5 + $0x138] sm:$0xff]
    %v189 = vld [vmem:[#allocation5 + $0x140] sm:$0xff]
    %v190 = vld [vmem:[#allocation5 + $0x148] sm:$0xff]
    %v191 = vld [vmem:[#allocation5 + $0x150] sm:$0xff]
    %v192 = vld [vmem:[#allocation5 + $0x158] sm:$0xff]
    %v193 = vld [vmem:[#allocation5 + $0x160] sm:$0xff]
    %v194 = vld [vmem:[#allocation5 + $0x168] sm:$0xff]
    %v195 = vld [vmem:[#allocation5 + $0x170] sm:$0xff]
    %v196 = vld [vmem:[#allocation5 + $0x178] sm:$0xff]
    %v197 = vld [vmem:[#allocation5 + $0x180] sm:$0xff]
    %v198 = vld [vmem:[#allocation5 + $0x188] sm:$0xff]
    %v199 = vld [vmem:[#allocation5 + $0x190] sm:$0xff]
    %v200 = vld [vmem:[#allocation5 + $0x198] sm:$0xff]
    %v201 = vld [vmem:[#allocation5 + $0x1a0] sm:$0xff]
    %v202 = vld [vmem:[#allocation5 + $0x1a8] sm:$0xff]
    %v203 = vld [vmem:[#allocation5 + $0x1b0] sm:$0xff]
    %v204 = vld [vmem:[#allocation5 + $0x1b8] sm:$0xff]
    %v205 = vld [vmem:[#allocation5 + $0x1c0] sm:$0xff]
    %v206 = vld [vmem:[#allocation5 + $0x1c8] sm:$0xff]
    %v207 = vld [vmem:[#allocation5 + $0x1d0] sm:$0xff]
    %v208 = vld [vmem:[#allocation5 + $0x1d8] sm:$0xff]
    %v209 = vld [vmem:[#allocation5 + $0x1e0] sm:$0xff]
    %v210 = vld [vmem:[#allocation5 + $0x1e8] sm:$0xff]
    %v211 = vld [vmem:[#allocation5 + $0x1f0] sm:$0xff]
    %v212 = vld [vmem:[#allocation5 + $0x1f8] sm:$0xff]
    %v213 = vld [vmem:[#allocation5 + $0x200] sm:$0xff]
    %v214 = vld [vmem:[#allocation5 + $0x208] sm:$0xff]
    %v215 = vld [vmem:[#allocation5 + $0x210] sm:$0xff]
    %v216 = vld [vmem:[#allocation5 + $0x218] sm:$0xff]
    %v217 = vld [vmem:[#allocation5 + $0x220] sm:$0xff]
    %v218 = vld [vmem:[#allocation5 + $0x228] sm:$0xff]
    %v219 = vld [vmem:[#allocation5 + $0x230] sm:$0xff]
    %v220 = vld [vmem:[#allocation5 + $0x238] sm:$0xff]
    %v221 = vld [vmem:[#allocation5 + $0x240] sm:$0xff]
    %v222 = vld [vmem:[#allocation5 + $0x248] sm:$0xff]
    %v223 = vld [vmem:[#allocation5 + $0x250] sm:$0xff]
    %v224 = vld [vmem:[#allocation5 + $0x258] sm:$0xff]
    %v225 = vld [vmem:[#allocation5 + $0x260] sm:$0xff]
    %v226 = vld [vmem:[#allocation5 + $0x268] sm:$0xff]
    %v227 = vld [vmem:[#allocation5 + $0x270] sm:$0xff]
    %v228 = vld [vmem:[#allocation5 + $0x278] sm:$0xff]
    %v229 = vld [vmem:[#allocation5 + $0x280] sm:$0xff]
    %v230 = vld [vmem:[#allocation5 + $0x288] sm:$0xff]
    %v231 = vld [vmem:[#allocation5 + $0x290] sm:$0xff]
    %v232 = vld [vmem:[#allocation5 + $0x298] sm:$0xff]
    %v233 = vld [vmem:[#allocation5 + $0x2a0] sm:$0xff]
    %v234 = vld [vmem:[#allocation5 + $0x2a8] sm:$0xff]
    %v235 = vld [vmem:[#allocation5 + $0x2b0] sm:$0xff]
    %v236 = vld [vmem:[#allocation5 + $0x2b8] sm:$0xff]
    %v237 = vld [vmem:[#allocation5 + $0x2c0] sm:$0xff]
    %v238 = vld [vmem:[#allocation5 + $0x2c8] sm:$0xff]
    %v239 = vld [vmem:[#allocation5 + $0x2d0] sm:$0xff]
    %v240 = vld [vmem:[#allocation5 + $0x2d8] sm:$0xff]
    %v241 = vld [vmem:[#allocation5 + $0x2e0] sm:$0xff]
    %v242 = vld [vmem:[#allocation5 + $0x2e8] sm:$0xff]
    %v243 = vld [vmem:[#allocation5 + $0x2f0] sm:$0xff]
    %v244 = vld [vmem:[#allocation5 + $0x2f8] sm:$0xff]
    %v245 = vld [vmem:[#allocation5 + $0x300] sm:$0xff]
    %v246 = vld [vmem:[#allocation5 + $0x308] sm:$0xff]
    %v247 = vld [vmem:[#allocation5 + $0x310] sm:$0xff]
    %v248 = vld [vmem:[#allocation5 + $0x318] sm:$0xff]
    %v249 = vld [vmem:[#allocation5 + $0x320] sm:$0xff]
    %v250 = vld [vmem:[#allocation5 + $0x328] sm:$0xff]
    %v251 = vld [vmem:[#allocation5 + $0x330] sm:$0xff]
    %v252 = vld [vmem:[#allocation5 + $0x338] sm:$0xff]
    %v253 = vld [vmem:[#allocation5 + $0x340] sm:$0xff]
    %v254 = vld [vmem:[#allocation5 + $0x348] sm:$0xff]
    %v255 = vld [vmem:[#allocation5 + $0x350] sm:$0xff]
    %v256 = vld [vmem:[#allocation5 + $0x358] sm:$0xff]
    %v257 = vld [vmem:[#allocation5 + $0x360] sm:$0xff]
    %v258 = vld [vmem:[#allocation5 + $0x368] sm:$0xff]
    %v259 = vld [vmem:[#allocation5 + $0x370] sm:$0xff]
    %v260 = vld [vmem:[#allocation5 + $0x378] sm:$0xff]
    %v261 = vld [vmem:[#allocation5 + $0x380] sm:$0xff]
    %v262 = vld [vmem:[#allocation5 + $0x388] sm:$0xff]
    %v263 = vld [vmem:[#allocation5 + $0x390] sm:$0xff]
    %v264 = vld [vmem:[#allocation5 + $0x398] sm:$0xff]
    %v265 = vld [vmem:[#allocation5 + $0x3a0] sm:$0xff]
    %v266 = vld [vmem:[#allocation5 + $0x3a8] sm:$0xff]
    %v267 = vld [vmem:[#allocation5 + $0x3b0] sm:$0xff]
    %v268 = vld [vmem:[#allocation5 + $0x3b8] sm:$0xff]
    %v269 = vld [vmem:[#allocation5 + $0x3c0] sm:$0xff]
    %v270 = vld [vmem:[#allocation5 + $0x3c8] sm:$0xff]
    %v271 = vld [vmem:[#allocation5 + $0x3d0] sm:$0xff]
    %v272 = vld [vmem:[#allocation5 + $0x3d8] sm:$0xff]
    %v273 = vld [vmem:[#allocation5 + $0x3e0] sm:$0xff]
    %v274 = vld [vmem:[#allocation5 + $0x3e8] sm:$0xff]
    %v275 = vld [vmem:[#allocation5 + $0x3f0] sm:$0xff]
    %v276 = vld [vmem:[#allocation5 + $0x3f8] sm:$0xff]
    %v277 = vld [vmem:[#allocation5 + $0x400] sm:$0xff]
    %v278 = vld [vmem:[#allocation5 + $0x408] sm:$0xff]
    %v279 = vld [vmem:[#allocation5 + $0x410] sm:$0xff]
    %v280 = vld [vmem:[#allocation5 + $0x418] sm:$0xff]
    %v281 = vld [vmem:[#allocation5 + $0x420] sm:$0xff]
    %v282 = vld [vmem:[#allocation5 + $0x428] sm:$0xff]
    %v283 = vld [vmem:[#allocation5 + $0x430] sm:$0xff]
    %v284 = vld [vmem:[#allocation5 + $0x438] sm:$0xff]
    %v285 = vld [vmem:[#allocation5 + $0x440] sm:$0xff]
    %v286 = vld [vmem:[#allocation5 + $0x448] sm:$0xff]
    %v287 = vld [vmem:[#allocation5 + $0x450] sm:$0xff]
    %v288 = vld [vmem:[#allocation5 + $0x458] sm:$0xff]
    %v289 = vld [vmem:[#allocation5 + $0x460] sm:$0xff]
    %v290 = vld [vmem:[#allocation5 + $0x468] sm:$0xff]
    %v291 = vld [vmem:[#allocation5 + $0x470] sm:$0xff]
    %v292 = vld [vmem:[#allocation5 + $0x478] sm:$0xff]
    %v293 = vld [vmem:[#allocation5 + $0x480] sm:$0xff]
    %v294 = vld [vmem:[#allocation5 + $0x488] sm:$0xff]
    %v295 = vld [vmem:[#allocation5 + $0x490] sm:$0xff]
    %v296 = vld [vmem:[#allocation5 + $0x498] sm:$0xff]
    %v297 = vld [vmem:[#allocation5 + $0x4a0] sm:$0xff]
    %v298 = vld [vmem:[#allocation5 + $0x4a8] sm:$0xff]
    %v299 = vld [vmem:[#allocation5 + $0x4b0] sm:$0xff]
    %v300 = vld [vmem:[#allocation5 + $0x4b8] sm:$0xff]
    %v301 = vld [vmem:[#allocation5 + $0x4c0] sm:$0xff]
    %v302 = vld [vmem:[#allocation5 + $0x4c8] sm:$0xff]
    %v303 = vld [vmem:[#allocation5 + $0x4d0] sm:$0xff]
    %v304 = vld [vmem:[#allocation5 + $0x4d8] sm:$0xff]
    %v305 = vld [vmem:[#allocation5 + $0x4e0] sm:$0xff]
    %v306 = vld [vmem:[#allocation5 + $0x4e8] sm:$0xff]
    %v307 = vld [vmem:[#allocation5 + $0x4f0] sm:$0xff]
    %v308 = vld [vmem:[#allocation5 + $0x4f8] sm:$0xff]
    %v309 = vld [vmem:[#allocation5 + $0x500] sm:$0xff]
    %v310 = vld [vmem:[#allocation5 + $0x508] sm:$0xff]
    %v311 = vld [vmem:[#allocation5 + $0x510] sm:$0xff]
    %v312 = vld [vmem:[#allocation5 + $0x518] sm:$0xff]
    %v313 = vld [vmem:[#allocation5 + $0x520] sm:$0xff]
    %v314 = vld [vmem:[#allocation5 + $0x528] sm:$0xff]
    %v315 = vld [vmem:[#allocation5 + $0x530] sm:$0xff]
    %v316 = vld [vmem:[#allocation5 + $0x538] sm:$0xff]
    %v317 = vld [vmem:[#allocation5 + $0x540] sm:$0xff]
    %v318 = vld [vmem:[#allocation5 + $0x548] sm:$0xff]
    %v319 = vld [vmem:[#allocation5 + $0x550] sm:$0xff]
    %v320 = vld [vmem:[#allocation5 + $0x558] sm:$0xff]
    %v321 = vld [vmem:[#allocation5 + $0x560] sm:$0xff]
    %v322 = vld [vmem:[#allocation5 + $0x568] sm:$0xff]
    %v323 = vld [vmem:[#allocation5 + $0x570] sm:$0xff]
    %v324 = vld [vmem:[#allocation5 + $0x578] sm:$0xff]
    %v325 = vld [vmem:[#allocation5 + $0x580] sm:$0xff]
    %v326 = vld [vmem:[#allocation5 + $0x588] sm:$0xff]
    %v327 = vld [vmem:[#allocation5 + $0x590] sm:$0xff]
    %v328 = vld [vmem:[#allocation5 + $0x598] sm:$0xff]
    %v329 = vld [vmem:[#allocation5 + $0x5a0] sm:$0xff]
    %v330 = vld [vmem:[#allocation5 + $0x5a8] sm:$0xff]
    %v331 = vld [vmem:[#allocation5 + $0x5b0] sm:$0xff]
    %v332 = vld [vmem:[#allocation5 + $0x5b8] sm:$0xff]
    %v333 = vld [vmem:[#allocation5 + $0x5c0] sm:$0xff]
    %v334 = vld [vmem:[#allocation5 + $0x5c8] sm:$0xff]
    %v335 = vld [vmem:[#allocation5 + $0x5d0] sm:$0xff]
    %v336 = vld [vmem:[#allocation5 + $0x5d8] sm:$0xff]
    %v337 = vld [vmem:[#allocation5 + $0x5e0] sm:$0xff]
    %v338 = vld [vmem:[#allocation5 + $0x5e8] sm:$0xff]
    %v339 = vld [vmem:[#allocation5 + $0x5f0] sm:$0xff]
    %v340 = vld [vmem:[#allocation5 + $0x5f8] sm:$0xff]
    %v341 = vld [vmem:[#allocation5 + $0x600] sm:$0xff]
    %v342 = vld [vmem:[#allocation5 + $0x608] sm:$0xff]
    %v343 = vld [vmem:[#allocation5 + $0x610] sm:$0xff]
    %v344 = vld [vmem:[#allocation5 + $0x618] sm:$0xff]
    %v345 = vld [vmem:[#allocation5 + $0x620] sm:$0xff]
    %v346 = vld [vmem:[#allocation5 + $0x628] sm:$0xff]
    %v347 = vld [vmem:[#allocation5 + $0x630] sm:$0xff]
    %v348 = vld [vmem:[#allocation5 + $0x638] sm:$0xff]
    %v349 = vld [vmem:[#allocation5 + $0x640] sm:$0xff]
    %v350 = vld [vmem:[#allocation5 + $0x648] sm:$0xff]
    %v351 = vld [vmem:[#allocation5 + $0x650] sm:$0xff]
    %v352 = vld [vmem:[#allocation5 + $0x658] sm:$0xff]
    %v353 = vld [vmem:[#allocation5 + $0x660] sm:$0xff]
    %v354 = vld [vmem:[#allocation5 + $0x668] sm:$0xff]
    %v355 = vld [vmem:[#allocation5 + $0x670] sm:$0xff]
    %v356 = vld [vmem:[#allocation5 + $0x678] sm:$0xff]
    %v357 = vld [vmem:[#allocation5 + $0x680] sm:$0xff]
    %v358 = vld [vmem:[#allocation5 + $0x688] sm:$0xff]
    %v359 = vld [vmem:[#allocation5 + $0x690] sm:$0xff]
    %v360 = vld [vmem:[#allocation5 + $0x698] sm:$0xff]
    %v361 = vld [vmem:[#allocation5 + $0x6a0] sm:$0xff]
    %v362 = vld [vmem:[#allocation5 + $0x6a8] sm:$0xff]
    %v363 = vld [vmem:[#allocation5 + $0x6b0] sm:$0xff]
    %v364 = vld [vmem:[#allocation5 + $0x6b8] sm:$0xff]
    %v365 = vld [vmem:[#allocation5 + $0x6c0] sm:$0xff]
    %v366 = vld [vmem:[#allocation5 + $0x6c8] sm:$0xff]
    %v367 = vld [vmem:[#allocation5 + $0x6d0] sm:$0xff]
    %v368 = vld [vmem:[#allocation5 + $0x6d8] sm:$0xff]
    %v369 = vld [vmem:[#allocation5 + $0x6e0] sm:$0xff]
    %v370 = vld [vmem:[#allocation5 + $0x6e8] sm:$0xff]
    %v371 = vld [vmem:[#allocation5 + $0x6f0] sm:$0xff]
    %v372 = vld [vmem:[#allocation5 + $0x6f8] sm:$0xff]
    %v373 = vld [vmem:[#allocation5 + $0x700] sm:$0xff]
    %v374 = vld [vmem:[#allocation5 + $0x708] sm:$0xff]
    %v375 = vld [vmem:[#allocation5 + $0x710] sm:$0xff]
    %v376 = vld [vmem:[#allocation5 + $0x718] sm:$0xff]
    %v377 = vld [vmem:[#allocation5 + $0x720] sm:$0xff]
    %v378 = vld [vmem:[#allocation5 + $0x728] sm:$0xff]
    %v379 = vld [vmem:[#allocation5 + $0x730] sm:$0xff]
    %v380 = vld [vmem:[#allocation5 + $0x738] sm:$0xff]
    %v381 = vld [vmem:[#allocation5 + $0x740] sm:$0xff]
    %v382 = vld [vmem:[#allocation5 + $0x748] sm:$0xff]
    %v383 = vld [vmem:[#allocation5 + $0x750] sm:$0xff]
    %v384 = vld [vmem:[#allocation5 + $0x758] sm:$0xff]
    %v385 = vld [vmem:[#allocation5 + $0x760] sm:$0xff]
    %v386 = vld [vmem:[#allocation5 + $0x768] sm:$0xff]
    %v387 = vld [vmem:[#allocation5 + $0x770] sm:$0xff]
    %v388 = vld [vmem:[#allocation5 + $0x778] sm:$0xff]
    %v389 = vld [vmem:[#allocation5 + $0x780] sm:$0xff]
    %v390 = vld [vmem:[#allocation5 + $0x788] sm:$0xff]
    %v391 = vld [vmem:[#allocation5 + $0x790] sm:$0xff]
    %v392 = vld [vmem:[#allocation5 + $0x798] sm:$0xff]
    %v393 = vld [vmem:[#allocation5 + $0x7a0] sm:$0xff]
    %v394 = vld [vmem:[#allocation5 + $0x7a8] sm:$0xff]
    %v395 = vld [vmem:[#allocation5 + $0x7b0] sm:$0xff]
    %v396 = vld [vmem:[#allocation5 + $0x7b8] sm:$0xff]
    %v397 = vld [vmem:[#allocation5 + $0x7c0] sm:$0xff]
    %v398 = vld [vmem:[#allocation5 + $0x7c8] sm:$0xff]
    %v399 = vld [vmem:[#allocation5 + $0x7d0] sm:$0xff]
    %v400 = vld [vmem:[#allocation5 + $0x7d8] sm:$0xff]
    %v401 = vld [vmem:[#allocation5 + $0x7e0] sm:$0xff]
    %v402 = vld [vmem:[#allocation5 + $0x7e8] sm:$0xff]
    %v403 = vld [vmem:[#allocation5 + $0x7f0] sm:$0xff]
    %v404 = vld [vmem:[#allocation5 + $0x7f8] sm:$0xff]
    %v405 = vld [vmem:[#allocation5 + $0x800] sm:$0xff]
    %v406 = vld [vmem:[#allocation5 + $0x808] sm:$0xff]
    %v407 = vld [vmem:[#allocation5 + $0x810] sm:$0xff]
    %v408 = vld [vmem:[#allocation5 + $0x818] sm:$0xff]
    %v409 = vld [vmem:[#allocation5 + $0x820] sm:$0xff]
    %v410 = vld [vmem:[#allocation5 + $0x828] sm:$0xff]
    %v411 = vld [vmem:[#allocation5 + $0x830] sm:$0xff]
    %v412 = vld [vmem:[#allocation5 + $0x838] sm:$0xff]
    %v413 = vld [vmem:[#allocation5 + $0x840] sm:$0xff]
    %v414 = vld [vmem:[#allocation5 + $0x848] sm:$0xff]
    %v415 = vld [vmem:[#allocation5 + $0x850] sm:$0xff]
    %v416 = vld [vmem:[#allocation5 + $0x858] sm:$0xff]
    %v417 = vld [vmem:[#allocation5 + $0x860] sm:$0xff]
    %v418 = vld [vmem:[#allocation5 + $0x868] sm:$0xff]
    %v419 = vld [vmem:[#allocation5 + $0x870] sm:$0xff]
    %v420 = vld [vmem:[#allocation5 + $0x878] sm:$0xff]
    %v421 = vld [vmem:[#allocation5 + $0x880] sm:$0xff]
    %v422 = vld [vmem:[#allocation5 + $0x888] sm:$0xff]
    %v423 = vld [vmem:[#allocation5 + $0x890] sm:$0xff]
    %v424 = vld [vmem:[#allocation5 + $0x898] sm:$0xff]
    %v425 = vld [vmem:[#allocation5 + $0x8a0] sm:$0xff]
    %v426 = vld [vmem:[#allocation5 + $0x8a8] sm:$0xff]
    %v427 = vld [vmem:[#allocation5 + $0x8b0] sm:$0xff]
    %v428 = vld [vmem:[#allocation5 + $0x8b8] sm:$0xff]
    %v429 = vld [vmem:[#allocation5 + $0x8c0] sm:$0xff]
    %v430 = vld [vmem:[#allocation5 + $0x8c8] sm:$0xff]
    %v431 = vld [vmem:[#allocation5 + $0x8d0] sm:$0xff]
    %v432 = vld [vmem:[#allocation5 + $0x8d8] sm:$0xff]
    %v433 = vld [vmem:[#allocation5 + $0x8e0] sm:$0xff]
    %v434 = vld [vmem:[#allocation5 + $0x8e8] sm:$0xff]
    %v435 = vld [vmem:[#allocation5 + $0x8f0] sm:$0xff]
    %v436 = vld [vmem:[#allocation5 + $0x8f8] sm:$0xff]
    %v437 = vld [vmem:[#allocation5 + $0x900] sm:$0xff]
    %v438 = vld [vmem:[#allocation5 + $0x908] sm:$0xff]
    %v439 = vld [vmem:[#allocation5 + $0x910] sm:$0xff]
    %v440 = vld [vmem:[#allocation5 + $0x918] sm:$0xff]
    %v441 = vld [vmem:[#allocation5 + $0x920] sm:$0xff]
    %v442 = vld [vmem:[#allocation5 + $0x928] sm:$0xff]
    %v443 = vld [vmem:[#allocation5 + $0x930] sm:$0xff]
    %v444 = vld [vmem:[#allocation5 + $0x938] sm:$0xff]
    %v445 = vld [vmem:[#allocation5 + $0x940] sm:$0xff]
    %v446 = vld [vmem:[#allocation5 + $0x948] sm:$0xff]
    %v447 = vld [vmem:[#allocation5 + $0x950] sm:$0xff]
    %v448 = vld [vmem:[#allocation5 + $0x958] sm:$0xff]
    %v449 = vld [vmem:[#allocation5 + $0x960] sm:$0xff]
    %v450 = vld [vmem:[#allocation5 + $0x968] sm:$0xff]
    %v451 = vld [vmem:[#allocation5 + $0x970] sm:$0xff]
    %v452 = vld [vmem:[#allocation5 + $0x978] sm:$0xff]
    %v453 = vld [vmem:[#allocation5 + $0x980] sm:$0xff]
    %v454 = vld [vmem:[#allocation5 + $0x988] sm:$0xff]
    %v455 = vld [vmem:[#allocation5 + $0x990] sm:$0xff]
    %v456 = vld [vmem:[#allocation5 + $0x998] sm:$0xff]
    %v457 = vld [vmem:[#allocation5 + $0x9a0] sm:$0xff]
    %v458 = vld [vmem:[#allocation5 + $0x9a8] sm:$0xff]
    %v459 = vld [vmem:[#allocation5 + $0x9b0] sm:$0xff]
    %v460 = vld [vmem:[#allocation5 + $0x9b8] sm:$0xff]
    %v461 = vld [vmem:[#allocation5 + $0x9c0] sm:$0xff]
    %v462 = vld [vmem:[#allocation5 + $0x9c8] sm:$0xff]
    %v463 = vld [vmem:[#allocation5 + $0x9d0] sm:$0xff]
    %v464 = vld [vmem:[#allocation5 + $0x9d8] sm:$0xff]
    %v465 = vld [vmem:[#allocation5 + $0x9e0] sm:$0xff]
    %v466 = vld [vmem:[#allocation5 + $0x9e8] sm:$0xff]
    %v467 = vld [vmem:[#allocation5 + $0x9f0] sm:$0xff]
    %v468 = vld [vmem:[#allocation5 + $0x9f8] sm:$0xff]
    %v469 = vld [vmem:[#allocation5 + $0xa00] sm:$0xff]
    %v470 = vld [vmem:[#allocation5 + $0xa08] sm:$0xff]
    %v471 = vld [vmem:[#allocation5 + $0xa10] sm:$0xff]
    %v472 = vld [vmem:[#allocation5 + $0xa18] sm:$0xff]
    %v473 = vld [vmem:[#allocation5 + $0xa20] sm:$0xff]
    %v474 = vld [vmem:[#allocation5 + $0xa28] sm:$0xff]
    %v475 = vld [vmem:[#allocation5 + $0xa30] sm:$0xff]
    %v476 = vld [vmem:[#allocation5 + $0xa38] sm:$0xff]
    %v477 = vld [vmem:[#allocation5 + $0xa40] sm:$0xff]
    %v478 = vld [vmem:[#allocation5 + $0xa48] sm:$0xff]
    %v479 = vld [vmem:[#allocation5 + $0xa50] sm:$0xff]
    %v480 = vld [vmem:[#allocation5 + $0xa58] sm:$0xff]
    %v481 = vld [vmem:[#allocation5 + $0xa60] sm:$0xff]
    %v482 = vld [vmem:[#allocation5 + $0xa68] sm:$0xff]
    %v483 = vld [vmem:[#allocation5 + $0xa70] sm:$0xff]
    %v484 = vld [vmem:[#allocation5 + $0xa78] sm:$0xff]
    %v485 = vld [vmem:[#allocation5 + $0xa80] sm:$0xff]
    %v486 = vld [vmem:[#allocation5 + $0xa88] sm:$0xff]
    %v487 = vld [vmem:[#allocation5 + $0xa90] sm:$0xff]
    %v488 = vld [vmem:[#allocation5 + $0xa98] sm:$0xff]
    %v489 = vld [vmem:[#allocation5 + $0xaa0] sm:$0xff]
    %v490 = vld [vmem:[#allocation5 + $0xaa8] sm:$0xff]
    %v491 = vld [vmem:[#allocation5 + $0xab0] sm:$0xff]
    %v492 = vld [vmem:[#allocation5 + $0xab8] sm:$0xff]
    %v493 = vld [vmem:[#allocation5 + $0xac0] sm:$0xff]
    %v494 = vld [vmem:[#allocation5 + $0xac8] sm:$0xff]
    %v495 = vld [vmem:[#allocation5 + $0xad0] sm:$0xff]
    %v496 = vld [vmem:[#allocation5 + $0xad8] sm:$0xff]
    %v497 = vld [vmem:[#allocation5 + $0xae0] sm:$0xff]
    %v498 = vld [vmem:[#allocation5 + $0xae8] sm:$0xff]
    %v499 = vld [vmem:[#allocation5 + $0xaf0] sm:$0xff]
    %v500 = vld [vmem:[#allocation5 + $0xaf8] sm:$0xff]
    %v501 = vld [vmem:[#allocation5 + $0xb00] sm:$0xff]
    %v502 = vld [vmem:[#allocation5 + $0xb08] sm:$0xff]
    %v503 = vld [vmem:[#allocation5 + $0xb10] sm:$0xff]
    %v504 = vld [vmem:[#allocation5 + $0xb18] sm:$0xff]
    %v505 = vld [vmem:[#allocation5 + $0xb20] sm:$0xff]
    %v506 = vld [vmem:[#allocation5 + $0xb28] sm:$0xff]
    %v507 = vld [vmem:[#allocation5 + $0xb30] sm:$0xff]
    %v508 = vld [vmem:[#allocation5 + $0xb38] sm:$0xff]
    %v509 = vld [vmem:[#allocation5 + $0xb40] sm:$0xff]
    %v510 = vld [vmem:[#allocation5 + $0xb48] sm:$0xff]
    %v511 = vld [vmem:[#allocation5 + $0xb50] sm:$0xff]
    %v512 = vld [vmem:[#allocation5 + $0xb58] sm:$0xff]
    %v513 = vld [vmem:[#allocation5 + $0xb60] sm:$0xff]
    %v514 = vld [vmem:[#allocation5 + $0xb68] sm:$0xff]
    %v515 = vld [vmem:[#allocation5 + $0xb70] sm:$0xff]
    %v516 = vld [vmem:[#allocation5 + $0xb78] sm:$0xff]
    %v517 = vld [vmem:[#allocation5 + $0xb80] sm:$0xff]
    %v518 = vld [vmem:[#allocation5 + $0xb88] sm:$0xff]
    %v519 = vld [vmem:[#allocation5 + $0xb90] sm:$0xff]
    %v520 = vld [vmem:[#allocation5 + $0xb98] sm:$0xff]
    %v521 = vld [vmem:[#allocation5 + $0xba0] sm:$0xff]
    %v522 = vld [vmem:[#allocation5 + $0xba8] sm:$0xff]
    %v523 = vld [vmem:[#allocation5 + $0xbb0] sm:$0xff]
    %v524 = vld [vmem:[#allocation5 + $0xbb8] sm:$0xff]
    %v525 = vld [vmem:[#allocation5 + $0xbc0] sm:$0xff]
    %v526 = vld [vmem:[#allocation5 + $0xbc8] sm:$0xff]
    %v527 = vld [vmem:[#allocation5 + $0xbd0] sm:$0xff]
    %v528 = vld [vmem:[#allocation5 + $0xbd8] sm:$0xff]
    %v529 = vld [vmem:[#allocation5 + $0xbe0] sm:$0xff]
    %v530 = vld [vmem:[#allocation5 + $0xbe8] sm:$0xff]
    %v531 = vld [vmem:[#allocation5 + $0xbf0] sm:$0xff]
    %v532 = vld [vmem:[#allocation5 + $0xbf8] sm:$0xff]
    %v533 = vld [vmem:[#allocation5 + $0xc00] sm:$0xff]
    %v534 = vld [vmem:[#allocation5 + $0xc08] sm:$0xff]
    %v535 = vld [vmem:[#allocation5 + $0xc10] sm:$0xff]
    %v536 = vld [vmem:[#allocation5 + $0xc18] sm:$0xff]
    %v537 = vld [vmem:[#allocation5 + $0xc20] sm:$0xff]
    %v538 = vld [vmem:[#allocation5 + $0xc28] sm:$0xff]
    %v539 = vld [vmem:[#allocation5 + $0xc30] sm:$0xff]
    %v540 = vld [vmem:[#allocation5 + $0xc38] sm:$0xff]
    %v541 = vld [vmem:[#allocation5 + $0xc40] sm:$0xff]
    %v542 = vld [vmem:[#allocation5 + $0xc48] sm:$0xff]
    %v543 = vld [vmem:[#allocation5 + $0xc50] sm:$0xff]
    %v544 = vld [vmem:[#allocation5 + $0xc58] sm:$0xff]
    %v545 = vld [vmem:[#allocation5 + $0xc60] sm:$0xff]
    %v546 = vld [vmem:[#allocation5 + $0xc68] sm:$0xff]
    %v547 = vld [vmem:[#allocation5 + $0xc70] sm:$0xff]
    %v548 = vld [vmem:[#allocation5 + $0xc78] sm:$0xff]
    %v549 = vld [vmem:[#allocation5 + $0xc80] sm:$0xff]
    %v550 = vld [vmem:[#allocation5 + $0xc88] sm:$0xff]
    %v551 = vld [vmem:[#allocation5 + $0xc90] sm:$0xff]
    %v552 = vld [vmem:[#allocation5 + $0xc98] sm:$0xff]
    %v553 = vld [vmem:[#allocation5 + $0xca0] sm:$0xff]
    %v554 = vld [vmem:[#allocation5 + $0xca8] sm:$0xff]
    %v555 = vld [vmem:[#allocation5 + $0xcb0] sm:$0xff]
    %v556 = vld [vmem:[#allocation5 + $0xcb8] sm:$0xff]
    %v557 = vld [vmem:[#allocation5 + $0xcc0] sm:$0xff]
    %v558 = vld [vmem:[#allocation5 + $0xcc8] sm:$0xff]
    %v559 = vld [vmem:[#allocation5 + $0xcd0] sm:$0xff]
    %v560 = vld [vmem:[#allocation5 + $0xcd8] sm:$0xff]
    %v561 = vld [vmem:[#allocation5 + $0xce0] sm:$0xff]
    %v562 = vld [vmem:[#allocation5 + $0xce8] sm:$0xff]
    %v563 = vld [vmem:[#allocation5 + $0xcf0] sm:$0xff]
    %v564 = vld [vmem:[#allocation5 + $0xcf8] sm:$0xff]
    %v565 = vld [vmem:[#allocation5 + $0xd00] sm:$0xff]
    %v566 = vld [vmem:[#allocation5 + $0xd08] sm:$0xff]
    %v567 = vld [vmem:[#allocation5 + $0xd10] sm:$0xff]
    %v568 = vld [vmem:[#allocation5 + $0xd18] sm:$0xff]
    %v569 = vld [vmem:[#allocation5 + $0xd20] sm:$0xff]
    %v570 = vld [vmem:[#allocation5 + $0xd28] sm:$0xff]
    %v571 = vld [vmem:[#allocation5 + $0xd30] sm:$0xff]
    %v572 = vld [vmem:[#allocation5 + $0xd38] sm:$0xff]
    %v573 = vld [vmem:[#allocation5 + $0xd40] sm:$0xff]
    %v574 = vld [vmem:[#allocation5 + $0xd48] sm:$0xff]
    %v575 = vld [vmem:[#allocation5 + $0xd50] sm:$0xff]
    %v576 = vld [vmem:[#allocation5 + $0xd58] sm:$0xff]
    %v577 = vld [vmem:[#allocation5 + $0xd60] sm:$0xff]
    %v578 = vld [vmem:[#allocation5 + $0xd68] sm:$0xff]
    %v579 = vld [vmem:[#allocation5 + $0xd70] sm:$0xff]
    %v580 = vld [vmem:[#allocation5 + $0xd78] sm:$0xff]
    %v581 = vld [vmem:[#allocation5 + $0xd80] sm:$0xff]
    %v582 = vld [vmem:[#allocation5 + $0xd88] sm:$0xff]
    %v583 = vld [vmem:[#allocation5 + $0xd90] sm:$0xff]
    %v584 = vld [vmem:[#allocation5 + $0xd98] sm:$0xff]
    %v585 = vld [vmem:[#allocation5 + $0xda0] sm:$0xff]
    %v586 = vld [vmem:[#allocation5 + $0xda8] sm:$0xff]
    %v587 = vld [vmem:[#allocation5 + $0xdb0] sm:$0xff]
    %v588 = vld [vmem:[#allocation5 + $0xdb8] sm:$0xff]
    %v589 = vld [vmem:[#allocation5 + $0xdc0] sm:$0xff]
    %v590 = vld [vmem:[#allocation5 + $0xdc8] sm:$0xff]
    %v591 = vld [vmem:[#allocation5 + $0xdd0] sm:$0xff]
    %v592 = vld [vmem:[#allocation5 + $0xdd8] sm:$0xff]
    %v593 = vld [vmem:[#allocation5 + $0xde0] sm:$0xff]
    %v594 = vld [vmem:[#allocation5 + $0xde8] sm:$0xff]
    %v595 = vld [vmem:[#allocation5 + $0xdf0] sm:$0xff]
    %v596 = vld [vmem:[#allocation5 + $0xdf8] sm:$0xff]
    %v597 = vld [vmem:[#allocation5 + $0xe00] sm:$0xff]
    %v598 = vld [vmem:[#allocation5 + $0xe08] sm:$0xff]
    %v599 = vld [vmem:[#allocation5 + $0xe10] sm:$0xff]
    %v600 = vld [vmem:[#allocation5 + $0xe18] sm:$0xff]
    %v601 = vld [vmem:[#allocation5 + $0xe20] sm:$0xff]
    %v602 = vld [vmem:[#allocation5 + $0xe28] sm:$0xff]
    %v603 = vld [vmem:[#allocation5 + $0xe30] sm:$0xff]
    %v604 = vld [vmem:[#allocation5 + $0xe38] sm:$0xff]
    %v605 = vld [vmem:[#allocation5 + $0xe40] sm:$0xff]
    %v606 = vld [vmem:[#allocation5 + $0xe48] sm:$0xff]
    %v607 = vld [vmem:[#allocation5 + $0xe50] sm:$0xff]
    %v608 = vld [vmem:[#allocation5 + $0xe58] sm:$0xff]
    %v609 = vld [vmem:[#allocation5 + $0xe60] sm:$0xff]
    %v610 = vld [vmem:[#allocation5 + $0xe68] sm:$0xff]
    %v611 = vld [vmem:[#allocation5 + $0xe70] sm:$0xff]
    %v612 = vld [vmem:[#allocation5 + $0xe78] sm:$0xff]
    %v613 = vld [vmem:[#allocation5 + $0xe80] sm:$0xff]
    %v614 = vld [vmem:[#allocation5 + $0xe88] sm:$0xff]
    %v615 = vld [vmem:[#allocation5 + $0xe90] sm:$0xff]
    %v616 = vld [vmem:[#allocation5 + $0xe98] sm:$0xff]
    %v617 = vld [vmem:[#allocation5 + $0xea0] sm:$0xff]
    %v618 = vld [vmem:[#allocation5 + $0xea8] sm:$0xff]
    %v619 = vld [vmem:[#allocation5 + $0xeb0] sm:$0xff]
    %v620 = vld [vmem:[#allocation5 + $0xeb8] sm:$0xff]
    %v621 = vld [vmem:[#allocation5 + $0xec0] sm:$0xff]
    %v622 = vld [vmem:[#allocation5 + $0xec8] sm:$0xff]
    %v623 = vld [vmem:[#allocation5 + $0xed0] sm:$0xff]
    %v624 = vld [vmem:[#allocation5 + $0xed8] sm:$0xff]
    %v625 = vld [vmem:[#allocation5 + $0xee0] sm:$0xff]
    %v626 = vld [vmem:[#allocation5 + $0xee8] sm:$0xff]
    %v627 = vld [vmem:[#allocation5 + $0xef0] sm:$0xff]
    %v628 = vld [vmem:[#allocation5 + $0xef8] sm:$0xff]
    %v629 = vld [vmem:[#allocation5 + $0xf00] sm:$0xff]
    %v630 = vld [vmem:[#allocation5 + $0xf08] sm:$0xff]
    %v631 = vld [vmem:[#allocation5 + $0xf10] sm:$0xff]
    %v632 = vld [vmem:[#allocation5 + $0xf18] sm:$0xff]
    %v633 = vld [vmem:[#allocation5 + $0xf20] sm:$0xff]
    %v634 = vld [vmem:[#allocation5 + $0xf28] sm:$0xff]
    %v635 = vld [vmem:[#allocation5 + $0xf30] sm:$0xff]
    %v636 = vld [vmem:[#allocation5 + $0xf38] sm:$0xff]
    %v637 = vld [vmem:[#allocation5 + $0xf40] sm:$0xff]
    %v638 = vld [vmem:[#allocation5 + $0xf48] sm:$0xff]
    %v639 = vld [vmem:[#allocation5 + $0xf50] sm:$0xff]
    %v640 = vld [vmem:[#allocation5 + $0xf58] sm:$0xff]
    %v641 = vld [vmem:[#allocation5 + $0xf60] sm:$0xff]
    %v642 = vld [vmem:[#allocation5 + $0xf68] sm:$0xff]
    %v643 = vld [vmem:[#allocation5 + $0xf70] sm:$0xff]
    %v644 = vld [vmem:[#allocation5 + $0xf78] sm:$0xff]
    %v645 = vld [vmem:[#allocation5 + $0xf80] sm:$0xff]
    %v646 = vld [vmem:[#allocation5 + $0xf88] sm:$0xff]
    %v647 = vld [vmem:[#allocation5 + $0xf90] sm:$0xff]
    %v648 = vld [vmem:[#allocation5 + $0xf98] sm:$0xff]
    %v649 = vld [vmem:[#allocation7] sm:$0xff]
    %v651 = vlaneseq
    %v652 = vshrl.u32 %v651, 7
    %v653 = vsub.s32 0, %v652
    %v654 = vrot.slane %v649, %v653
    %v655 = vlaneseq
    %v656 = vshrl.u32 %v655, 7
    %v657 = vsub.s32 1, %v656
    %v658 = vrot.slane %v649, %v657
    %v659 = vlaneseq
    %v660 = vshrl.u32 %v659, 7
    %v661 = vsub.s32 2, %v660
    %v662 = vrot.slane %v649, %v661
    %v663 = vlaneseq
    %v664 = vshrl.u32 %v663, 7
    %v665 = vsub.s32 3, %v664
    %v666 = vrot.slane %v649, %v665
    %v667 = vlaneseq
    %v668 = vshrl.u32 %v667, 7
    %v669 = vsub.s32 4, %v668
    %v670 = vrot.slane %v649, %v669
    %v671 = vlaneseq
    %v672 = vshrl.u32 %v671, 7
    %v673 = vsub.s32 5, %v672
    %v674 = vrot.slane %v649, %v673
    %v675 = vlaneseq
    %v676 = vshrl.u32 %v675, 7
    %v677 = vsub.s32 6, %v676
    %v678 = vrot.slane %v649, %v677
    %v679 = vlaneseq
    %v680 = vshrl.u32 %v679, 7
    %v681 = vsub.s32 7, %v680
    %v682 = vrot.slane %v649, %v681
    %v1191 = vunpack.c.l.b16 %v149
    %v1192 = vunpack.c.h.b16 %v149
    %v1193 = vunpack.c.l.b16 %v150
    %v1194 = vunpack.c.h.b16 %v150
    %v1195 = vunpack.c.l.b16 %v151
    %v1196 = vunpack.c.h.b16 %v151
    %v1197 = vunpack.c.l.b16 %v152
    %v1198 = vunpack.c.h.b16 %v152
    %v1199 = vunpack.c.l.b16 %v153
    %v1200 = vunpack.c.h.b16 %v153
    %v1201 = vunpack.c.l.b16 %v154
    %v1202 = vunpack.c.h.b16 %v154
    %v1203 = vunpack.c.l.b16 %v155
    %v1204 = vunpack.c.h.b16 %v155
    %v1205 = vunpack.c.l.b16 %v156
    %v1206 = vunpack.c.h.b16 %v156
    %v1207 = vunpack.c.l.b16 %v157
    %v1208 = vunpack.c.h.b16 %v157
    %v1209 = vunpack.c.l.b16 %v158
    %v1210 = vunpack.c.h.b16 %v158
    %v1211 = vunpack.c.l.b16 %v159
    %v1212 = vunpack.c.h.b16 %v159
    %v1213 = vunpack.c.l.b16 %v160
    %v1214 = vunpack.c.h.b16 %v160
    %v1215 = vunpack.c.l.b16 %v161
    %v1216 = vunpack.c.h.b16 %v161
    %v1217 = vunpack.c.l.b16 %v162
    %v1218 = vunpack.c.h.b16 %v162
    %v1219 = vunpack.c.l.b16 %v163
    %v1220 = vunpack.c.h.b16 %v163
    %v1221 = vunpack.c.l.b16 %v164
    %v1222 = vunpack.c.h.b16 %v164
    %v1223 = vunpack.c.l.b16 %v165
    %v1224 = vunpack.c.h.b16 %v165
    %v1225 = vunpack.c.l.b16 %v166
    %v1226 = vunpack.c.h.b16 %v166
    %v1227 = vunpack.c.l.b16 %v167
    %v1228 = vunpack.c.h.b16 %v167
    %v1229 = vunpack.c.l.b16 %v168
    %v1230 = vunpack.c.h.b16 %v168
    %v1231 = vunpack.c.l.b16 %v169
    %v1232 = vunpack.c.h.b16 %v169
    %v1233 = vunpack.c.l.b16 %v170
    %v1234 = vunpack.c.h.b16 %v170
    %v1235 = vunpack.c.l.b16 %v171
    %v1236 = vunpack.c.h.b16 %v171
    %v1237 = vunpack.c.l.b16 %v172
    %v1238 = vunpack.c.h.b16 %v172
    %v1239 = vunpack.c.l.b16 %v173
    %v1240 = vunpack.c.h.b16 %v173
    %v1241 = vunpack.c.l.b16 %v174
    %v1242 = vunpack.c.h.b16 %v174
    %v1243 = vunpack.c.l.b16 %v175
    %v1244 = vunpack.c.h.b16 %v175
    %v1245 = vunpack.c.l.b16 %v176
    %v1246 = vunpack.c.h.b16 %v176
    %v1247 = vunpack.c.l.b16 %v177
    %v1248 = vunpack.c.h.b16 %v177
    %v1249 = vunpack.c.l.b16 %v178
    %v1250 = vunpack.c.h.b16 %v178
    %v1251 = vunpack.c.l.b16 %v179
    %v1252 = vunpack.c.h.b16 %v179
    %v1253 = vunpack.c.l.b16 %v180
    %v1254 = vunpack.c.h.b16 %v180
    %v1255 = vunpack.c.l.b16 %v181
    %v1256 = vunpack.c.h.b16 %v181
    %v1257 = vunpack.c.l.b16 %v182
    %v1258 = vunpack.c.h.b16 %v182
    %v1259 = vunpack.c.l.b16 %v183
    %v1260 = vunpack.c.h.b16 %v183
    %v1261 = vunpack.c.l.b16 %v184
    %v1262 = vunpack.c.h.b16 %v184
    %v1263 = vunpack.c.l.b16 %v185
    %v1264 = vunpack.c.h.b16 %v185
    %v1265 = vunpack.c.l.b16 %v186
    %v1266 = vunpack.c.h.b16 %v186
    %v1267 = vunpack.c.l.b16 %v187
    %v1268 = vunpack.c.h.b16 %v187
    %v1269 = vunpack.c.l.b16 %v188
    %v1270 = vunpack.c.h.b16 %v188
    %v1271 = vunpack.c.l.b16 %v189
    %v1272 = vunpack.c.h.b16 %v189
    %v1273 = vunpack.c.l.b16 %v190
    %v1274 = vunpack.c.h.b16 %v190
    %v1275 = vunpack.c.l.b16 %v191
    %v1276 = vunpack.c.h.b16 %v191
    %v1277 = vunpack.c.l.b16 %v192
    %v1278 = vunpack.c.h.b16 %v192
    %v1279 = vunpack.c.l.b16 %v193
    %v1280 = vunpack.c.h.b16 %v193
    %v1281 = vunpack.c.l.b16 %v194
    %v1282 = vunpack.c.h.b16 %v194
    %v1283 = vunpack.c.l.b16 %v195
    %v1284 = vunpack.c.h.b16 %v195
    %v1285 = vunpack.c.l.b16 %v196
    %v1286 = vunpack.c.h.b16 %v196
    %v1287 = vunpack.c.l.b16 %v197
    %v1288 = vunpack.c.h.b16 %v197
    %v1289 = vunpack.c.l.b16 %v198
    %v1290 = vunpack.c.h.b16 %v198
    %v1291 = vunpack.c.l.b16 %v199
    %v1292 = vunpack.c.h.b16 %v199
    %v1293 = vunpack.c.l.b16 %v200
    %v1294 = vunpack.c.h.b16 %v200
    %v1295 = vunpack.c.l.b16 %v201
    %v1296 = vunpack.c.h.b16 %v201
    %v1297 = vunpack.c.l.b16 %v202
    %v1298 = vunpack.c.h.b16 %v202
    %v1299 = vunpack.c.l.b16 %v203
    %v1300 = vunpack.c.h.b16 %v203
    %v1301 = vunpack.c.l.b16 %v204
    %v1302 = vunpack.c.h.b16 %v204
    %v1303 = vunpack.c.l.b16 %v205
    %v1304 = vunpack.c.h.b16 %v205
    %v1305 = vunpack.c.l.b16 %v206
    %v1306 = vunpack.c.h.b16 %v206
    %v1307 = vunpack.c.l.b16 %v207
    %v1308 = vunpack.c.h.b16 %v207
    %v1309 = vunpack.c.l.b16 %v208
    %v1310 = vunpack.c.h.b16 %v208
    %v1311 = vunpack.c.l.b16 %v209
    %v1312 = vunpack.c.h.b16 %v209
    %v1313 = vunpack.c.l.b16 %v210
    %v1314 = vunpack.c.h.b16 %v210
    %v1315 = vunpack.c.l.b16 %v211
    %v1316 = vunpack.c.h.b16 %v211
    %v1317 = vunpack.c.l.b16 %v212
    %v1318 = vunpack.c.h.b16 %v212
    %v1319 = vunpack.c.l.b16 %v213
    %v1320 = vunpack.c.h.b16 %v213
    %v1321 = vunpack.c.l.b16 %v214
    %v1322 = vunpack.c.h.b16 %v214
    %v1323 = vunpack.c.l.b16 %v215
    %v1324 = vunpack.c.h.b16 %v215
    %v1325 = vunpack.c.l.b16 %v216
    %v1326 = vunpack.c.h.b16 %v216
    %v1327 = vunpack.c.l.b16 %v217
    %v1328 = vunpack.c.h.b16 %v217
    %v1329 = vunpack.c.l.b16 %v218
    %v1330 = vunpack.c.h.b16 %v218
    %v1331 = vunpack.c.l.b16 %v219
    %v1332 = vunpack.c.h.b16 %v219
    %v1333 = vunpack.c.l.b16 %v220
    %v1334 = vunpack.c.h.b16 %v220
    %v1335 = vunpack.c.l.b16 %v221
    %v1336 = vunpack.c.h.b16 %v221
    %v1337 = vunpack.c.l.b16 %v222
    %v1338 = vunpack.c.h.b16 %v222
    %v1339 = vunpack.c.l.b16 %v223
    %v1340 = vunpack.c.h.b16 %v223
    %v1341 = vunpack.c.l.b16 %v224
    %v1342 = vunpack.c.h.b16 %v224
    %v1343 = vunpack.c.l.b16 %v225
    %v1344 = vunpack.c.h.b16 %v225
    %v1345 = vunpack.c.l.b16 %v226
    %v1346 = vunpack.c.h.b16 %v226
    %v1347 = vunpack.c.l.b16 %v227
    %v1348 = vunpack.c.h.b16 %v227
    %v1349 = vunpack.c.l.b16 %v228
    %v1350 = vunpack.c.h.b16 %v228
    %v1351 = vunpack.c.l.b16 %v229
    %v1352 = vunpack.c.h.b16 %v229
    %v1353 = vunpack.c.l.b16 %v230
    %v1354 = vunpack.c.h.b16 %v230
    %v1355 = vunpack.c.l.b16 %v231
    %v1356 = vunpack.c.h.b16 %v231
    %v1357 = vunpack.c.l.b16 %v232
    %v1358 = vunpack.c.h.b16 %v232
    %v1359 = vunpack.c.l.b16 %v233
    %v1360 = vunpack.c.h.b16 %v233
    %v1361 = vunpack.c.l.b16 %v234
    %v1362 = vunpack.c.h.b16 %v234
    %v1363 = vunpack.c.l.b16 %v235
    %v1364 = vunpack.c.h.b16 %v235
    %v1365 = vunpack.c.l.b16 %v236
    %v1366 = vunpack.c.h.b16 %v236
    %v1367 = vunpack.c.l.b16 %v237
    %v1368 = vunpack.c.h.b16 %v237
    %v1369 = vunpack.c.l.b16 %v238
    %v1370 = vunpack.c.h.b16 %v238
    %v1371 = vunpack.c.l.b16 %v239
    %v1372 = vunpack.c.h.b16 %v239
    %v1373 = vunpack.c.l.b16 %v240
    %v1374 = vunpack.c.h.b16 %v240
    %v1375 = vunpack.c.l.b16 %v241
    %v1376 = vunpack.c.h.b16 %v241
    %v1377 = vunpack.c.l.b16 %v242
    %v1378 = vunpack.c.h.b16 %v242
    %v1379 = vunpack.c.l.b16 %v243
    %v1380 = vunpack.c.h.b16 %v243
    %v1381 = vunpack.c.l.b16 %v244
    %v1382 = vunpack.c.h.b16 %v244
    %v1383 = vunpack.c.l.b16 %v245
    %v1384 = vunpack.c.h.b16 %v245
    %v1385 = vunpack.c.l.b16 %v246
    %v1386 = vunpack.c.h.b16 %v246
    %v1387 = vunpack.c.l.b16 %v247
    %v1388 = vunpack.c.h.b16 %v247
    %v1389 = vunpack.c.l.b16 %v248
    %v1390 = vunpack.c.h.b16 %v248
    %v1391 = vunpack.c.l.b16 %v249
    %v1392 = vunpack.c.h.b16 %v249
    %v1393 = vunpack.c.l.b16 %v250
    %v1394 = vunpack.c.h.b16 %v250
    %v1395 = vunpack.c.l.b16 %v251
    %v1396 = vunpack.c.h.b16 %v251
    %v1397 = vunpack.c.l.b16 %v252
    %v1398 = vunpack.c.h.b16 %v252
    %v1399 = vunpack.c.l.b16 %v253
    %v1400 = vunpack.c.h.b16 %v253
    %v1401 = vunpack.c.l.b16 %v254
    %v1402 = vunpack.c.h.b16 %v254
    %v1403 = vunpack.c.l.b16 %v255
    %v1404 = vunpack.c.h.b16 %v255
    %v1405 = vunpack.c.l.b16 %v256
    %v1406 = vunpack.c.h.b16 %v256
    %v1407 = vunpack.c.l.b16 %v257
    %v1408 = vunpack.c.h.b16 %v257
    %v1409 = vunpack.c.l.b16 %v258
    %v1410 = vunpack.c.h.b16 %v258
    %v1411 = vunpack.c.l.b16 %v259
    %v1412 = vunpack.c.h.b16 %v259
    %v1413 = vunpack.c.l.b16 %v260
    %v1414 = vunpack.c.h.b16 %v260
    %v1415 = vunpack.c.l.b16 %v261
    %v1416 = vunpack.c.h.b16 %v261
    %v1417 = vunpack.c.l.b16 %v262
    %v1418 = vunpack.c.h.b16 %v262
    %v1419 = vunpack.c.l.b16 %v263
    %v1420 = vunpack.c.h.b16 %v263
    %v1421 = vunpack.c.l.b16 %v264
    %v1422 = vunpack.c.h.b16 %v264
    %v1423 = vunpack.c.l.b16 %v265
    %v1424 = vunpack.c.h.b16 %v265
    %v1425 = vunpack.c.l.b16 %v266
    %v1426 = vunpack.c.h.b16 %v266
    %v1427 = vunpack.c.l.b16 %v267
    %v1428 = vunpack.c.h.b16 %v267
    %v1429 = vunpack.c.l.b16 %v268
    %v1430 = vunpack.c.h.b16 %v268
    %v1431 = vunpack.c.l.b16 %v269
    %v1432 = vunpack.c.h.b16 %v269
    %v1433 = vunpack.c.l.b16 %v270
    %v1434 = vunpack.c.h.b16 %v270
    %v1435 = vunpack.c.l.b16 %v271
    %v1436 = vunpack.c.h.b16 %v271
    %v1437 = vunpack.c.l.b16 %v272
    %v1438 = vunpack.c.h.b16 %v272
    %v1439 = vunpack.c.l.b16 %v273
    %v1440 = vunpack.c.h.b16 %v273
    %v1441 = vunpack.c.l.b16 %v274
    %v1442 = vunpack.c.h.b16 %v274
    %v1443 = vunpack.c.l.b16 %v275
    %v1444 = vunpack.c.h.b16 %v275
    %v1445 = vunpack.c.l.b16 %v276
    %v1446 = vunpack.c.h.b16 %v276
    %v1447 = vunpack.c.l.b16 %v277
    %v1448 = vunpack.c.h.b16 %v277
    %v1449 = vunpack.c.l.b16 %v278
    %v1450 = vunpack.c.h.b16 %v278
    %v1451 = vunpack.c.l.b16 %v279
    %v1452 = vunpack.c.h.b16 %v279
    %v1453 = vunpack.c.l.b16 %v280
    %v1454 = vunpack.c.h.b16 %v280
    %v1455 = vunpack.c.l.b16 %v281
    %v1456 = vunpack.c.h.b16 %v281
    %v1457 = vunpack.c.l.b16 %v282
    %v1458 = vunpack.c.h.b16 %v282
    %v1459 = vunpack.c.l.b16 %v283
    %v1460 = vunpack.c.h.b16 %v283
    %v1461 = vunpack.c.l.b16 %v284
    %v1462 = vunpack.c.h.b16 %v284
    %v1463 = vunpack.c.l.b16 %v285
    %v1464 = vunpack.c.h.b16 %v285
    %v1465 = vunpack.c.l.b16 %v286
    %v1466 = vunpack.c.h.b16 %v286
    %v1467 = vunpack.c.l.b16 %v287
    %v1468 = vunpack.c.h.b16 %v287
    %v1469 = vunpack.c.l.b16 %v288
    %v1470 = vunpack.c.h.b16 %v288
    %v1471 = vunpack.c.l.b16 %v289
    %v1472 = vunpack.c.h.b16 %v289
    %v1473 = vunpack.c.l.b16 %v290
    %v1474 = vunpack.c.h.b16 %v290
    %v1475 = vunpack.c.l.b16 %v291
    %v1476 = vunpack.c.h.b16 %v291
    %v1477 = vunpack.c.l.b16 %v292
    %v1478 = vunpack.c.h.b16 %v292
    %v1479 = vunpack.c.l.b16 %v293
    %v1480 = vunpack.c.h.b16 %v293
    %v1481 = vunpack.c.l.b16 %v294
    %v1482 = vunpack.c.h.b16 %v294
    %v1483 = vunpack.c.l.b16 %v295
    %v1484 = vunpack.c.h.b16 %v295
    %v1485 = vunpack.c.l.b16 %v296
    %v1486 = vunpack.c.h.b16 %v296
    %v1487 = vunpack.c.l.b16 %v297
    %v1488 = vunpack.c.h.b16 %v297
    %v1489 = vunpack.c.l.b16 %v298
    %v1490 = vunpack.c.h.b16 %v298
    %v1491 = vunpack.c.l.b16 %v299
    %v1492 = vunpack.c.h.b16 %v299
    %v1493 = vunpack.c.l.b16 %v300
    %v1494 = vunpack.c.h.b16 %v300
    %v1495 = vunpack.c.l.b16 %v301
    %v1496 = vunpack.c.h.b16 %v301
    %v1497 = vunpack.c.l.b16 %v302
    %v1498 = vunpack.c.h.b16 %v302
    %v1499 = vunpack.c.l.b16 %v303
    %v1500 = vunpack.c.h.b16 %v303
    %v1501 = vunpack.c.l.b16 %v304
    %v1502 = vunpack.c.h.b16 %v304
    %v1503 = vunpack.c.l.b16 %v305
    %v1504 = vunpack.c.h.b16 %v305
    %v1505 = vunpack.c.l.b16 %v306
    %v1506 = vunpack.c.h.b16 %v306
    %v1507 = vunpack.c.l.b16 %v307
    %v1508 = vunpack.c.h.b16 %v307
    %v1509 = vunpack.c.l.b16 %v308
    %v1510 = vunpack.c.h.b16 %v308
    %v1511 = vunpack.c.l.b16 %v309
    %v1512 = vunpack.c.h.b16 %v309
    %v1513 = vunpack.c.l.b16 %v310
    %v1514 = vunpack.c.h.b16 %v310
    %v1515 = vunpack.c.l.b16 %v311
    %v1516 = vunpack.c.h.b16 %v311
    %v1517 = vunpack.c.l.b16 %v312
    %v1518 = vunpack.c.h.b16 %v312
    %v1519 = vunpack.c.l.b16 %v313
    %v1520 = vunpack.c.h.b16 %v313
    %v1521 = vunpack.c.l.b16 %v314
    %v1522 = vunpack.c.h.b16 %v314
    %v1523 = vunpack.c.l.b16 %v315
    %v1524 = vunpack.c.h.b16 %v315
    %v1525 = vunpack.c.l.b16 %v316
    %v1526 = vunpack.c.h.b16 %v316
    %v1527 = vunpack.c.l.b16 %v317
    %v1528 = vunpack.c.h.b16 %v317
    %v1529 = vunpack.c.l.b16 %v318
    %v1530 = vunpack.c.h.b16 %v318
    %v1531 = vunpack.c.l.b16 %v319
    %v1532 = vunpack.c.h.b16 %v319
    %v1533 = vunpack.c.l.b16 %v320
    %v1534 = vunpack.c.h.b16 %v320
    %v1535 = vunpack.c.l.b16 %v321
    %v1536 = vunpack.c.h.b16 %v321
    %v1537 = vunpack.c.l.b16 %v322
    %v1538 = vunpack.c.h.b16 %v322
    %v1539 = vunpack.c.l.b16 %v323
    %v1540 = vunpack.c.h.b16 %v323
    %v1541 = vunpack.c.l.b16 %v324
    %v1542 = vunpack.c.h.b16 %v324
    %v1543 = vunpack.c.l.b16 %v325
    %v1544 = vunpack.c.h.b16 %v325
    %v1545 = vunpack.c.l.b16 %v326
    %v1546 = vunpack.c.h.b16 %v326
    %v1547 = vunpack.c.l.b16 %v327
    %v1548 = vunpack.c.h.b16 %v327
    %v1549 = vunpack.c.l.b16 %v328
    %v1550 = vunpack.c.h.b16 %v328
    %v1551 = vunpack.c.l.b16 %v329
    %v1552 = vunpack.c.h.b16 %v329
    %v1553 = vunpack.c.l.b16 %v330
    %v1554 = vunpack.c.h.b16 %v330
    %v1555 = vunpack.c.l.b16 %v331
    %v1556 = vunpack.c.h.b16 %v331
    %v1557 = vunpack.c.l.b16 %v332
    %v1558 = vunpack.c.h.b16 %v332
    %v1559 = vunpack.c.l.b16 %v333
    %v1560 = vunpack.c.h.b16 %v333
    %v1561 = vunpack.c.l.b16 %v334
    %v1562 = vunpack.c.h.b16 %v334
    %v1563 = vunpack.c.l.b16 %v335
    %v1564 = vunpack.c.h.b16 %v335
    %v1565 = vunpack.c.l.b16 %v336
    %v1566 = vunpack.c.h.b16 %v336
    %v1567 = vunpack.c.l.b16 %v337
    %v1568 = vunpack.c.h.b16 %v337
    %v1569 = vunpack.c.l.b16 %v338
    %v1570 = vunpack.c.h.b16 %v338
    %v1571 = vunpack.c.l.b16 %v339
    %v1572 = vunpack.c.h.b16 %v339
    %v1573 = vunpack.c.l.b16 %v340
    %v1574 = vunpack.c.h.b16 %v340
    %v1575 = vunpack.c.l.b16 %v341
    %v1576 = vunpack.c.h.b16 %v341
    %v1577 = vunpack.c.l.b16 %v342
    %v1578 = vunpack.c.h.b16 %v342
    %v1579 = vunpack.c.l.b16 %v343
    %v1580 = vunpack.c.h.b16 %v343
    %v1581 = vunpack.c.l.b16 %v344
    %v1582 = vunpack.c.h.b16 %v344
    %v1583 = vunpack.c.l.b16 %v345
    %v1584 = vunpack.c.h.b16 %v345
    %v1585 = vunpack.c.l.b16 %v346
    %v1586 = vunpack.c.h.b16 %v346
    %v1587 = vunpack.c.l.b16 %v347
    %v1588 = vunpack.c.h.b16 %v347
    %v1589 = vunpack.c.l.b16 %v348
    %v1590 = vunpack.c.h.b16 %v348
    %v1591 = vunpack.c.l.b16 %v349
    %v1592 = vunpack.c.h.b16 %v349
    %v1593 = vunpack.c.l.b16 %v350
    %v1594 = vunpack.c.h.b16 %v350
    %v1595 = vunpack.c.l.b16 %v351
    %v1596 = vunpack.c.h.b16 %v351
    %v1597 = vunpack.c.l.b16 %v352
    %v1598 = vunpack.c.h.b16 %v352
    %v1599 = vunpack.c.l.b16 %v353
    %v1600 = vunpack.c.h.b16 %v353
    %v1601 = vunpack.c.l.b16 %v354
    %v1602 = vunpack.c.h.b16 %v354
    %v1603 = vunpack.c.l.b16 %v355
    %v1604 = vunpack.c.h.b16 %v355
    %v1605 = vunpack.c.l.b16 %v356
    %v1606 = vunpack.c.h.b16 %v356
    %v1607 = vunpack.c.l.b16 %v357
    %v1608 = vunpack.c.h.b16 %v357
    %v1609 = vunpack.c.l.b16 %v358
    %v1610 = vunpack.c.h.b16 %v358
    %v1611 = vunpack.c.l.b16 %v359
    %v1612 = vunpack.c.h.b16 %v359
    %v1613 = vunpack.c.l.b16 %v360
    %v1614 = vunpack.c.h.b16 %v360
    %v1615 = vunpack.c.l.b16 %v361
    %v1616 = vunpack.c.h.b16 %v361
    %v1617 = vunpack.c.l.b16 %v362
    %v1618 = vunpack.c.h.b16 %v362
    %v1619 = vunpack.c.l.b16 %v363
    %v1620 = vunpack.c.h.b16 %v363
    %v1621 = vunpack.c.l.b16 %v364
    %v1622 = vunpack.c.h.b16 %v364
    %v1623 = vunpack.c.l.b16 %v365
    %v1624 = vunpack.c.h.b16 %v365
    %v1625 = vunpack.c.l.b16 %v366
    %v1626 = vunpack.c.h.b16 %v366
    %v1627 = vunpack.c.l.b16 %v367
    %v1628 = vunpack.c.h.b16 %v367
    %v1629 = vunpack.c.l.b16 %v368
    %v1630 = vunpack.c.h.b16 %v368
    %v1631 = vunpack.c.l.b16 %v369
    %v1632 = vunpack.c.h.b16 %v369
    %v1633 = vunpack.c.l.b16 %v370
    %v1634 = vunpack.c.h.b16 %v370
    %v1635 = vunpack.c.l.b16 %v371
    %v1636 = vunpack.c.h.b16 %v371
    %v1637 = vunpack.c.l.b16 %v372
    %v1638 = vunpack.c.h.b16 %v372
    %v1639 = vunpack.c.l.b16 %v373
    %v1640 = vunpack.c.h.b16 %v373
    %v1641 = vunpack.c.l.b16 %v374
    %v1642 = vunpack.c.h.b16 %v374
    %v1643 = vunpack.c.l.b16 %v375
    %v1644 = vunpack.c.h.b16 %v375
    %v1645 = vunpack.c.l.b16 %v376
    %v1646 = vunpack.c.h.b16 %v376
    %v1647 = vunpack.c.l.b16 %v377
    %v1648 = vunpack.c.h.b16 %v377
    %v1649 = vunpack.c.l.b16 %v378
    %v1650 = vunpack.c.h.b16 %v378
    %v1651 = vunpack.c.l.b16 %v379
    %v1652 = vunpack.c.h.b16 %v379
    %v1653 = vunpack.c.l.b16 %v380
    %v1654 = vunpack.c.h.b16 %v380
    %v1655 = vunpack.c.l.b16 %v381
    %v1656 = vunpack.c.h.b16 %v381
    %v1657 = vunpack.c.l.b16 %v382
    %v1658 = vunpack.c.h.b16 %v382
    %v1659 = vunpack.c.l.b16 %v383
    %v1660 = vunpack.c.h.b16 %v383
    %v1661 = vunpack.c.l.b16 %v384
    %v1662 = vunpack.c.h.b16 %v384
    %v1663 = vunpack.c.l.b16 %v385
    %v1664 = vunpack.c.h.b16 %v385
    %v1665 = vunpack.c.l.b16 %v386
    %v1666 = vunpack.c.h.b16 %v386
    %v1667 = vunpack.c.l.b16 %v387
    %v1668 = vunpack.c.h.b16 %v387
    %v1669 = vunpack.c.l.b16 %v388
    %v1670 = vunpack.c.h.b16 %v388
    %v1671 = vunpack.c.l.b16 %v389
    %v1672 = vunpack.c.h.b16 %v389
    %v1673 = vunpack.c.l.b16 %v390
    %v1674 = vunpack.c.h.b16 %v390
    %v1675 = vunpack.c.l.b16 %v391
    %v1676 = vunpack.c.h.b16 %v391
    %v1677 = vunpack.c.l.b16 %v392
    %v1678 = vunpack.c.h.b16 %v392
    %v1679 = vunpack.c.l.b16 %v393
    %v1680 = vunpack.c.h.b16 %v393
    %v1681 = vunpack.c.l.b16 %v394
    %v1682 = vunpack.c.h.b16 %v394
    %v1683 = vunpack.c.l.b16 %v395
    %v1684 = vunpack.c.h.b16 %v395
    %v1685 = vunpack.c.l.b16 %v396
    %v1686 = vunpack.c.h.b16 %v396
    %v1687 = vunpack.c.l.b16 %v397
    %v1688 = vunpack.c.h.b16 %v397
    %v1689 = vunpack.c.l.b16 %v398
    %v1690 = vunpack.c.h.b16 %v398
    %v1691 = vunpack.c.l.b16 %v399
    %v1692 = vunpack.c.h.b16 %v399
    %v1693 = vunpack.c.l.b16 %v400
    %v1694 = vunpack.c.h.b16 %v400
    %v1695 = vunpack.c.l.b16 %v401
    %v1696 = vunpack.c.h.b16 %v401
    %v1697 = vunpack.c.l.b16 %v402
    %v1698 = vunpack.c.h.b16 %v402
    %v1699 = vunpack.c.l.b16 %v403
    %v1700 = vunpack.c.h.b16 %v403
    %v1701 = vunpack.c.l.b16 %v404
    %v1702 = vunpack.c.h.b16 %v404
    %v1703 = vunpack.c.l.b16 %v405
    %v1704 = vunpack.c.h.b16 %v405
    %v1705 = vunpack.c.l.b16 %v406
    %v1706 = vunpack.c.h.b16 %v406
    %v1707 = vunpack.c.l.b16 %v407
    %v1708 = vunpack.c.h.b16 %v407
    %v1709 = vunpack.c.l.b16 %v408
    %v1710 = vunpack.c.h.b16 %v408
    %v1711 = vunpack.c.l.b16 %v409
    %v1712 = vunpack.c.h.b16 %v409
    %v1713 = vunpack.c.l.b16 %v410
    %v1714 = vunpack.c.h.b16 %v410
    %v1715 = vunpack.c.l.b16 %v411
    %v1716 = vunpack.c.h.b16 %v411
    %v1717 = vunpack.c.l.b16 %v412
    %v1718 = vunpack.c.h.b16 %v412
    %v1719 = vunpack.c.l.b16 %v413
    %v1720 = vunpack.c.h.b16 %v413
    %v1721 = vunpack.c.l.b16 %v414
    %v1722 = vunpack.c.h.b16 %v414
    %v1723 = vunpack.c.l.b16 %v415
    %v1724 = vunpack.c.h.b16 %v415
    %v1725 = vunpack.c.l.b16 %v416
    %v1726 = vunpack.c.h.b16 %v416
    %v1727 = vunpack.c.l.b16 %v417
    %v1728 = vunpack.c.h.b16 %v417
    %v1729 = vunpack.c.l.b16 %v418
    %v1730 = vunpack.c.h.b16 %v418
    %v1731 = vunpack.c.l.b16 %v419
    %v1732 = vunpack.c.h.b16 %v419
    %v1733 = vunpack.c.l.b16 %v420
    %v1734 = vunpack.c.h.b16 %v420
    %v1735 = vunpack.c.l.b16 %v421
    %v1736 = vunpack.c.h.b16 %v421
    %v1737 = vunpack.c.l.b16 %v422
    %v1738 = vunpack.c.h.b16 %v422
    %v1739 = vunpack.c.l.b16 %v423
    %v1740 = vunpack.c.h.b16 %v423
    %v1741 = vunpack.c.l.b16 %v424
    %v1742 = vunpack.c.h.b16 %v424
    %v1743 = vunpack.c.l.b16 %v425
    %v1744 = vunpack.c.h.b16 %v425
    %v1745 = vunpack.c.l.b16 %v426
    %v1746 = vunpack.c.h.b16 %v426
    %v1747 = vunpack.c.l.b16 %v427
    %v1748 = vunpack.c.h.b16 %v427
    %v1749 = vunpack.c.l.b16 %v428
    %v1750 = vunpack.c.h.b16 %v428
    %v1751 = vunpack.c.l.b16 %v429
    %v1752 = vunpack.c.h.b16 %v429
    %v1753 = vunpack.c.l.b16 %v430
    %v1754 = vunpack.c.h.b16 %v430
    %v1755 = vunpack.c.l.b16 %v431
    %v1756 = vunpack.c.h.b16 %v431
    %v1757 = vunpack.c.l.b16 %v432
    %v1758 = vunpack.c.h.b16 %v432
    %v1759 = vunpack.c.l.b16 %v433
    %v1760 = vunpack.c.h.b16 %v433
    %v1761 = vunpack.c.l.b16 %v434
    %v1762 = vunpack.c.h.b16 %v434
    %v1763 = vunpack.c.l.b16 %v435
    %v1764 = vunpack.c.h.b16 %v435
    %v1765 = vunpack.c.l.b16 %v436
    %v1766 = vunpack.c.h.b16 %v436
    %v1767 = vunpack.c.l.b16 %v437
    %v1768 = vunpack.c.h.b16 %v437
    %v1769 = vunpack.c.l.b16 %v438
    %v1770 = vunpack.c.h.b16 %v438
    %v1771 = vunpack.c.l.b16 %v439
    %v1772 = vunpack.c.h.b16 %v439
    %v1773 = vunpack.c.l.b16 %v440
    %v1774 = vunpack.c.h.b16 %v440
    %v1775 = vunpack.c.l.b16 %v441
    %v1776 = vunpack.c.h.b16 %v441
    %v1777 = vunpack.c.l.b16 %v442
    %v1778 = vunpack.c.h.b16 %v442
    %v1779 = vunpack.c.l.b16 %v443
    %v1780 = vunpack.c.h.b16 %v443
    %v1781 = vunpack.c.l.b16 %v444
    %v1782 = vunpack.c.h.b16 %v444
    %v1783 = vunpack.c.l.b16 %v445
    %v1784 = vunpack.c.h.b16 %v445
    %v1785 = vunpack.c.l.b16 %v446
    %v1786 = vunpack.c.h.b16 %v446
    %v1787 = vunpack.c.l.b16 %v447
    %v1788 = vunpack.c.h.b16 %v447
    %v1789 = vunpack.c.l.b16 %v448
    %v1790 = vunpack.c.h.b16 %v448
    %v1791 = vunpack.c.l.b16 %v449
    %v1792 = vunpack.c.h.b16 %v449
    %v1793 = vunpack.c.l.b16 %v450
    %v1794 = vunpack.c.h.b16 %v450
    %v1795 = vunpack.c.l.b16 %v451
    %v1796 = vunpack.c.h.b16 %v451
    %v1797 = vunpack.c.l.b16 %v452
    %v1798 = vunpack.c.h.b16 %v452
    %v1799 = vunpack.c.l.b16 %v453
    %v1800 = vunpack.c.h.b16 %v453
    %v1801 = vunpack.c.l.b16 %v454
    %v1802 = vunpack.c.h.b16 %v454
    %v1803 = vunpack.c.l.b16 %v455
    %v1804 = vunpack.c.h.b16 %v455
    %v1805 = vunpack.c.l.b16 %v456
    %v1806 = vunpack.c.h.b16 %v456
    %v1807 = vunpack.c.l.b16 %v457
    %v1808 = vunpack.c.h.b16 %v457
    %v1809 = vunpack.c.l.b16 %v458
    %v1810 = vunpack.c.h.b16 %v458
    %v1811 = vunpack.c.l.b16 %v459
    %v1812 = vunpack.c.h.b16 %v459
    %v1813 = vunpack.c.l.b16 %v460
    %v1814 = vunpack.c.h.b16 %v460
    %v1815 = vunpack.c.l.b16 %v461
    %v1816 = vunpack.c.h.b16 %v461
    %v1817 = vunpack.c.l.b16 %v462
    %v1818 = vunpack.c.h.b16 %v462
    %v1819 = vunpack.c.l.b16 %v463
    %v1820 = vunpack.c.h.b16 %v463
    %v1821 = vunpack.c.l.b16 %v464
    %v1822 = vunpack.c.h.b16 %v464
    %v1823 = vunpack.c.l.b16 %v465
    %v1824 = vunpack.c.h.b16 %v465
    %v1825 = vunpack.c.l.b16 %v466
    %v1826 = vunpack.c.h.b16 %v466
    %v1827 = vunpack.c.l.b16 %v467
    %v1828 = vunpack.c.h.b16 %v467
    %v1829 = vunpack.c.l.b16 %v468
    %v1830 = vunpack.c.h.b16 %v468
    %v1831 = vunpack.c.l.b16 %v469
    %v1832 = vunpack.c.h.b16 %v469
    %v1833 = vunpack.c.l.b16 %v470
    %v1834 = vunpack.c.h.b16 %v470
    %v1835 = vunpack.c.l.b16 %v471
    %v1836 = vunpack.c.h.b16 %v471
    %v1837 = vunpack.c.l.b16 %v472
    %v1838 = vunpack.c.h.b16 %v472
    %v1839 = vunpack.c.l.b16 %v473
    %v1840 = vunpack.c.h.b16 %v473
    %v1841 = vunpack.c.l.b16 %v474
    %v1842 = vunpack.c.h.b16 %v474
    %v1843 = vunpack.c.l.b16 %v475
    %v1844 = vunpack.c.h.b16 %v475
    %v1845 = vunpack.c.l.b16 %v476
    %v1846 = vunpack.c.h.b16 %v476
    %v1847 = vunpack.c.l.b16 %v477
    %v1848 = vunpack.c.h.b16 %v477
    %v1849 = vunpack.c.l.b16 %v478
    %v1850 = vunpack.c.h.b16 %v478
    %v1851 = vunpack.c.l.b16 %v479
    %v1852 = vunpack.c.h.b16 %v479
    %v1853 = vunpack.c.l.b16 %v480
    %v1854 = vunpack.c.h.b16 %v480
    %v1855 = vunpack.c.l.b16 %v481
    %v1856 = vunpack.c.h.b16 %v481
    %v1857 = vunpack.c.l.b16 %v482
    %v1858 = vunpack.c.h.b16 %v482
    %v1859 = vunpack.c.l.b16 %v483
    %v1860 = vunpack.c.h.b16 %v483
    %v1861 = vunpack.c.l.b16 %v484
    %v1862 = vunpack.c.h.b16 %v484
    %v1863 = vunpack.c.l.b16 %v485
    %v1864 = vunpack.c.h.b16 %v485
    %v1865 = vunpack.c.l.b16 %v486
    %v1866 = vunpack.c.h.b16 %v486
    %v1867 = vunpack.c.l.b16 %v487
    %v1868 = vunpack.c.h.b16 %v487
    %v1869 = vunpack.c.l.b16 %v488
    %v1870 = vunpack.c.h.b16 %v488
    %v1871 = vunpack.c.l.b16 %v489
    %v1872 = vunpack.c.h.b16 %v489
    %v1873 = vunpack.c.l.b16 %v490
    %v1874 = vunpack.c.h.b16 %v490
    %v1875 = vunpack.c.l.b16 %v491
    %v1876 = vunpack.c.h.b16 %v491
    %v1877 = vunpack.c.l.b16 %v492
    %v1878 = vunpack.c.h.b16 %v492
    %v1879 = vunpack.c.l.b16 %v493
    %v1880 = vunpack.c.h.b16 %v493
    %v1881 = vunpack.c.l.b16 %v494
    %v1882 = vunpack.c.h.b16 %v494
    %v1883 = vunpack.c.l.b16 %v495
    %v1884 = vunpack.c.h.b16 %v495
    %v1885 = vunpack.c.l.b16 %v496
    %v1886 = vunpack.c.h.b16 %v496
    %v1887 = vunpack.c.l.b16 %v497
    %v1888 = vunpack.c.h.b16 %v497
    %v1889 = vunpack.c.l.b16 %v498
    %v1890 = vunpack.c.h.b16 %v498
    %v1891 = vunpack.c.l.b16 %v499
    %v1892 = vunpack.c.h.b16 %v499
    %v1893 = vunpack.c.l.b16 %v500
    %v1894 = vunpack.c.h.b16 %v500
    %v1895 = vunpack.c.l.b16 %v501
    %v1896 = vunpack.c.h.b16 %v501
    %v1897 = vunpack.c.l.b16 %v502
    %v1898 = vunpack.c.h.b16 %v502
    %v1899 = vunpack.c.l.b16 %v503
    %v1900 = vunpack.c.h.b16 %v503
    %v1901 = vunpack.c.l.b16 %v504
    %v1902 = vunpack.c.h.b16 %v504
    %v1903 = vunpack.c.l.b16 %v505
    %v1904 = vunpack.c.h.b16 %v505
    %v1905 = vunpack.c.l.b16 %v506
    %v1906 = vunpack.c.h.b16 %v506
    %v1907 = vunpack.c.l.b16 %v507
    %v1908 = vunpack.c.h.b16 %v507
    %v1909 = vunpack.c.l.b16 %v508
    %v1910 = vunpack.c.h.b16 %v508
    %v1911 = vunpack.c.l.b16 %v509
    %v1912 = vunpack.c.h.b16 %v509
    %v1913 = vunpack.c.l.b16 %v510
    %v1914 = vunpack.c.h.b16 %v510
    %v1915 = vunpack.c.l.b16 %v511
    %v1916 = vunpack.c.h.b16 %v511
    %v1917 = vunpack.c.l.b16 %v512
    %v1918 = vunpack.c.h.b16 %v512
    %v1919 = vunpack.c.l.b16 %v513
    %v1920 = vunpack.c.h.b16 %v513
    %v1921 = vunpack.c.l.b16 %v514
    %v1922 = vunpack.c.h.b16 %v514
    %v1923 = vunpack.c.l.b16 %v515
    %v1924 = vunpack.c.h.b16 %v515
    %v1925 = vunpack.c.l.b16 %v516
    %v1926 = vunpack.c.h.b16 %v516
    %v1927 = vunpack.c.l.b16 %v517
    %v1928 = vunpack.c.h.b16 %v517
    %v1929 = vunpack.c.l.b16 %v518
    %v1930 = vunpack.c.h.b16 %v518
    %v1931 = vunpack.c.l.b16 %v519
    %v1932 = vunpack.c.h.b16 %v519
    %v1933 = vunpack.c.l.b16 %v520
    %v1934 = vunpack.c.h.b16 %v520
    %v1935 = vunpack.c.l.b16 %v521
    %v1936 = vunpack.c.h.b16 %v521
    %v1937 = vunpack.c.l.b16 %v522
    %v1938 = vunpack.c.h.b16 %v522
    %v1939 = vunpack.c.l.b16 %v523
    %v1940 = vunpack.c.h.b16 %v523
    %v1941 = vunpack.c.l.b16 %v524
    %v1942 = vunpack.c.h.b16 %v524
    %v1943 = vunpack.c.l.b16 %v525
    %v1944 = vunpack.c.h.b16 %v525
    %v1945 = vunpack.c.l.b16 %v526
    %v1946 = vunpack.c.h.b16 %v526
    %v1947 = vunpack.c.l.b16 %v527
    %v1948 = vunpack.c.h.b16 %v527
    %v1949 = vunpack.c.l.b16 %v528
    %v1950 = vunpack.c.h.b16 %v528
    %v1951 = vunpack.c.l.b16 %v529
    %v1952 = vunpack.c.h.b16 %v529
    %v1953 = vunpack.c.l.b16 %v530
    %v1954 = vunpack.c.h.b16 %v530
    %v1955 = vunpack.c.l.b16 %v531
    %v1956 = vunpack.c.h.b16 %v531
    %v1957 = vunpack.c.l.b16 %v532
    %v1958 = vunpack.c.h.b16 %v532
    %v1959 = vunpack.c.l.b16 %v533
    %v1960 = vunpack.c.h.b16 %v533
    %v1961 = vunpack.c.l.b16 %v534
    %v1962 = vunpack.c.h.b16 %v534
    %v1963 = vunpack.c.l.b16 %v535
    %v1964 = vunpack.c.h.b16 %v535
    %v1965 = vunpack.c.l.b16 %v536
    %v1966 = vunpack.c.h.b16 %v536
    %v1967 = vunpack.c.l.b16 %v537
    %v1968 = vunpack.c.h.b16 %v537
    %v1969 = vunpack.c.l.b16 %v538
    %v1970 = vunpack.c.h.b16 %v538
    %v1971 = vunpack.c.l.b16 %v539
    %v1972 = vunpack.c.h.b16 %v539
    %v1973 = vunpack.c.l.b16 %v540
    %v1974 = vunpack.c.h.b16 %v540
    %v1975 = vunpack.c.l.b16 %v541
    %v1976 = vunpack.c.h.b16 %v541
    %v1977 = vunpack.c.l.b16 %v542
    %v1978 = vunpack.c.h.b16 %v542
    %v1979 = vunpack.c.l.b16 %v543
    %v1980 = vunpack.c.h.b16 %v543
    %v1981 = vunpack.c.l.b16 %v544
    %v1982 = vunpack.c.h.b16 %v544
    %v1983 = vunpack.c.l.b16 %v545
    %v1984 = vunpack.c.h.b16 %v545
    %v1985 = vunpack.c.l.b16 %v546
    %v1986 = vunpack.c.h.b16 %v546
    %v1987 = vunpack.c.l.b16 %v547
    %v1988 = vunpack.c.h.b16 %v547
    %v1989 = vunpack.c.l.b16 %v548
    %v1990 = vunpack.c.h.b16 %v548
    %v1991 = vunpack.c.l.b16 %v549
    %v1992 = vunpack.c.h.b16 %v549
    %v1993 = vunpack.c.l.b16 %v550
    %v1994 = vunpack.c.h.b16 %v550
    %v1995 = vunpack.c.l.b16 %v551
    %v1996 = vunpack.c.h.b16 %v551
    %v1997 = vunpack.c.l.b16 %v552
    %v1998 = vunpack.c.h.b16 %v552
    %v1999 = vunpack.c.l.b16 %v553
    %v2000 = vunpack.c.h.b16 %v553
    %v2001 = vunpack.c.l.b16 %v554
    %v2002 = vunpack.c.h.b16 %v554
    %v2003 = vunpack.c.l.b16 %v555
    %v2004 = vunpack.c.h.b16 %v555
    %v2005 = vunpack.c.l.b16 %v556
    %v2006 = vunpack.c.h.b16 %v556
    %v2007 = vunpack.c.l.b16 %v557
    %v2008 = vunpack.c.h.b16 %v557
    %v2009 = vunpack.c.l.b16 %v558
    %v2010 = vunpack.c.h.b16 %v558
    %v2011 = vunpack.c.l.b16 %v559
    %v2012 = vunpack.c.h.b16 %v559
    %v2013 = vunpack.c.l.b16 %v560
    %v2014 = vunpack.c.h.b16 %v560
    %v2015 = vunpack.c.l.b16 %v561
    %v2016 = vunpack.c.h.b16 %v561
    %v2017 = vunpack.c.l.b16 %v562
    %v2018 = vunpack.c.h.b16 %v562
    %v2019 = vunpack.c.l.b16 %v563
    %v2020 = vunpack.c.h.b16 %v563
    %v2021 = vunpack.c.l.b16 %v564
    %v2022 = vunpack.c.h.b16 %v564
    %v2023 = vunpack.c.l.b16 %v565
    %v2024 = vunpack.c.h.b16 %v565
    %v2025 = vunpack.c.l.b16 %v566
    %v2026 = vunpack.c.h.b16 %v566
    %v2027 = vunpack.c.l.b16 %v567
    %v2028 = vunpack.c.h.b16 %v567
    %v2029 = vunpack.c.l.b16 %v568
    %v2030 = vunpack.c.h.b16 %v568
    %v2031 = vunpack.c.l.b16 %v569
    %v2032 = vunpack.c.h.b16 %v569
    %v2033 = vunpack.c.l.b16 %v570
    %v2034 = vunpack.c.h.b16 %v570
    %v2035 = vunpack.c.l.b16 %v571
    %v2036 = vunpack.c.h.b16 %v571
    %v2037 = vunpack.c.l.b16 %v572
    %v2038 = vunpack.c.h.b16 %v572
    %v2039 = vunpack.c.l.b16 %v573
    %v2040 = vunpack.c.h.b16 %v573
    %v2041 = vunpack.c.l.b16 %v574
    %v2042 = vunpack.c.h.b16 %v574
    %v2043 = vunpack.c.l.b16 %v575
    %v2044 = vunpack.c.h.b16 %v575
    %v2045 = vunpack.c.l.b16 %v576
    %v2046 = vunpack.c.h.b16 %v576
    %v2047 = vunpack.c.l.b16 %v577
    %v2048 = vunpack.c.h.b16 %v577
    %v2049 = vunpack.c.l.b16 %v578
    %v2050 = vunpack.c.h.b16 %v578
    %v2051 = vunpack.c.l.b16 %v579
    %v2052 = vunpack.c.h.b16 %v579
    %v2053 = vunpack.c.l.b16 %v580
    %v2054 = vunpack.c.h.b16 %v580
    %v2055 = vunpack.c.l.b16 %v581
    %v2056 = vunpack.c.h.b16 %v581
    %v2057 = vunpack.c.l.b16 %v582
    %v2058 = vunpack.c.h.b16 %v582
    %v2059 = vunpack.c.l.b16 %v583
    %v2060 = vunpack.c.h.b16 %v583
    %v2061 = vunpack.c.l.b16 %v584
    %v2062 = vunpack.c.h.b16 %v584
    %v2063 = vunpack.c.l.b16 %v585
    %v2064 = vunpack.c.h.b16 %v585
    %v2065 = vunpack.c.l.b16 %v586
    %v2066 = vunpack.c.h.b16 %v586
    %v2067 = vunpack.c.l.b16 %v587
    %v2068 = vunpack.c.h.b16 %v587
    %v2069 = vunpack.c.l.b16 %v588
    %v2070 = vunpack.c.h.b16 %v588
    %v2071 = vunpack.c.l.b16 %v589
    %v2072 = vunpack.c.h.b16 %v589
    %v2073 = vunpack.c.l.b16 %v590
    %v2074 = vunpack.c.h.b16 %v590
    %v2075 = vunpack.c.l.b16 %v591
    %v2076 = vunpack.c.h.b16 %v591
    %v2077 = vunpack.c.l.b16 %v592
    %v2078 = vunpack.c.h.b16 %v592
    %v2079 = vunpack.c.l.b16 %v593
    %v2080 = vunpack.c.h.b16 %v593
    %v2081 = vunpack.c.l.b16 %v594
    %v2082 = vunpack.c.h.b16 %v594
    %v2083 = vunpack.c.l.b16 %v595
    %v2084 = vunpack.c.h.b16 %v595
    %v2085 = vunpack.c.l.b16 %v596
    %v2086 = vunpack.c.h.b16 %v596
    %v2087 = vunpack.c.l.b16 %v597
    %v2088 = vunpack.c.h.b16 %v597
    %v2089 = vunpack.c.l.b16 %v598
    %v2090 = vunpack.c.h.b16 %v598
    %v2091 = vunpack.c.l.b16 %v599
    %v2092 = vunpack.c.h.b16 %v599
    %v2093 = vunpack.c.l.b16 %v600
    %v2094 = vunpack.c.h.b16 %v600
    %v2095 = vunpack.c.l.b16 %v601
    %v2096 = vunpack.c.h.b16 %v601
    %v2097 = vunpack.c.l.b16 %v602
    %v2098 = vunpack.c.h.b16 %v602
    %v2099 = vunpack.c.l.b16 %v603
    %v2100 = vunpack.c.h.b16 %v603
    %v2101 = vunpack.c.l.b16 %v604
    %v2102 = vunpack.c.h.b16 %v604
    %v2103 = vunpack.c.l.b16 %v605
    %v2104 = vunpack.c.h.b16 %v605
    %v2105 = vunpack.c.l.b16 %v606
    %v2106 = vunpack.c.h.b16 %v606
    %v2107 = vunpack.c.l.b16 %v607
    %v2108 = vunpack.c.h.b16 %v607
    %v2109 = vunpack.c.l.b16 %v608
    %v2110 = vunpack.c.h.b16 %v608
    %v2111 = vunpack.c.l.b16 %v609
    %v2112 = vunpack.c.h.b16 %v609
    %v2113 = vunpack.c.l.b16 %v610
    %v2114 = vunpack.c.h.b16 %v610
    %v2115 = vunpack.c.l.b16 %v611
    %v2116 = vunpack.c.h.b16 %v611
    %v2117 = vunpack.c.l.b16 %v612
    %v2118 = vunpack.c.h.b16 %v612
    %v2119 = vunpack.c.l.b16 %v613
    %v2120 = vunpack.c.h.b16 %v613
    %v2121 = vunpack.c.l.b16 %v614
    %v2122 = vunpack.c.h.b16 %v614
    %v2123 = vunpack.c.l.b16 %v615
    %v2124 = vunpack.c.h.b16 %v615
    %v2125 = vunpack.c.l.b16 %v616
    %v2126 = vunpack.c.h.b16 %v616
    %v2127 = vunpack.c.l.b16 %v617
    %v2128 = vunpack.c.h.b16 %v617
    %v2129 = vunpack.c.l.b16 %v618
    %v2130 = vunpack.c.h.b16 %v618
    %v2131 = vunpack.c.l.b16 %v619
    %v2132 = vunpack.c.h.b16 %v619
    %v2133 = vunpack.c.l.b16 %v620
    %v2134 = vunpack.c.h.b16 %v620
    %v2135 = vunpack.c.l.b16 %v621
    %v2136 = vunpack.c.h.b16 %v621
    %v2137 = vunpack.c.l.b16 %v622
    %v2138 = vunpack.c.h.b16 %v622
    %v2139 = vunpack.c.l.b16 %v623
    %v2140 = vunpack.c.h.b16 %v623
    %v2141 = vunpack.c.l.b16 %v624
    %v2142 = vunpack.c.h.b16 %v624
    %v2143 = vunpack.c.l.b16 %v625
    %v2144 = vunpack.c.h.b16 %v625
    %v2145 = vunpack.c.l.b16 %v626
    %v2146 = vunpack.c.h.b16 %v626
    %v2147 = vunpack.c.l.b16 %v627
    %v2148 = vunpack.c.h.b16 %v627
    %v2149 = vunpack.c.l.b16 %v628
    %v2150 = vunpack.c.h.b16 %v628
    %v2151 = vunpack.c.l.b16 %v629
    %v2152 = vunpack.c.h.b16 %v629
    %v2153 = vunpack.c.l.b16 %v630
    %v2154 = vunpack.c.h.b16 %v630
    %v2155 = vunpack.c.l.b16 %v631
    %v2156 = vunpack.c.h.b16 %v631
    %v2157 = vunpack.c.l.b16 %v632
    %v2158 = vunpack.c.h.b16 %v632
    %v2159 = vunpack.c.l.b16 %v633
    %v2160 = vunpack.c.h.b16 %v633
    %v2161 = vunpack.c.l.b16 %v634
    %v2162 = vunpack.c.h.b16 %v634
    %v2163 = vunpack.c.l.b16 %v635
    %v2164 = vunpack.c.h.b16 %v635
    %v2165 = vunpack.c.l.b16 %v636
    %v2166 = vunpack.c.h.b16 %v636
    %v2167 = vunpack.c.l.b16 %v637
    %v2168 = vunpack.c.h.b16 %v637
    %v2169 = vunpack.c.l.b16 %v638
    %v2170 = vunpack.c.h.b16 %v638
    %v2171 = vunpack.c.l.b16 %v639
    %v2172 = vunpack.c.h.b16 %v639
    %v2173 = vunpack.c.l.b16 %v640
    %v2174 = vunpack.c.h.b16 %v640
    %v2175 = vunpack.c.l.b16 %v641
    %v2176 = vunpack.c.h.b16 %v641
    %v2177 = vunpack.c.l.b16 %v642
    %v2178 = vunpack.c.h.b16 %v642
    %v2179 = vunpack.c.l.b16 %v643
    %v2180 = vunpack.c.h.b16 %v643
    %v2181 = vunpack.c.l.b16 %v644
    %v2182 = vunpack.c.h.b16 %v644
    %v2183 = vunpack.c.l.b16 %v645
    %v2184 = vunpack.c.h.b16 %v645
    %v2185 = vunpack.c.l.b16 %v646
    %v2186 = vunpack.c.h.b16 %v646
    %v2187 = vunpack.c.l.b16 %v647
    %v2188 = vunpack.c.h.b16 %v647
    %v2189 = vunpack.c.l.b16 %v648
    %v2190 = vunpack.c.h.b16 %v648
    %v2191 = vpack.c.b16 %v1199, %v1191
    %v2192 = vpack.c.b16 %v1200, %v1192
    %v2193 = vpack.c.b16 %v1201, %v1193
    %v2194 = vpack.c.b16 %v1202, %v1194
    %v2195 = vpack.c.b16 %v1203, %v1195
    %v2196 = vpack.c.b16 %v1204, %v1196
    %v2197 = vpack.c.b16 %v1205, %v1197
    %v2198 = vpack.c.b16 %v1206, %v1198
    %v2199 = vpack.c.b16 %v1215, %v1207
    %v2200 = vpack.c.b16 %v1216, %v1208
    %v2201 = vpack.c.b16 %v1217, %v1209
    %v2202 = vpack.c.b16 %v1218, %v1210
    %v2203 = vpack.c.b16 %v1219, %v1211
    %v2204 = vpack.c.b16 %v1220, %v1212
    %v2205 = vpack.c.b16 %v1221, %v1213
    %v2206 = vpack.c.b16 %v1222, %v1214
    %v2207 = vpack.c.b16 %v1231, %v1223
    %v2208 = vpack.c.b16 %v1232, %v1224
    %v2209 = vpack.c.b16 %v1233, %v1225
    %v2210 = vpack.c.b16 %v1234, %v1226
    %v2211 = vpack.c.b16 %v1235, %v1227
    %v2212 = vpack.c.b16 %v1236, %v1228
    %v2213 = vpack.c.b16 %v1237, %v1229
    %v2214 = vpack.c.b16 %v1238, %v1230
    %v2215 = vpack.c.b16 %v1247, %v1239
    %v2216 = vpack.c.b16 %v1248, %v1240
    %v2217 = vpack.c.b16 %v1249, %v1241
    %v2218 = vpack.c.b16 %v1250, %v1242
    %v2219 = vpack.c.b16 %v1251, %v1243
    %v2220 = vpack.c.b16 %v1252, %v1244
    %v2221 = vpack.c.b16 %v1253, %v1245
    %v2222 = vpack.c.b16 %v1254, %v1246
    %v2223 = vpack.c.b16 %v1263, %v1255
    %v2224 = vpack.c.b16 %v1264, %v1256
    %v2225 = vpack.c.b16 %v1265, %v1257
    %v2226 = vpack.c.b16 %v1266, %v1258
    %v2227 = vpack.c.b16 %v1267, %v1259
    %v2228 = vpack.c.b16 %v1268, %v1260
    %v2229 = vpack.c.b16 %v1269, %v1261
    %v2230 = vpack.c.b16 %v1270, %v1262
    %v2231 = vpack.c.b16 %v1279, %v1271
    %v2232 = vpack.c.b16 %v1280, %v1272
    %v2233 = vpack.c.b16 %v1281, %v1273
    %v2234 = vpack.c.b16 %v1282, %v1274
    %v2235 = vpack.c.b16 %v1283, %v1275
    %v2236 = vpack.c.b16 %v1284, %v1276
    %v2237 = vpack.c.b16 %v1285, %v1277
    %v2238 = vpack.c.b16 %v1286, %v1278
    %v2239 = vpack.c.b16 %v1295, %v1287
    %v2240 = vpack.c.b16 %v1296, %v1288
    %v2241 = vpack.c.b16 %v1297, %v1289
    %v2242 = vpack.c.b16 %v1298, %v1290
    %v2243 = vpack.c.b16 %v1299, %v1291
    %v2244 = vpack.c.b16 %v1300, %v1292
    %v2245 = vpack.c.b16 %v1301, %v1293
    %v2246 = vpack.c.b16 %v1302, %v1294
    %v2247 = vpack.c.b16 %v1311, %v1303
    %v2248 = vpack.c.b16 %v1312, %v1304
    %v2249 = vpack.c.b16 %v1313, %v1305
    %v2250 = vpack.c.b16 %v1314, %v1306
    %v2251 = vpack.c.b16 %v1315, %v1307
    %v2252 = vpack.c.b16 %v1316, %v1308
    %v2253 = vpack.c.b16 %v1317, %v1309
    %v2254 = vpack.c.b16 %v1318, %v1310
    %v2255 = vpack.c.b16 %v1327, %v1319
    %v2256 = vpack.c.b16 %v1328, %v1320
    %v2257 = vpack.c.b16 %v1329, %v1321
    %v2258 = vpack.c.b16 %v1330, %v1322
    %v2259 = vpack.c.b16 %v1331, %v1323
    %v2260 = vpack.c.b16 %v1332, %v1324
    %v2261 = vpack.c.b16 %v1333, %v1325
    %v2262 = vpack.c.b16 %v1334, %v1326
    %v2263 = vpack.c.b16 %v1343, %v1335
    %v2264 = vpack.c.b16 %v1344, %v1336
    %v2265 = vpack.c.b16 %v1345, %v1337
    %v2266 = vpack.c.b16 %v1346, %v1338
    %v2267 = vpack.c.b16 %v1347, %v1339
    %v2268 = vpack.c.b16 %v1348, %v1340
    %v2269 = vpack.c.b16 %v1349, %v1341
    %v2270 = vpack.c.b16 %v1350, %v1342
    %v2271 = vpack.c.b16 %v1359, %v1351
    %v2272 = vpack.c.b16 %v1360, %v1352
    %v2273 = vpack.c.b16 %v1361, %v1353
    %v2274 = vpack.c.b16 %v1362, %v1354
    %v2275 = vpack.c.b16 %v1363, %v1355
    %v2276 = vpack.c.b16 %v1364, %v1356
    %v2277 = vpack.c.b16 %v1365, %v1357
    %v2278 = vpack.c.b16 %v1366, %v1358
    %v2279 = vpack.c.b16 %v1375, %v1367
    %v2280 = vpack.c.b16 %v1376, %v1368
    %v2281 = vpack.c.b16 %v1377, %v1369
    %v2282 = vpack.c.b16 %v1378, %v1370
    %v2283 = vpack.c.b16 %v1379, %v1371
    %v2284 = vpack.c.b16 %v1380, %v1372
    %v2285 = vpack.c.b16 %v1381, %v1373
    %v2286 = vpack.c.b16 %v1382, %v1374
    %v2287 = vpack.c.b16 %v1391, %v1383
    %v2288 = vpack.c.b16 %v1392, %v1384
    %v2289 = vpack.c.b16 %v1393, %v1385
    %v2290 = vpack.c.b16 %v1394, %v1386
    %v2291 = vpack.c.b16 %v1395, %v1387
    %v2292 = vpack.c.b16 %v1396, %v1388
    %v2293 = vpack.c.b16 %v1397, %v1389
    %v2294 = vpack.c.b16 %v1398, %v1390
    %v2295 = vpack.c.b16 %v1407, %v1399
    %v2296 = vpack.c.b16 %v1408, %v1400
    %v2297 = vpack.c.b16 %v1409, %v1401
    %v2298 = vpack.c.b16 %v1410, %v1402
    %v2299 = vpack.c.b16 %v1411, %v1403
    %v2300 = vpack.c.b16 %v1412, %v1404
    %v2301 = vpack.c.b16 %v1413, %v1405
    %v2302 = vpack.c.b16 %v1414, %v1406
    %v2303 = vpack.c.b16 %v1423, %v1415
    %v2304 = vpack.c.b16 %v1424, %v1416
    %v2305 = vpack.c.b16 %v1425, %v1417
    %v2306 = vpack.c.b16 %v1426, %v1418
    %v2307 = vpack.c.b16 %v1427, %v1419
    %v2308 = vpack.c.b16 %v1428, %v1420
    %v2309 = vpack.c.b16 %v1429, %v1421
    %v2310 = vpack.c.b16 %v1430, %v1422
    %v2311 = vpack.c.b16 %v1439, %v1431
    %v2312 = vpack.c.b16 %v1440, %v1432
    %v2313 = vpack.c.b16 %v1441, %v1433
    %v2314 = vpack.c.b16 %v1442, %v1434
    %v2315 = vpack.c.b16 %v1443, %v1435
    %v2316 = vpack.c.b16 %v1444, %v1436
    %v2317 = vpack.c.b16 %v1445, %v1437
    %v2318 = vpack.c.b16 %v1446, %v1438
    %v2319 = vpack.c.b16 %v1455, %v1447
    %v2320 = vpack.c.b16 %v1456, %v1448
    %v2321 = vpack.c.b16 %v1457, %v1449
    %v2322 = vpack.c.b16 %v1458, %v1450
    %v2323 = vpack.c.b16 %v1459, %v1451
    %v2324 = vpack.c.b16 %v1460, %v1452
    %v2325 = vpack.c.b16 %v1461, %v1453
    %v2326 = vpack.c.b16 %v1462, %v1454
    %v2327 = vpack.c.b16 %v1471, %v1463
    %v2328 = vpack.c.b16 %v1472, %v1464
    %v2329 = vpack.c.b16 %v1473, %v1465
    %v2330 = vpack.c.b16 %v1474, %v1466
    %v2331 = vpack.c.b16 %v1475, %v1467
    %v2332 = vpack.c.b16 %v1476, %v1468
    %v2333 = vpack.c.b16 %v1477, %v1469
    %v2334 = vpack.c.b16 %v1478, %v1470
    %v2335 = vpack.c.b16 %v1487, %v1479
    %v2336 = vpack.c.b16 %v1488, %v1480
    %v2337 = vpack.c.b16 %v1489, %v1481
    %v2338 = vpack.c.b16 %v1490, %v1482
    %v2339 = vpack.c.b16 %v1491, %v1483
    %v2340 = vpack.c.b16 %v1492, %v1484
    %v2341 = vpack.c.b16 %v1493, %v1485
    %v2342 = vpack.c.b16 %v1494, %v1486
    %v2343 = vpack.c.b16 %v1503, %v1495
    %v2344 = vpack.c.b16 %v1504, %v1496
    %v2345 = vpack.c.b16 %v1505, %v1497
    %v2346 = vpack.c.b16 %v1506, %v1498
    %v2347 = vpack.c.b16 %v1507, %v1499
    %v2348 = vpack.c.b16 %v1508, %v1500
    %v2349 = vpack.c.b16 %v1509, %v1501
    %v2350 = vpack.c.b16 %v1510, %v1502
    %v2351 = vpack.c.b16 %v1519, %v1511
    %v2352 = vpack.c.b16 %v1520, %v1512
    %v2353 = vpack.c.b16 %v1521, %v1513
    %v2354 = vpack.c.b16 %v1522, %v1514
    %v2355 = vpack.c.b16 %v1523, %v1515
    %v2356 = vpack.c.b16 %v1524, %v1516
    %v2357 = vpack.c.b16 %v1525, %v1517
    %v2358 = vpack.c.b16 %v1526, %v1518
    %v2359 = vpack.c.b16 %v1535, %v1527
    %v2360 = vpack.c.b16 %v1536, %v1528
    %v2361 = vpack.c.b16 %v1537, %v1529
    %v2362 = vpack.c.b16 %v1538, %v1530
    %v2363 = vpack.c.b16 %v1539, %v1531
    %v2364 = vpack.c.b16 %v1540, %v1532
    %v2365 = vpack.c.b16 %v1541, %v1533
    %v2366 = vpack.c.b16 %v1542, %v1534
    %v2367 = vpack.c.b16 %v1551, %v1543
    %v2368 = vpack.c.b16 %v1552, %v1544
    %v2369 = vpack.c.b16 %v1553, %v1545
    %v2370 = vpack.c.b16 %v1554, %v1546
    %v2371 = vpack.c.b16 %v1555, %v1547
    %v2372 = vpack.c.b16 %v1556, %v1548
    %v2373 = vpack.c.b16 %v1557, %v1549
    %v2374 = vpack.c.b16 %v1558, %v1550
    %v2375 = vpack.c.b16 %v1567, %v1559
    %v2376 = vpack.c.b16 %v1568, %v1560
    %v2377 = vpack.c.b16 %v1569, %v1561
    %v2378 = vpack.c.b16 %v1570, %v1562
    %v2379 = vpack.c.b16 %v1571, %v1563
    %v2380 = vpack.c.b16 %v1572, %v1564
    %v2381 = vpack.c.b16 %v1573, %v1565
    %v2382 = vpack.c.b16 %v1574, %v1566
    %v2383 = vpack.c.b16 %v1583, %v1575
    %v2384 = vpack.c.b16 %v1584, %v1576
    %v2385 = vpack.c.b16 %v1585, %v1577
    %v2386 = vpack.c.b16 %v1586, %v1578
    %v2387 = vpack.c.b16 %v1587, %v1579
    %v2388 = vpack.c.b16 %v1588, %v1580
    %v2389 = vpack.c.b16 %v1589, %v1581
    %v2390 = vpack.c.b16 %v1590, %v1582
    %v2391 = vpack.c.b16 %v1599, %v1591
    %v2392 = vpack.c.b16 %v1600, %v1592
    %v2393 = vpack.c.b16 %v1601, %v1593
    %v2394 = vpack.c.b16 %v1602, %v1594
    %v2395 = vpack.c.b16 %v1603, %v1595
    %v2396 = vpack.c.b16 %v1604, %v1596
    %v2397 = vpack.c.b16 %v1605, %v1597
    %v2398 = vpack.c.b16 %v1606, %v1598
    %v2399 = vpack.c.b16 %v1615, %v1607
    %v2400 = vpack.c.b16 %v1616, %v1608
    %v2401 = vpack.c.b16 %v1617, %v1609
    %v2402 = vpack.c.b16 %v1618, %v1610
    %v2403 = vpack.c.b16 %v1619, %v1611
    %v2404 = vpack.c.b16 %v1620, %v1612
    %v2405 = vpack.c.b16 %v1621, %v1613
    %v2406 = vpack.c.b16 %v1622, %v1614
    %v2407 = vpack.c.b16 %v1631, %v1623
    %v2408 = vpack.c.b16 %v1632, %v1624
    %v2409 = vpack.c.b16 %v1633, %v1625
    %v2410 = vpack.c.b16 %v1634, %v1626
    %v2411 = vpack.c.b16 %v1635, %v1627
    %v2412 = vpack.c.b16 %v1636, %v1628
    %v2413 = vpack.c.b16 %v1637, %v1629
    %v2414 = vpack.c.b16 %v1638, %v1630
    %v2415 = vpack.c.b16 %v1647, %v1639
    %v2416 = vpack.c.b16 %v1648, %v1640
    %v2417 = vpack.c.b16 %v1649, %v1641
    %v2418 = vpack.c.b16 %v1650, %v1642
    %v2419 = vpack.c.b16 %v1651, %v1643
    %v2420 = vpack.c.b16 %v1652, %v1644
    %v2421 = vpack.c.b16 %v1653, %v1645
    %v2422 = vpack.c.b16 %v1654, %v1646
    %v2423 = vpack.c.b16 %v1663, %v1655
    %v2424 = vpack.c.b16 %v1664, %v1656
    %v2425 = vpack.c.b16 %v1665, %v1657
    %v2426 = vpack.c.b16 %v1666, %v1658
    %v2427 = vpack.c.b16 %v1667, %v1659
    %v2428 = vpack.c.b16 %v1668, %v1660
    %v2429 = vpack.c.b16 %v1669, %v1661
    %v2430 = vpack.c.b16 %v1670, %v1662
    %v2431 = vpack.c.b16 %v1679, %v1671
    %v2432 = vpack.c.b16 %v1680, %v1672
    %v2433 = vpack.c.b16 %v1681, %v1673
    %v2434 = vpack.c.b16 %v1682, %v1674
    %v2435 = vpack.c.b16 %v1683, %v1675
    %v2436 = vpack.c.b16 %v1684, %v1676
    %v2437 = vpack.c.b16 %v1685, %v1677
    %v2438 = vpack.c.b16 %v1686, %v1678
    %v2439 = vpack.c.b16 %v1695, %v1687
    %v2440 = vpack.c.b16 %v1696, %v1688
    %v2441 = vpack.c.b16 %v1697, %v1689
    %v2442 = vpack.c.b16 %v1698, %v1690
    %v2443 = vpack.c.b16 %v1699, %v1691
    %v2444 = vpack.c.b16 %v1700, %v1692
    %v2445 = vpack.c.b16 %v1701, %v1693
    %v2446 = vpack.c.b16 %v1702, %v1694
    %v2447 = vpack.c.b16 %v1711, %v1703
    %v2448 = vpack.c.b16 %v1712, %v1704
    %v2449 = vpack.c.b16 %v1713, %v1705
    %v2450 = vpack.c.b16 %v1714, %v1706
    %v2451 = vpack.c.b16 %v1715, %v1707
    %v2452 = vpack.c.b16 %v1716, %v1708
    %v2453 = vpack.c.b16 %v1717, %v1709
    %v2454 = vpack.c.b16 %v1718, %v1710
    %v2455 = vpack.c.b16 %v1727, %v1719
    %v2456 = vpack.c.b16 %v1728, %v1720
    %v2457 = vpack.c.b16 %v1729, %v1721
    %v2458 = vpack.c.b16 %v1730, %v1722
    %v2459 = vpack.c.b16 %v1731, %v1723
    %v2460 = vpack.c.b16 %v1732, %v1724
    %v2461 = vpack.c.b16 %v1733, %v1725
    %v2462 = vpack.c.b16 %v1734, %v1726
    %v2463 = vpack.c.b16 %v1743, %v1735
    %v2464 = vpack.c.b16 %v1744, %v1736
    %v2465 = vpack.c.b16 %v1745, %v1737
    %v2466 = vpack.c.b16 %v1746, %v1738
    %v2467 = vpack.c.b16 %v1747, %v1739
    %v2468 = vpack.c.b16 %v1748, %v1740
    %v2469 = vpack.c.b16 %v1749, %v1741
    %v2470 = vpack.c.b16 %v1750, %v1742
    %v2471 = vpack.c.b16 %v1759, %v1751
    %v2472 = vpack.c.b16 %v1760, %v1752
    %v2473 = vpack.c.b16 %v1761, %v1753
    %v2474 = vpack.c.b16 %v1762, %v1754
    %v2475 = vpack.c.b16 %v1763, %v1755
    %v2476 = vpack.c.b16 %v1764, %v1756
    %v2477 = vpack.c.b16 %v1765, %v1757
    %v2478 = vpack.c.b16 %v1766, %v1758
    %v2479 = vpack.c.b16 %v1775, %v1767
    %v2480 = vpack.c.b16 %v1776, %v1768
    %v2481 = vpack.c.b16 %v1777, %v1769
    %v2482 = vpack.c.b16 %v1778, %v1770
    %v2483 = vpack.c.b16 %v1779, %v1771
    %v2484 = vpack.c.b16 %v1780, %v1772
    %v2485 = vpack.c.b16 %v1781, %v1773
    %v2486 = vpack.c.b16 %v1782, %v1774
    %v2487 = vpack.c.b16 %v1791, %v1783
    %v2488 = vpack.c.b16 %v1792, %v1784
    %v2489 = vpack.c.b16 %v1793, %v1785
    %v2490 = vpack.c.b16 %v1794, %v1786
    %v2491 = vpack.c.b16 %v1795, %v1787
    %v2492 = vpack.c.b16 %v1796, %v1788
    %v2493 = vpack.c.b16 %v1797, %v1789
    %v2494 = vpack.c.b16 %v1798, %v1790
    %v2495 = vpack.c.b16 %v1807, %v1799
    %v2496 = vpack.c.b16 %v1808, %v1800
    %v2497 = vpack.c.b16 %v1809, %v1801
    %v2498 = vpack.c.b16 %v1810, %v1802
    %v2499 = vpack.c.b16 %v1811, %v1803
    %v2500 = vpack.c.b16 %v1812, %v1804
    %v2501 = vpack.c.b16 %v1813, %v1805
    %v2502 = vpack.c.b16 %v1814, %v1806
    %v2503 = vpack.c.b16 %v1823, %v1815
    %v2504 = vpack.c.b16 %v1824, %v1816
    %v2505 = vpack.c.b16 %v1825, %v1817
    %v2506 = vpack.c.b16 %v1826, %v1818
    %v2507 = vpack.c.b16 %v1827, %v1819
    %v2508 = vpack.c.b16 %v1828, %v1820
    %v2509 = vpack.c.b16 %v1829, %v1821
    %v2510 = vpack.c.b16 %v1830, %v1822
    %v2511 = vpack.c.b16 %v1839, %v1831
    %v2512 = vpack.c.b16 %v1840, %v1832
    %v2513 = vpack.c.b16 %v1841, %v1833
    %v2514 = vpack.c.b16 %v1842, %v1834
    %v2515 = vpack.c.b16 %v1843, %v1835
    %v2516 = vpack.c.b16 %v1844, %v1836
    %v2517 = vpack.c.b16 %v1845, %v1837
    %v2518 = vpack.c.b16 %v1846, %v1838
    %v2519 = vpack.c.b16 %v1855, %v1847
    %v2520 = vpack.c.b16 %v1856, %v1848
    %v2521 = vpack.c.b16 %v1857, %v1849
    %v2522 = vpack.c.b16 %v1858, %v1850
    %v2523 = vpack.c.b16 %v1859, %v1851
    %v2524 = vpack.c.b16 %v1860, %v1852
    %v2525 = vpack.c.b16 %v1861, %v1853
    %v2526 = vpack.c.b16 %v1862, %v1854
    %v2527 = vpack.c.b16 %v1871, %v1863
    %v2528 = vpack.c.b16 %v1872, %v1864
    %v2529 = vpack.c.b16 %v1873, %v1865
    %v2530 = vpack.c.b16 %v1874, %v1866
    %v2531 = vpack.c.b16 %v1875, %v1867
    %v2532 = vpack.c.b16 %v1876, %v1868
    %v2533 = vpack.c.b16 %v1877, %v1869
    %v2534 = vpack.c.b16 %v1878, %v1870
    %v2535 = vpack.c.b16 %v1887, %v1879
    %v2536 = vpack.c.b16 %v1888, %v1880
    %v2537 = vpack.c.b16 %v1889, %v1881
    %v2538 = vpack.c.b16 %v1890, %v1882
    %v2539 = vpack.c.b16 %v1891, %v1883
    %v2540 = vpack.c.b16 %v1892, %v1884
    %v2541 = vpack.c.b16 %v1893, %v1885
    %v2542 = vpack.c.b16 %v1894, %v1886
    %v2543 = vpack.c.b16 %v1903, %v1895
    %v2544 = vpack.c.b16 %v1904, %v1896
    %v2545 = vpack.c.b16 %v1905, %v1897
    %v2546 = vpack.c.b16 %v1906, %v1898
    %v2547 = vpack.c.b16 %v1907, %v1899
    %v2548 = vpack.c.b16 %v1908, %v1900
    %v2549 = vpack.c.b16 %v1909, %v1901
    %v2550 = vpack.c.b16 %v1910, %v1902
    %v2551 = vpack.c.b16 %v1919, %v1911
    %v2552 = vpack.c.b16 %v1920, %v1912
    %v2553 = vpack.c.b16 %v1921, %v1913
    %v2554 = vpack.c.b16 %v1922, %v1914
    %v2555 = vpack.c.b16 %v1923, %v1915
    %v2556 = vpack.c.b16 %v1924, %v1916
    %v2557 = vpack.c.b16 %v1925, %v1917
    %v2558 = vpack.c.b16 %v1926, %v1918
    %v2559 = vpack.c.b16 %v1935, %v1927
    %v2560 = vpack.c.b16 %v1936, %v1928
    %v2561 = vpack.c.b16 %v1937, %v1929
    %v2562 = vpack.c.b16 %v1938, %v1930
    %v2563 = vpack.c.b16 %v1939, %v1931
    %v2564 = vpack.c.b16 %v1940, %v1932
    %v2565 = vpack.c.b16 %v1941, %v1933
    %v2566 = vpack.c.b16 %v1942, %v1934
    %v2567 = vpack.c.b16 %v1951, %v1943
    %v2568 = vpack.c.b16 %v1952, %v1944
    %v2569 = vpack.c.b16 %v1953, %v1945
    %v2570 = vpack.c.b16 %v1954, %v1946
    %v2571 = vpack.c.b16 %v1955, %v1947
    %v2572 = vpack.c.b16 %v1956, %v1948
    %v2573 = vpack.c.b16 %v1957, %v1949
    %v2574 = vpack.c.b16 %v1958, %v1950
    %v2575 = vpack.c.b16 %v1967, %v1959
    %v2576 = vpack.c.b16 %v1968, %v1960
    %v2577 = vpack.c.b16 %v1969, %v1961
    %v2578 = vpack.c.b16 %v1970, %v1962
    %v2579 = vpack.c.b16 %v1971, %v1963
    %v2580 = vpack.c.b16 %v1972, %v1964
    %v2581 = vpack.c.b16 %v1973, %v1965
    %v2582 = vpack.c.b16 %v1974, %v1966
    %v2583 = vpack.c.b16 %v1983, %v1975
    %v2584 = vpack.c.b16 %v1984, %v1976
    %v2585 = vpack.c.b16 %v1985, %v1977
    %v2586 = vpack.c.b16 %v1986, %v1978
    %v2587 = vpack.c.b16 %v1987, %v1979
    %v2588 = vpack.c.b16 %v1988, %v1980
    %v2589 = vpack.c.b16 %v1989, %v1981
    %v2590 = vpack.c.b16 %v1990, %v1982
    %v2591 = vpack.c.b16 %v1999, %v1991
    %v2592 = vpack.c.b16 %v2000, %v1992
    %v2593 = vpack.c.b16 %v2001, %v1993
    %v2594 = vpack.c.b16 %v2002, %v1994
    %v2595 = vpack.c.b16 %v2003, %v1995
    %v2596 = vpack.c.b16 %v2004, %v1996
    %v2597 = vpack.c.b16 %v2005, %v1997
    %v2598 = vpack.c.b16 %v2006, %v1998
    %v2599 = vpack.c.b16 %v2015, %v2007
    %v2600 = vpack.c.b16 %v2016, %v2008
    %v2601 = vpack.c.b16 %v2017, %v2009
    %v2602 = vpack.c.b16 %v2018, %v2010
    %v2603 = vpack.c.b16 %v2019, %v2011
    %v2604 = vpack.c.b16 %v2020, %v2012
    %v2605 = vpack.c.b16 %v2021, %v2013
    %v2606 = vpack.c.b16 %v2022, %v2014
    %v2607 = vpack.c.b16 %v2031, %v2023
    %v2608 = vpack.c.b16 %v2032, %v2024
    %v2609 = vpack.c.b16 %v2033, %v2025
    %v2610 = vpack.c.b16 %v2034, %v2026
    %v2611 = vpack.c.b16 %v2035, %v2027
    %v2612 = vpack.c.b16 %v2036, %v2028
    %v2613 = vpack.c.b16 %v2037, %v2029
    %v2614 = vpack.c.b16 %v2038, %v2030
    %v2615 = vpack.c.b16 %v2047, %v2039
    %v2616 = vpack.c.b16 %v2048, %v2040
    %v2617 = vpack.c.b16 %v2049, %v2041
    %v2618 = vpack.c.b16 %v2050, %v2042
    %v2619 = vpack.c.b16 %v2051, %v2043
    %v2620 = vpack.c.b16 %v2052, %v2044
    %v2621 = vpack.c.b16 %v2053, %v2045
    %v2622 = vpack.c.b16 %v2054, %v2046
    %v2623 = vpack.c.b16 %v2063, %v2055
    %v2624 = vpack.c.b16 %v2064, %v2056
    %v2625 = vpack.c.b16 %v2065, %v2057
    %v2626 = vpack.c.b16 %v2066, %v2058
    %v2627 = vpack.c.b16 %v2067, %v2059
    %v2628 = vpack.c.b16 %v2068, %v2060
    %v2629 = vpack.c.b16 %v2069, %v2061
    %v2630 = vpack.c.b16 %v2070, %v2062
    %v2631 = vpack.c.b16 %v2079, %v2071
    %v2632 = vpack.c.b16 %v2080, %v2072
    %v2633 = vpack.c.b16 %v2081, %v2073
    %v2634 = vpack.c.b16 %v2082, %v2074
    %v2635 = vpack.c.b16 %v2083, %v2075
    %v2636 = vpack.c.b16 %v2084, %v2076
    %v2637 = vpack.c.b16 %v2085, %v2077
    %v2638 = vpack.c.b16 %v2086, %v2078
    %v2639 = vpack.c.b16 %v2095, %v2087
    %v2640 = vpack.c.b16 %v2096, %v2088
    %v2641 = vpack.c.b16 %v2097, %v2089
    %v2642 = vpack.c.b16 %v2098, %v2090
    %v2643 = vpack.c.b16 %v2099, %v2091
    %v2644 = vpack.c.b16 %v2100, %v2092
    %v2645 = vpack.c.b16 %v2101, %v2093
    %v2646 = vpack.c.b16 %v2102, %v2094
    %v2647 = vpack.c.b16 %v2111, %v2103
    %v2648 = vpack.c.b16 %v2112, %v2104
    %v2649 = vpack.c.b16 %v2113, %v2105
    %v2650 = vpack.c.b16 %v2114, %v2106
    %v2651 = vpack.c.b16 %v2115, %v2107
    %v2652 = vpack.c.b16 %v2116, %v2108
    %v2653 = vpack.c.b16 %v2117, %v2109
    %v2654 = vpack.c.b16 %v2118, %v2110
    %v2655 = vpack.c.b16 %v2127, %v2119
    %v2656 = vpack.c.b16 %v2128, %v2120
    %v2657 = vpack.c.b16 %v2129, %v2121
    %v2658 = vpack.c.b16 %v2130, %v2122
    %v2659 = vpack.c.b16 %v2131, %v2123
    %v2660 = vpack.c.b16 %v2132, %v2124
    %v2661 = vpack.c.b16 %v2133, %v2125
    %v2662 = vpack.c.b16 %v2134, %v2126
    %v2663 = vpack.c.b16 %v2143, %v2135
    %v2664 = vpack.c.b16 %v2144, %v2136
    %v2665 = vpack.c.b16 %v2145, %v2137
    %v2666 = vpack.c.b16 %v2146, %v2138
    %v2667 = vpack.c.b16 %v2147, %v2139
    %v2668 = vpack.c.b16 %v2148, %v2140
    %v2669 = vpack.c.b16 %v2149, %v2141
    %v2670 = vpack.c.b16 %v2150, %v2142
    %v2671 = vpack.c.b16 %v2159, %v2151
    %v2672 = vpack.c.b16 %v2160, %v2152
    %v2673 = vpack.c.b16 %v2161, %v2153
    %v2674 = vpack.c.b16 %v2162, %v2154
    %v2675 = vpack.c.b16 %v2163, %v2155
    %v2676 = vpack.c.b16 %v2164, %v2156
    %v2677 = vpack.c.b16 %v2165, %v2157
    %v2678 = vpack.c.b16 %v2166, %v2158
    %v2679 = vpack.c.b16 %v2175, %v2167
    %v2680 = vpack.c.b16 %v2176, %v2168
    %v2681 = vpack.c.b16 %v2177, %v2169
    %v2682 = vpack.c.b16 %v2178, %v2170
    %v2683 = vpack.c.b16 %v2179, %v2171
    %v2684 = vpack.c.b16 %v2180, %v2172
    %v2685 = vpack.c.b16 %v2181, %v2173
    %v2686 = vpack.c.b16 %v2182, %v2174
    %v2687 = vpack.c.b16 %v2183, %v2183
    %v2688 = vpack.c.b16 %v2184, %v2184
    %v2689 = vpack.c.b16 %v2185, %v2185
    %v2690 = vpack.c.b16 %v2186, %v2186
    %v2691 = vpack.c.b16 %v2187, %v2187
    %v2692 = vpack.c.b16 %v2188, %v2188
    %v2693 = vpack.c.b16 %v2189, %v2189
    %v2694 = vpack.c.b16 %v2190, %v2190
    %vm3191 = vcmask 850944
    %v3193 = vsel %vm3191, %v148, 0
    %vm3195 = vcmask 1043456
    %v3197 = vsel %vm3195, %v2687, 0
    %v3200 = vsel %vm3195, %v2688, 0
    %v3203 = vsel %vm3195, %v2689, 0
    %v3206 = vsel %vm3195, %v2690, 0
    %v3209 = vsel %vm3195, %v2691, 0
    %v3212 = vsel %vm3195, %v2692, 0
    %v3215 = vsel %vm3195, %v2693, 0
    %v3218 = vsel %vm3195, %v2694, 0
    %3220 = vmatprep.subr.bf16.mxu0 %v2192
    %3221 = vmatpush1.bf16.msra.mxu0 %v2191
    %3222 = vmatprep.subr.bf16.mxu0 %v2200
    %3223 = vmatpush1.bf16.msra.mxu0 %v2199
    %3224 = vmatprep.subr.bf16.mxu0 %v2208
    %3225 = vmatpush1.bf16.msra.mxu0 %v2207
    %3226 = vmatprep.subr.bf16.mxu0 %v2216
    %3227 = vmatpush1.bf16.msra.mxu0 %v2215
    %3228 = vmatprep.subr.bf16.mxu0 %v2224
    %3229 = vmatpush1.bf16.msra.mxu0 %v2223
    %3230 = vmatprep.subr.bf16.mxu0 %v2232
    %3231 = vmatpush1.bf16.msra.mxu0 %v2231
    %3232 = vmatprep.subr.bf16.mxu0 %v2240
    %3233 = vmatpush1.bf16.msra.mxu0 %v2239
    %3234 = vmatprep.subr.bf16.mxu0 %v2248
    %3235 = vmatpush1.bf16.msra.mxu0 %v2247
    %3236 = vmatprep.subr.bf16.mxu0 %v2256
    %3237 = vmatpush1.bf16.msra.mxu0 %v2255
    %3238 = vmatprep.subr.bf16.mxu0 %v2264
    %3239 = vmatpush1.bf16.msra.mxu0 %v2263
    %3240 = vmatprep.subr.bf16.mxu0 %v2272
    %3241 = vmatpush1.bf16.msra.mxu0 %v2271
    %3242 = vmatprep.subr.bf16.mxu0 %v2280
    %3243 = vmatpush1.bf16.msra.mxu0 %v2279
    %3244 = vmatprep.subr.bf16.mxu0 %v2288
    %3245 = vmatpush1.bf16.msra.mxu0 %v2287
    %3246 = vmatprep.subr.bf16.mxu0 %v2296
    %3247 = vmatpush1.bf16.msra.mxu0 %v2295
    %3248 = vmatprep.subr.bf16.mxu0 %v2304
    %3249 = vmatpush1.bf16.msra.mxu0 %v2303
    %3250 = vmatprep.subr.bf16.mxu0 %v2312
    %3251 = vmatpush1.bf16.msra.mxu0 %v2311
    %3252 = vmatprep.mubr.bf16.mxu0 %v142
    %3253 = vmatmul.mubr.bf16.gmra.mrb[0].mxu0 %v141
    %v3254 = vpop.f32.mrb[0].mxu0
    %v3255 = vadd.f32 %v654, %v3254
    %v3256 = vpop.f32.mrb[0].mxu0
    %v3257 = vadd.f32 %v658, %v3256
    %v3258 = vpop.f32.mrb[0].mxu0
    %v3259 = vpop.f32.mrb[0].mxu0
    %3260 = vdwg.mxu0
    %3261 = vmatprep.subr.bf16.mxu0 %v2320
    %3262 = vmatpush1.bf16.msra.mxu0 %v2319
    %3263 = vmatprep.subr.bf16.mxu0 %v2328
    %3264 = vmatpush1.bf16.msra.mxu0 %v2327
    %3265 = vmatprep.subr.bf16.mxu0 %v2336
    %3266 = vmatpush1.bf16.msra.mxu0 %v2335
    %3267 = vmatprep.subr.bf16.mxu0 %v2344
    %3268 = vmatpush1.bf16.msra.mxu0 %v2343
    %3269 = vmatprep.subr.bf16.mxu0 %v2352
    %3270 = vmatpush1.bf16.msra.mxu0 %v2351
    %3271 = vmatprep.subr.bf16.mxu0 %v2360
    %3272 = vmatpush1.bf16.msra.mxu0 %v2359
    %3273 = vmatprep.subr.bf16.mxu0 %v2368
    %3274 = vmatpush1.bf16.msra.mxu0 %v2367
    %3275 = vmatprep.subr.bf16.mxu0 %v2376
    %3276 = vmatpush1.bf16.msra.mxu0 %v2375
    %3277 = vmatprep.subr.bf16.mxu0 %v2384
    %3278 = vmatpush1.bf16.msra.mxu0 %v2383
    %3279 = vmatprep.subr.bf16.mxu0 %v2392
    %3280 = vmatpush1.bf16.msra.mxu0 %v2391
    %3281 = vmatprep.subr.bf16.mxu0 %v2400
    %3282 = vmatpush1.bf16.msra.mxu0 %v2399
    %3283 = vmatprep.subr.bf16.mxu0 %v2408
    %3284 = vmatpush1.bf16.msra.mxu0 %v2407
    %3285 = vmatprep.subr.bf16.mxu0 %v2416
    %3286 = vmatpush1.bf16.msra.mxu0 %v2415
    %3287 = vmatprep.subr.bf16.mxu0 %v2424
    %3288 = vmatpush1.bf16.msra.mxu0 %v2423
    %3289 = vmatprep.subr.bf16.mxu0 %v2432
    %3290 = vmatpush1.bf16.msra.mxu0 %v2431
    %3291 = vmatprep.subr.bf16.mxu0 %v2440
    %3292 = vmatpush1.bf16.msra.mxu0 %v2439
    %3293 = vmatprep.mubr.bf16.mxu0 %v144
    %3294 = vmatmul.mubr.bf16.gmra.mrb[0].mxu0 %v143
    %v3295 = vpop.f32.mrb[0].mxu0
    %v3296 = vadd.f32 %v3255, %v3295
    %v3297 = vpop.f32.mrb[0].mxu0
    %v3298 = vadd.f32 %v3257, %v3297
    %v3299 = vpop.f32.mrb[0].mxu0
    %v3300 = vpop.f32.mrb[0].mxu0
    %3301 = vdwg.mxu0
    %3302 = vmatprep.subr.bf16.mxu0 %v2448
    %3303 = vmatpush1.bf16.msra.mxu0 %v2447
    %3304 = vmatprep.subr.bf16.mxu0 %v2456
    %3305 = vmatpush1.bf16.msra.mxu0 %v2455
    %3306 = vmatprep.subr.bf16.mxu0 %v2464
    %3307 = vmatpush1.bf16.msra.mxu0 %v2463
    %3308 = vmatprep.subr.bf16.mxu0 %v2472
    %3309 = vmatpush1.bf16.msra.mxu0 %v2471
    %3310 = vmatprep.subr.bf16.mxu0 %v2480
    %3311 = vmatpush1.bf16.msra.mxu0 %v2479
    %3312 = vmatprep.subr.bf16.mxu0 %v2488
    %3313 = vmatpush1.bf16.msra.mxu0 %v2487
    %3314 = vmatprep.subr.bf16.mxu0 %v2496
    %3315 = vmatpush1.bf16.msra.mxu0 %v2495
    %3316 = vmatprep.subr.bf16.mxu0 %v2504
    %3317 = vmatpush1.bf16.msra.mxu0 %v2503
    %3318 = vmatprep.subr.bf16.mxu0 %v2512
    %3319 = vmatpush1.bf16.msra.mxu0 %v2511
    %3320 = vmatprep.subr.bf16.mxu0 %v2520
    %3321 = vmatpush1.bf16.msra.mxu0 %v2519
    %3322 = vmatprep.subr.bf16.mxu0 %v2528
    %3323 = vmatpush1.bf16.msra.mxu0 %v2527
    %3324 = vmatprep.subr.bf16.mxu0 %v2536
    %3325 = vmatpush1.bf16.msra.mxu0 %v2535
    %3326 = vmatprep.subr.bf16.mxu0 %v2544
    %3327 = vmatpush1.bf16.msra.mxu0 %v2543
    %3328 = vmatprep.subr.bf16.mxu0 %v2552
    %3329 = vmatpush1.bf16.msra.mxu0 %v2551
    %3330 = vmatprep.subr.bf16.mxu0 %v2560
    %3331 = vmatpush1.bf16.msra.mxu0 %v2559
    %3332 = vmatprep.subr.bf16.mxu0 %v2568
    %3333 = vmatpush1.bf16.msra.mxu0 %v2567
    %3334 = vmatprep.mubr.bf16.mxu0 %v146
    %3335 = vmatmul.mubr.bf16.gmra.mrb[0].mxu0 %v145
    %v3336 = vpop.f32.mrb[0].mxu0
    %v3337 = vadd.f32 %v3296, %v3336
    %v3338 = vpop.f32.mrb[0].mxu0
    %v3339 = vadd.f32 %v3298, %v3338
    %v3340 = vpop.f32.mrb[0].mxu0
    %v3341 = vpop.f32.mrb[0].mxu0
    %3342 = vdwg.mxu0
    %3343 = vmatprep.subr.bf16.mxu0 %v2576
    %3344 = vmatpush1.bf16.msra.mxu0 %v2575
    %3345 = vmatprep.subr.bf16.mxu0 %v2584
    %3346 = vmatpush1.bf16.msra.mxu0 %v2583
    %3347 = vmatprep.subr.bf16.mxu0 %v2592
    %3348 = vmatpush1.bf16.msra.mxu0 %v2591
    %3349 = vmatprep.subr.bf16.mxu0 %v2600
    %3350 = vmatpush1.bf16.msra.mxu0 %v2599
    %3351 = vmatprep.subr.bf16.mxu0 %v2608
    %3352 = vmatpush1.bf16.msra.mxu0 %v2607
    %3353 = vmatprep.subr.bf16.mxu0 %v2616
    %3354 = vmatpush1.bf16.msra.mxu0 %v2615
    %3355 = vmatprep.subr.bf16.mxu0 %v2624
    %3356 = vmatpush1.bf16.msra.mxu0 %v2623
    %3357 = vmatprep.subr.bf16.mxu0 %v2632
    %3358 = vmatpush1.bf16.msra.mxu0 %v2631
    %3359 = vmatprep.subr.bf16.mxu0 %v2640
    %3360 = vmatpush1.bf16.msra.mxu0 %v2639
    %3361 = vmatprep.subr.bf16.mxu0 %v2648
    %3362 = vmatpush1.bf16.msra.mxu0 %v2647
    %3363 = vmatprep.subr.bf16.mxu0 %v2656
    %3364 = vmatpush1.bf16.msra.mxu0 %v2655
    %3365 = vmatprep.subr.bf16.mxu0 %v2664
    %3366 = vmatpush1.bf16.msra.mxu0 %v2663
    %3367 = vmatprep.subr.bf16.mxu0 %v2672
    %3368 = vmatpush1.bf16.msra.mxu0 %v2671
    %3369 = vmatprep.subr.bf16.mxu0 %v2680
    %3370 = vmatpush1.bf16.msra.mxu0 %v2679
    %3371 = vmatprep.subr.bf16.mxu0 %v3200
    %3372 = vmatpush1.bf16.msra.mxu0 %v3197
    %3373 = vmatprep.subr.bf16.mxu0 0
    %3374 = vmatpush1.bf16.msra.mxu0 0
    %3375 = vmatprep.mubr.bf16.mxu0 %v3193
    %3376 = vmatmul.mubr.bf16.gmra.mrb[0].mxu0 %v147
    %v3377 = vpop.f32.mrb[0].mxu0
    %v3378 = vadd.f32 %v3337, %v3377
    %v3379 = vpop.f32.mrb[0].mxu0
    %v3380 = vadd.f32 %v3339, %v3379
    %v3381 = vpop.f32.mrb[0].mxu0
    %v3382 = vpop.f32.mrb[0].mxu0
    %3383 = vdwg.mxu0
    %3384 = vmatprep.subr.bf16.mxu0 %v2194
    %3385 = vmatpush1.bf16.msra.mxu0 %v2193
    %3386 = vmatprep.subr.bf16.mxu0 %v2202
    %3387 = vmatpush1.bf16.msra.mxu0 %v2201
    %3388 = vmatprep.subr.bf16.mxu0 %v2210
    %3389 = vmatpush1.bf16.msra.mxu0 %v2209
    %3390 = vmatprep.subr.bf16.mxu0 %v2218
    %3391 = vmatpush1.bf16.msra.mxu0 %v2217
    %3392 = vmatprep.subr.bf16.mxu0 %v2226
    %3393 = vmatpush1.bf16.msra.mxu0 %v2225
    %3394 = vmatprep.subr.bf16.mxu0 %v2234
    %3395 = vmatpush1.bf16.msra.mxu0 %v2233
    %3396 = vmatprep.subr.bf16.mxu0 %v2242
    %3397 = vmatpush1.bf16.msra.mxu0 %v2241
    %3398 = vmatprep.subr.bf16.mxu0 %v2250
    %3399 = vmatpush1.bf16.msra.mxu0 %v2249
    %3400 = vmatprep.subr.bf16.mxu0 %v2258
    %3401 = vmatpush1.bf16.msra.mxu0 %v2257
    %3402 = vmatprep.subr.bf16.mxu0 %v2266
    %3403 = vmatpush1.bf16.msra.mxu0 %v2265
    %3404 = vmatprep.subr.bf16.mxu0 %v2274
    %3405 = vmatpush1.bf16.msra.mxu0 %v2273
    %3406 = vmatprep.subr.bf16.mxu0 %v2282
    %3407 = vmatpush1.bf16.msra.mxu0 %v2281
    %3408 = vmatprep.subr.bf16.mxu0 %v2290
    %3409 = vmatpush1.bf16.msra.mxu0 %v2289
    %3410 = vmatprep.subr.bf16.mxu0 %v2298
    %3411 = vmatpush1.bf16.msra.mxu0 %v2297
    %3412 = vmatprep.subr.bf16.mxu0 %v2306
    %3413 = vmatpush1.bf16.msra.mxu0 %v2305
    %3414 = vmatprep.subr.bf16.mxu0 %v2314
    %3415 = vmatpush1.bf16.msra.mxu0 %v2313
    %3416 = vmatprep.mubr.bf16.mxu0 %v142
    %3417 = vmatmul.mubr.bf16.gmra.mrb[0].mxu0 %v141
    %v3418 = vpop.f32.mrb[0].mxu0
    %v3419 = vadd.f32 %v662, %v3418
    %v3420 = vpop.f32.mrb[0].mxu0
    %v3421 = vadd.f32 %v666, %v3420
    %v3422 = vpop.f32.mrb[0].mxu0
    %v3423 = vpop.f32.mrb[0].mxu0
    %3424 = vdwg.mxu0
    %3425 = vmatprep.subr.bf16.mxu0 %v2322
    %3426 = vmatpush1.bf16.msra.mxu0 %v2321
    %3427 = vmatprep.subr.bf16.mxu0 %v2330
    %3428 = vmatpush1.bf16.msra.mxu0 %v2329
    %3429 = vmatprep.subr.bf16.mxu0 %v2338
    %3430 = vmatpush1.bf16.msra.mxu0 %v2337
    %3431 = vmatprep.subr.bf16.mxu0 %v2346
    %3432 = vmatpush1.bf16.msra.mxu0 %v2345
    %3433 = vmatprep.subr.bf16.mxu0 %v2354
    %3434 = vmatpush1.bf16.msra.mxu0 %v2353
    %3435 = vmatprep.subr.bf16.mxu0 %v2362
    %3436 = vmatpush1.bf16.msra.mxu0 %v2361
    %3437 = vmatprep.subr.bf16.mxu0 %v2370
    %3438 = vmatpush1.bf16.msra.mxu0 %v2369
    %3439 = vmatprep.subr.bf16.mxu0 %v2378
    %3440 = vmatpush1.bf16.msra.mxu0 %v2377
    %3441 = vmatprep.subr.bf16.mxu0 %v2386
    %3442 = vmatpush1.bf16.msra.mxu0 %v2385
    %3443 = vmatprep.subr.bf16.mxu0 %v2394
    %3444 = vmatpush1.bf16.msra.mxu0 %v2393
    %3445 = vmatprep.subr.bf16.mxu0 %v2402
    %3446 = vmatpush1.bf16.msra.mxu0 %v2401
    %3447 = vmatprep.subr.bf16.mxu0 %v2410
    %3448 = vmatpush1.bf16.msra.mxu0 %v2409
    %3449 = vmatprep.subr.bf16.mxu0 %v2418
    %3450 = vmatpush1.bf16.msra.mxu0 %v2417
    %3451 = vmatprep.subr.bf16.mxu0 %v2426
    %3452 = vmatpush1.bf16.msra.mxu0 %v2425
    %3453 = vmatprep.subr.bf16.mxu0 %v2434
    %3454 = vmatpush1.bf16.msra.mxu0 %v2433
    %3455 = vmatprep.subr.bf16.mxu0 %v2442
    %3456 = vmatpush1.bf16.msra.mxu0 %v2441
    %3457 = vmatprep.mubr.bf16.mxu0 %v144
    %3458 = vmatmul.mubr.bf16.gmra.mrb[0].mxu0 %v143
    %v3459 = vpop.f32.mrb[0].mxu0
    %v3460 = vadd.f32 %v3419, %v3459
    %v3461 = vpop.f32.mrb[0].mxu0
    %v3462 = vadd.f32 %v3421, %v3461
    %v3463 = vpop.f32.mrb[0].mxu0
    %v3464 = vpop.f32.mrb[0].mxu0
    %3465 = vdwg.mxu0
    %3466 = vmatprep.subr.bf16.mxu0 %v2450
    %3467 = vmatpush1.bf16.msra.mxu0 %v2449
    %3468 = vmatprep.subr.bf16.mxu0 %v2458
    %3469 = vmatpush1.bf16.msra.mxu0 %v2457
    %3470 = vmatprep.subr.bf16.mxu0 %v2466
    %3471 = vmatpush1.bf16.msra.mxu0 %v2465
    %3472 = vmatprep.subr.bf16.mxu0 %v2474
    %3473 = vmatpush1.bf16.msra.mxu0 %v2473
    %3474 = vmatprep.subr.bf16.mxu0 %v2482
    %3475 = vmatpush1.bf16.msra.mxu0 %v2481
    %3476 = vmatprep.subr.bf16.mxu0 %v2490
    %3477 = vmatpush1.bf16.msra.mxu0 %v2489
    %3478 = vmatprep.subr.bf16.mxu0 %v2498
    %3479 = vmatpush1.bf16.msra.mxu0 %v2497
    %3480 = vmatprep.subr.bf16.mxu0 %v2506
    %3481 = vmatpush1.bf16.msra.mxu0 %v2505
    %3482 = vmatprep.subr.bf16.mxu0 %v2514
    %3483 = vmatpush1.bf16.msra.mxu0 %v2513
    %3484 = vmatprep.subr.bf16.mxu0 %v2522
    %3485 = vmatpush1.bf16.msra.mxu0 %v2521
    %3486 = vmatprep.subr.bf16.mxu0 %v2530
    %3487 = vmatpush1.bf16.msra.mxu0 %v2529
    %3488 = vmatprep.subr.bf16.mxu0 %v2538
    %3489 = vmatpush1.bf16.msra.mxu0 %v2537
    %3490 = vmatprep.subr.bf16.mxu0 %v2546
    %3491 = vmatpush1.bf16.msra.mxu0 %v2545
    %3492 = vmatprep.subr.bf16.mxu0 %v2554
    %3493 = vmatpush1.bf16.msra.mxu0 %v2553
    %3494 = vmatprep.subr.bf16.mxu0 %v2562
    %3495 = vmatpush1.bf16.msra.mxu0 %v2561
    %3496 = vmatprep.subr.bf16.mxu0 %v2570
    %3497 = vmatpush1.bf16.msra.mxu0 %v2569
    %3498 = vmatprep.mubr.bf16.mxu0 %v146
    %3499 = vmatmul.mubr.bf16.gmra.mrb[0].mxu0 %v145
    %v3500 = vpop.f32.mrb[0].mxu0
    %v3501 = vadd.f32 %v3460, %v3500
    %v3502 = vpop.f32.mrb[0].mxu0
    %v3503 = vadd.f32 %v3462, %v3502
    %v3504 = vpop.f32.mrb[0].mxu0
    %v3505 = vpop.f32.mrb[0].mxu0
    %3506 = vdwg.mxu0
    %3507 = vmatprep.subr.bf16.mxu0 %v2578
    %3508 = vmatpush1.bf16.msra.mxu0 %v2577
    %3509 = vmatprep.subr.bf16.mxu0 %v2586
    %3510 = vmatpush1.bf16.msra.mxu0 %v2585
    %3511 = vmatprep.subr.bf16.mxu0 %v2594
    %3512 = vmatpush1.bf16.msra.mxu0 %v2593
    %3513 = vmatprep.subr.bf16.mxu0 %v2602
    %3514 = vmatpush1.bf16.msra.mxu0 %v2601
    %3515 = vmatprep.subr.bf16.mxu0 %v2610
    %3516 = vmatpush1.bf16.msra.mxu0 %v2609
    %3517 = vmatprep.subr.bf16.mxu0 %v2618
    %3518 = vmatpush1.bf16.msra.mxu0 %v2617
    %3519 = vmatprep.subr.bf16.mxu0 %v2626
    %3520 = vmatpush1.bf16.msra.mxu0 %v2625
    %3521 = vmatprep.subr.bf16.mxu0 %v2634
    %3522 = vmatpush1.bf16.msra.mxu0 %v2633
    %3523 = vmatprep.subr.bf16.mxu0 %v2642
    %3524 = vmatpush1.bf16.msra.mxu0 %v2641
    %3525 = vmatprep.subr.bf16.mxu0 %v2650
    %3526 = vmatpush1.bf16.msra.mxu0 %v2649
    %3527 = vmatprep.subr.bf16.mxu0 %v2658
    %3528 = vmatpush1.bf16.msra.mxu0 %v2657
    %3529 = vmatprep.subr.bf16.mxu0 %v2666
    %3530 = vmatpush1.bf16.msra.mxu0 %v2665
    %3531 = vmatprep.subr.bf16.mxu0 %v2674
    %3532 = vmatpush1.bf16.msra.mxu0 %v2673
    %3533 = vmatprep.subr.bf16.mxu0 %v2682
    %3534 = vmatpush1.bf16.msra.mxu0 %v2681
    %3535 = vmatprep.subr.bf16.mxu0 %v3206
    %3536 = vmatpush1.bf16.msra.mxu0 %v3203
    %3537 = vmatprep.subr.bf16.mxu0 0
    %3538 = vmatpush1.bf16.msra.mxu0 0
    %3539 = vmatprep.mubr.bf16.mxu0 %v3193
    %3540 = vmatmul.mubr.bf16.gmra.mrb[0].mxu0 %v147
    %v3541 = vpop.f32.mrb[0].mxu0
    %v3542 = vadd.f32 %v3501, %v3541
    %v3543 = vpop.f32.mrb[0].mxu0
    %v3544 = vadd.f32 %v3503, %v3543
    %v3545 = vpop.f32.mrb[0].mxu0
    %v3546 = vpop.f32.mrb[0].mxu0
    %3547 = vdwg.mxu0
    %3548 = vmatprep.subr.bf16.mxu0 %v2196
    %3549 = vmatpush1.bf16.msra.mxu0 %v2195
    %3550 = vmatprep.subr.bf16.mxu0 %v2204
    %3551 = vmatpush1.bf16.msra.mxu0 %v2203
    %3552 = vmatprep.subr.bf16.mxu0 %v2212
    %3553 = vmatpush1.bf16.msra.mxu0 %v2211
    %3554 = vmatprep.subr.bf16.mxu0 %v2220
    %3555 = vmatpush1.bf16.msra.mxu0 %v2219
    %3556 = vmatprep.subr.bf16.mxu0 %v2228
    %3557 = vmatpush1.bf16.msra.mxu0 %v2227
    %3558 = vmatprep.subr.bf16.mxu0 %v2236
    %3559 = vmatpush1.bf16.msra.mxu0 %v2235
    %3560 = vmatprep.subr.bf16.mxu0 %v2244
    %3561 = vmatpush1.bf16.msra.mxu0 %v2243
    %3562 = vmatprep.subr.bf16.mxu0 %v2252
    %3563 = vmatpush1.bf16.msra.mxu0 %v2251
    %3564 = vmatprep.subr.bf16.mxu0 %v2260
    %3565 = vmatpush1.bf16.msra.mxu0 %v2259
    %3566 = vmatprep.subr.bf16.mxu0 %v2268
    %3567 = vmatpush1.bf16.msra.mxu0 %v2267
    %3568 = vmatprep.subr.bf16.mxu0 %v2276
    %3569 = vmatpush1.bf16.msra.mxu0 %v2275
    %3570 = vmatprep.subr.bf16.mxu0 %v2284
    %3571 = vmatpush1.bf16.msra.mxu0 %v2283
    %3572 = vmatprep.subr.bf16.mxu0 %v2292
    %3573 = vmatpush1.bf16.msra.mxu0 %v2291
    %3574 = vmatprep.subr.bf16.mxu0 %v2300
    %3575 = vmatpush1.bf16.msra.mxu0 %v2299
    %3576 = vmatprep.subr.bf16.mxu0 %v2308
    %3577 = vmatpush1.bf16.msra.mxu0 %v2307
    %3578 = vmatprep.subr.bf16.mxu0 %v2316
    %3579 = vmatpush1.bf16.msra.mxu0 %v2315
    %3580 = vmatprep.mubr.bf16.mxu0 %v142
    %3581 = vmatmul.mubr.bf16.gmra.mrb[0].mxu0 %v141
    %v3582 = vpop.f32.mrb[0].mxu0
    %v3583 = vadd.f32 %v670, %v3582
    %v3584 = vpop.f32.mrb[0].mxu0
    %v3585 = vadd.f32 %v674, %v3584
    %v3586 = vpop.f32.mrb[0].mxu0
    %v3587 = vpop.f32.mrb[0].mxu0
    %3588 = vdwg.mxu0
    %3589 = vmatprep.subr.bf16.mxu0 %v2324
    %3590 = vmatpush1.bf16.msra.mxu0 %v2323
    %3591 = vmatprep.subr.bf16.mxu0 %v2332
    %3592 = vmatpush1.bf16.msra.mxu0 %v2331
    %3593 = vmatprep.subr.bf16.mxu0 %v2340
    %3594 = vmatpush1.bf16.msra.mxu0 %v2339
    %3595 = vmatprep.subr.bf16.mxu0 %v2348
    %3596 = vmatpush1.bf16.msra.mxu0 %v2347
    %3597 = vmatprep.subr.bf16.mxu0 %v2356
    %3598 = vmatpush1.bf16.msra.mxu0 %v2355
    %3599 = vmatprep.subr.bf16.mxu0 %v2364
    %3600 = vmatpush1.bf16.msra.mxu0 %v2363
    %3601 = vmatprep.subr.bf16.mxu0 %v2372
    %3602 = vmatpush1.bf16.msra.mxu0 %v2371
    %3603 = vmatprep.subr.bf16.mxu0 %v2380
    %3604 = vmatpush1.bf16.msra.mxu0 %v2379
    %3605 = vmatprep.subr.bf16.mxu0 %v2388
    %3606 = vmatpush1.bf16.msra.mxu0 %v2387
    %3607 = vmatprep.subr.bf16.mxu0 %v2396
    %3608 = vmatpush1.bf16.msra.mxu0 %v2395
    %3609 = vmatprep.subr.bf16.mxu0 %v2404
    %3610 = vmatpush1.bf16.msra.mxu0 %v2403
    %3611 = vmatprep.subr.bf16.mxu0 %v2412
    %3612 = vmatpush1.bf16.msra.mxu0 %v2411
    %3613 = vmatprep.subr.bf16.mxu0 %v2420
    %3614 = vmatpush1.bf16.msra.mxu0 %v2419
    %3615 = vmatprep.subr.bf16.mxu0 %v2428
    %3616 = vmatpush1.bf16.msra.mxu0 %v2427
    %3617 = vmatprep.subr.bf16.mxu0 %v2436
    %3618 = vmatpush1.bf16.msra.mxu0 %v2435
    %3619 = vmatprep.subr.bf16.mxu0 %v2444
    %3620 = vmatpush1.bf16.msra.mxu0 %v2443
    %3621 = vmatprep.mubr.bf16.mxu0 %v144
    %3622 = vmatmul.mubr.bf16.gmra.mrb[0].mxu0 %v143
    %v3623 = vpop.f32.mrb[0].mxu0
    %v3624 = vadd.f32 %v3583, %v3623
    %v3625 = vpop.f32.mrb[0].mxu0
    %v3626 = vadd.f32 %v3585, %v3625
    %v3627 = vpop.f32.mrb[0].mxu0
    %v3628 = vpop.f32.mrb[0].mxu0
    %3629 = vdwg.mxu0
    %3630 = vmatprep.subr.bf16.mxu0 %v2452
    %3631 = vmatpush1.bf16.msra.mxu0 %v2451
    %3632 = vmatprep.subr.bf16.mxu0 %v2460
    %3633 = vmatpush1.bf16.msra.mxu0 %v2459
    %3634 = vmatprep.subr.bf16.mxu0 %v2468
    %3635 = vmatpush1.bf16.msra.mxu0 %v2467
    %3636 = vmatprep.subr.bf16.mxu0 %v2476
    %3637 = vmatpush1.bf16.msra.mxu0 %v2475
    %3638 = vmatprep.subr.bf16.mxu0 %v2484
    %3639 = vmatpush1.bf16.msra.mxu0 %v2483
    %3640 = vmatprep.subr.bf16.mxu0 %v2492
    %3641 = vmatpush1.bf16.msra.mxu0 %v2491
    %3642 = vmatprep.subr.bf16.mxu0 %v2500
    %3643 = vmatpush1.bf16.msra.mxu0 %v2499
    %3644 = vmatprep.subr.bf16.mxu0 %v2508
    %3645 = vmatpush1.bf16.msra.mxu0 %v2507
    %3646 = vmatprep.subr.bf16.mxu0 %v2516
    %3647 = vmatpush1.bf16.msra.mxu0 %v2515
    %3648 = vmatprep.subr.bf16.mxu0 %v2524
    %3649 = vmatpush1.bf16.msra.mxu0 %v2523
    %3650 = vmatprep.subr.bf16.mxu0 %v2532
    %3651 = vmatpush1.bf16.msra.mxu0 %v2531
    %3652 = vmatprep.subr.bf16.mxu0 %v2540
    %3653 = vmatpush1.bf16.msra.mxu0 %v2539
    %3654 = vmatprep.subr.bf16.mxu0 %v2548
    %3655 = vmatpush1.bf16.msra.mxu0 %v2547
    %3656 = vmatprep.subr.bf16.mxu0 %v2556
    %3657 = vmatpush1.bf16.msra.mxu0 %v2555
    %3658 = vmatprep.subr.bf16.mxu0 %v2564
    %3659 = vmatpush1.bf16.msra.mxu0 %v2563
    %3660 = vmatprep.subr.bf16.mxu0 %v2572
    %3661 = vmatpush1.bf16.msra.mxu0 %v2571
    %3662 = vmatprep.mubr.bf16.mxu0 %v146
    %3663 = vmatmul.mubr.bf16.gmra.mrb[0].mxu0 %v145
    %v3664 = vpop.f32.mrb[0].mxu0
    %v3665 = vadd.f32 %v3624, %v3664
    %v3666 = vpop.f32.mrb[0].mxu0
    %v3667 = vadd.f32 %v3626, %v3666
    %v3668 = vpop.f32.mrb[0].mxu0
    %v3669 = vpop.f32.mrb[0].mxu0
    %3670 = vdwg.mxu0
    %3671 = vmatprep.subr.bf16.mxu0 %v2580
    %3672 = vmatpush1.bf16.msra.mxu0 %v2579
    %3673 = vmatprep.subr.bf16.mxu0 %v2588
    %3674 = vmatpush1.bf16.msra.mxu0 %v2587
    %3675 = vmatprep.subr.bf16.mxu0 %v2596
    %3676 = vmatpush1.bf16.msra.mxu0 %v2595
    %3677 = vmatprep.subr.bf16.mxu0 %v2604
    %3678 = vmatpush1.bf16.msra.mxu0 %v2603
    %3679 = vmatprep.subr.bf16.mxu0 %v2612
    %3680 = vmatpush1.bf16.msra.mxu0 %v2611
    %3681 = vmatprep.subr.bf16.mxu0 %v2620
    %3682 = vmatpush1.bf16.msra.mxu0 %v2619
    %3683 = vmatprep.subr.bf16.mxu0 %v2628
    %3684 = vmatpush1.bf16.msra.mxu0 %v2627
    %3685 = vmatprep.subr.bf16.mxu0 %v2636
    %3686 = vmatpush1.bf16.msra.mxu0 %v2635
    %3687 = vmatprep.subr.bf16.mxu0 %v2644
    %3688 = vmatpush1.bf16.msra.mxu0 %v2643
    %3689 = vmatprep.subr.bf16.mxu0 %v2652
    %3690 = vmatpush1.bf16.msra.mxu0 %v2651
    %3691 = vmatprep.subr.bf16.mxu0 %v2660
    %3692 = vmatpush1.bf16.msra.mxu0 %v2659
    %3693 = vmatprep.subr.bf16.mxu0 %v2668
    %3694 = vmatpush1.bf16.msra.mxu0 %v2667
    %3695 = vmatprep.subr.bf16.mxu0 %v2676
    %3696 = vmatpush1.bf16.msra.mxu0 %v2675
    %3697 = vmatprep.subr.bf16.mxu0 %v2684
    %3698 = vmatpush1.bf16.msra.mxu0 %v2683
    %3699 = vmatprep.subr.bf16.mxu0 %v3212
    %3700 = vmatpush1.bf16.msra.mxu0 %v3209
    %3701 = vmatprep.subr.bf16.mxu0 0
    %3702 = vmatpush1.bf16.msra.mxu0 0
    %3703 = vmatprep.mubr.bf16.mxu0 %v3193
    %3704 = vmatmul.mubr.bf16.gmra.mrb[0].mxu0 %v147
    %v3705 = vpop.f32.mrb[0].mxu0
    %v3706 = vadd.f32 %v3665, %v3705
    %v3707 = vpop.f32.mrb[0].mxu0
    %v3708 = vadd.f32 %v3667, %v3707
    %v3709 = vpop.f32.mrb[0].mxu0
    %v3710 = vpop.f32.mrb[0].mxu0
    %3711 = vdwg.mxu0
    %3712 = vmatprep.subr.bf16.mxu0 %v2198
    %3713 = vmatpush1.bf16.msra.mxu0 %v2197
    %3714 = vmatprep.subr.bf16.mxu0 %v2206
    %3715 = vmatpush1.bf16.msra.mxu0 %v2205
    %3716 = vmatprep.subr.bf16.mxu0 %v2214
    %3717 = vmatpush1.bf16.msra.mxu0 %v2213
    %3718 = vmatprep.subr.bf16.mxu0 %v2222
    %3719 = vmatpush1.bf16.msra.mxu0 %v2221
    %3720 = vmatprep.subr.bf16.mxu0 %v2230
    %3721 = vmatpush1.bf16.msra.mxu0 %v2229
    %3722 = vmatprep.subr.bf16.mxu0 %v2238
    %3723 = vmatpush1.bf16.msra.mxu0 %v2237
    %3724 = vmatprep.subr.bf16.mxu0 %v2246
    %3725 = vmatpush1.bf16.msra.mxu0 %v2245
    %3726 = vmatprep.subr.bf16.mxu0 %v2254
    %3727 = vmatpush1.bf16.msra.mxu0 %v2253
    %3728 = vmatprep.subr.bf16.mxu0 %v2262
    %3729 = vmatpush1.bf16.msra.mxu0 %v2261
    %3730 = vmatprep.subr.bf16.mxu0 %v2270
    %3731 = vmatpush1.bf16.msra.mxu0 %v2269
    %3732 = vmatprep.subr.bf16.mxu0 %v2278
    %3733 = vmatpush1.bf16.msra.mxu0 %v2277
    %3734 = vmatprep.subr.bf16.mxu0 %v2286
    %3735 = vmatpush1.bf16.msra.mxu0 %v2285
    %3736 = vmatprep.subr.bf16.mxu0 %v2294
    %3737 = vmatpush1.bf16.msra.mxu0 %v2293
    %3738 = vmatprep.subr.bf16.mxu0 %v2302
    %3739 = vmatpush1.bf16.msra.mxu0 %v2301
    %3740 = vmatprep.subr.bf16.mxu0 %v2310
    %3741 = vmatpush1.bf16.msra.mxu0 %v2309
    %3742 = vmatprep.subr.bf16.mxu0 %v2318
    %3743 = vmatpush1.bf16.msra.mxu0 %v2317
    %3744 = vmatprep.mubr.bf16.mxu0 %v142
    %3745 = vmatmul.mubr.bf16.gmra.mrb[0].mxu0 %v141
    %v3746 = vpop.f32.mrb[0].mxu0
    %v3747 = vadd.f32 %v678, %v3746
    %v3748 = vpop.f32.mrb[0].mxu0
    %v3749 = vadd.f32 %v682, %v3748
    %v3750 = vpop.f32.mrb[0].mxu0
    %v3751 = vpop.f32.mrb[0].mxu0
    %3752 = vdwg.mxu0
    %3753 = vmatprep.subr.bf16.mxu0 %v2326
    %3754 = vmatpush1.bf16.msra.mxu0 %v2325
    %3755 = vmatprep.subr.bf16.mxu0 %v2334
    %3756 = vmatpush1.bf16.msra.mxu0 %v2333
    %3757 = vmatprep.subr.bf16.mxu0 %v2342
    %3758 = vmatpush1.bf16.msra.mxu0 %v2341
    %3759 = vmatprep.subr.bf16.mxu0 %v2350
    %3760 = vmatpush1.bf16.msra.mxu0 %v2349
    %3761 = vmatprep.subr.bf16.mxu0 %v2358
    %3762 = vmatpush1.bf16.msra.mxu0 %v2357
    %3763 = vmatprep.subr.bf16.mxu0 %v2366
    %3764 = vmatpush1.bf16.msra.mxu0 %v2365
    %3765 = vmatprep.subr.bf16.mxu0 %v2374
    %3766 = vmatpush1.bf16.msra.mxu0 %v2373
    %3767 = vmatprep.subr.bf16.mxu0 %v2382
    %3768 = vmatpush1.bf16.msra.mxu0 %v2381
    %3769 = vmatprep.subr.bf16.mxu0 %v2390
    %3770 = vmatpush1.bf16.msra.mxu0 %v2389
    %3771 = vmatprep.subr.bf16.mxu0 %v2398
    %3772 = vmatpush1.bf16.msra.mxu0 %v2397
    %3773 = vmatprep.subr.bf16.mxu0 %v2406
    %3774 = vmatpush1.bf16.msra.mxu0 %v2405
    %3775 = vmatprep.subr.bf16.mxu0 %v2414
    %3776 = vmatpush1.bf16.msra.mxu0 %v2413
    %3777 = vmatprep.subr.bf16.mxu0 %v2422
    %3778 = vmatpush1.bf16.msra.mxu0 %v2421
    %3779 = vmatprep.subr.bf16.mxu0 %v2430
    %3780 = vmatpush1.bf16.msra.mxu0 %v2429
    %3781 = vmatprep.subr.bf16.mxu0 %v2438
    %3782 = vmatpush1.bf16.msra.mxu0 %v2437
    %3783 = vmatprep.subr.bf16.mxu0 %v2446
    %3784 = vmatpush1.bf16.msra.mxu0 %v2445
    %3785 = vmatprep.mubr.bf16.mxu0 %v144
    %3786 = vmatmul.mubr.bf16.gmra.mrb[0].mxu0 %v143
    %v3787 = vpop.f32.mrb[0].mxu0
    %v3788 = vadd.f32 %v3747, %v3787
    %v3789 = vpop.f32.mrb[0].mxu0
    %v3790 = vadd.f32 %v3749, %v3789
    %v3791 = vpop.f32.mrb[0].mxu0
    %v3792 = vpop.f32.mrb[0].mxu0
    %3793 = vdwg.mxu0
    %3794 = vmatprep.subr.bf16.mxu0 %v2454
    %3795 = vmatpush1.bf16.msra.mxu0 %v2453
    %3796 = vmatprep.subr.bf16.mxu0 %v2462
    %3797 = vmatpush1.bf16.msra.mxu0 %v2461
    %3798 = vmatprep.subr.bf16.mxu0 %v2470
    %3799 = vmatpush1.bf16.msra.mxu0 %v2469
    %3800 = vmatprep.subr.bf16.mxu0 %v2478
    %3801 = vmatpush1.bf16.msra.mxu0 %v2477
    %3802 = vmatprep.subr.bf16.mxu0 %v2486
    %3803 = vmatpush1.bf16.msra.mxu0 %v2485
    %3804 = vmatprep.subr.bf16.mxu0 %v2494
    %3805 = vmatpush1.bf16.msra.mxu0 %v2493
    %3806 = vmatprep.subr.bf16.mxu0 %v2502
    %3807 = vmatpush1.bf16.msra.mxu0 %v2501
    %3808 = vmatprep.subr.bf16.mxu0 %v2510
    %3809 = vmatpush1.bf16.msra.mxu0 %v2509
    %3810 = vmatprep.subr.bf16.mxu0 %v2518
    %3811 = vmatpush1.bf16.msra.mxu0 %v2517
    %3812 = vmatprep.subr.bf16.mxu0 %v2526
    %3813 = vmatpush1.bf16.msra.mxu0 %v2525
    %3814 = vmatprep.subr.bf16.mxu0 %v2534
    %3815 = vmatpush1.bf16.msra.mxu0 %v2533
    %3816 = vmatprep.subr.bf16.mxu0 %v2542
    %3817 = vmatpush1.bf16.msra.mxu0 %v2541
    %3818 = vmatprep.subr.bf16.mxu0 %v2550
    %3819 = vmatpush1.bf16.msra.mxu0 %v2549
    %3820 = vmatprep.subr.bf16.mxu0 %v2558
    %3821 = vmatpush1.bf16.msra.mxu0 %v2557
    %3822 = vmatprep.subr.bf16.mxu0 %v2566
    %3823 = vmatpush1.bf16.msra.mxu0 %v2565
    %3824 = vmatprep.subr.bf16.mxu0 %v2574
    %3825 = vmatpush1.bf16.msra.mxu0 %v2573
    %3826 = vmatprep.mubr.bf16.mxu0 %v146
    %3827 = vmatmul.mubr.bf16.gmra.mrb[0].mxu0 %v145
    %v3828 = vpop.f32.mrb[0].mxu0
    %v3829 = vadd.f32 %v3788, %v3828
    %v3830 = vpop.f32.mrb[0].mxu0
    %v3831 = vadd.f32 %v3790, %v3830
    %v3832 = vpop.f32.mrb[0].mxu0
    %v3833 = vpop.f32.mrb[0].mxu0
    %3834 = vdwg.mxu0
    %3835 = vmatprep.subr.bf16.mxu0 %v2582
    %3836 = vmatpush1.bf16.msra.mxu0 %v2581
    %3837 = vmatprep.subr.bf16.mxu0 %v2590
    %3838 = vmatpush1.bf16.msra.mxu0 %v2589
    %3839 = vmatprep.subr.bf16.mxu0 %v2598
    %3840 = vmatpush1.bf16.msra.mxu0 %v2597
    %3841 = vmatprep.subr.bf16.mxu0 %v2606
    %3842 = vmatpush1.bf16.msra.mxu0 %v2605
    %3843 = vmatprep.subr.bf16.mxu0 %v2614
    %3844 = vmatpush1.bf16.msra.mxu0 %v2613
    %3845 = vmatprep.subr.bf16.mxu0 %v2622
    %3846 = vmatpush1.bf16.msra.mxu0 %v2621
    %3847 = vmatprep.subr.bf16.mxu0 %v2630
    %3848 = vmatpush1.bf16.msra.mxu0 %v2629
    %3849 = vmatprep.subr.bf16.mxu0 %v2638
    %3850 = vmatpush1.bf16.msra.mxu0 %v2637
    %3851 = vmatprep.subr.bf16.mxu0 %v2646
    %3852 = vmatpush1.bf16.msra.mxu0 %v2645
    %3853 = vmatprep.subr.bf16.mxu0 %v2654
    %3854 = vmatpush1.bf16.msra.mxu0 %v2653
    %3855 = vmatprep.subr.bf16.mxu0 %v2662
    %3856 = vmatpush1.bf16.msra.mxu0 %v2661
    %3857 = vmatprep.subr.bf16.mxu0 %v2670
    %3858 = vmatpush1.bf16.msra.mxu0 %v2669
    %3859 = vmatprep.subr.bf16.mxu0 %v2678
    %3860 = vmatpush1.bf16.msra.mxu0 %v2677
    %3861 = vmatprep.subr.bf16.mxu0 %v2686
    %3862 = vmatpush1.bf16.msra.mxu0 %v2685
    %3863 = vmatprep.subr.bf16.mxu0 %v3218
    %3864 = vmatpush1.bf16.msra.mxu0 %v3215
    %3865 = vmatprep.subr.bf16.mxu0 0
    %3866 = vmatpush1.bf16.msra.mxu0 0
    %3867 = vmatprep.mubr.bf16.mxu0 %v3193
    %3868 = vmatmul.mubr.bf16.gmra.mrb[0].mxu0 %v147
    %v3869 = vpop.f32.mrb[0].mxu0
    %v3870 = vadd.f32 %v3829, %v3869
    %v3871 = vpop.f32.mrb[0].mxu0
    %v3872 = vadd.f32 %v3831, %v3871
    %v3873 = vpop.f32.mrb[0].mxu0
    %v3874 = vpop.f32.mrb[0].mxu0
    %3875 = vdwg.mxu0
    %v3876 = vmax.f32 %v3378, 0.0
    %v3877 = vmax.f32 %v3380, 0.0
    %v3878 = vmax.f32 %v3542, 0.0
    %v3879 = vmax.f32 %v3544, 0.0
    %v3880 = vmax.f32 %v3706, 0.0
    %v3881 = vmax.f32 %v3708, 0.0
    %v3882 = vmax.f32 %v3870, 0.0
    %v3883 = vmax.f32 %v3872, 0.0
    %v3884 = vpack.c.bf16 %v3876, %v3876
    %v3885 = vpack.c.bf16 %v3877, %v3877
    %v3886 = vpack.c.bf16 %v3878, %v3878
    %v3887 = vpack.c.bf16 %v3879, %v3879
    %v3888 = vpack.c.bf16 %v3880, %v3880
    %v3889 = vpack.c.bf16 %v3881, %v3881
    %v3890 = vpack.c.bf16 %v3882, %v3882
    %v3891 = vpack.c.bf16 %v3883, %v3883
    %v3892 = vld [vmem:[#allocation8] sm:$0xff]
    %v3893 = vld [vmem:[#allocation8 + $0x8] sm:$0xff]
    %v3894 = vld [vmem:[#allocation8 + $0x10] sm:$0xff]
    %v3895 = vld [vmem:[#allocation8 + $0x18] sm:$0xff]
    %v3896 = vld [vmem:[#allocation8 + $0x20] sm:$0xff]
    %v3897 = vld [vmem:[#allocation8 + $0x28] sm:$0xff]
    %v3898 = vld [vmem:[#allocation8 + $0x30] sm:$0xff]
    %v3899 = vld [vmem:[#allocation8 + $0x38] sm:$0xff]
    %v3900 = vld [vmem:[#allocation8 + $0x40] sm:$0xff]
    %v3901 = vld [vmem:[#allocation8 + $0x48] sm:$0xff]
    %v3902 = vld [vmem:[#allocation8 + $0x50] sm:$0xff]
    %v3903 = vld [vmem:[#allocation8 + $0x58] sm:$0xff]
    %v3904 = vld [vmem:[#allocation8 + $0x60] sm:$0xff]
    %v3905 = vld [vmem:[#allocation8 + $0x68] sm:$0xff]
    %v3906 = vld [vmem:[#allocation8 + $0x70] sm:$0xff]
    %v3907 = vld [vmem:[#allocation8 + $0x78] sm:$0xff]
    %v3908 = vld [vmem:[#allocation8 + $0x80] sm:$0xff]
    %v3909 = vld [vmem:[#allocation8 + $0x88] sm:$0xff]
    %v3910 = vld [vmem:[#allocation8 + $0x90] sm:$0xff]
    %v3911 = vld [vmem:[#allocation8 + $0x98] sm:$0xff]
    %v3912 = vld [vmem:[#allocation8 + $0xa0] sm:$0xff]
    %v3913 = vld [vmem:[#allocation8 + $0xa8] sm:$0xff]
    %v3914 = vld [vmem:[#allocation8 + $0xb0] sm:$0xff]
    %v3915 = vld [vmem:[#allocation8 + $0xb8] sm:$0xff]
    %v3916 = vld [vmem:[#allocation8 + $0xc0] sm:$0xff]
    %v3917 = vld [vmem:[#allocation8 + $0xc8] sm:$0xff]
    %v3918 = vld [vmem:[#allocation8 + $0xd0] sm:$0xff]
    %v3919 = vld [vmem:[#allocation8 + $0xd8] sm:$0xff]
    %v3920 = vld [vmem:[#allocation8 + $0xe0] sm:$0xff]
    %v3921 = vld [vmem:[#allocation8 + $0xe8] sm:$0xff]
    %v3922 = vld [vmem:[#allocation8 + $0xf0] sm:$0xff]
    %v3923 = vld [vmem:[#allocation8 + $0xf8] sm:$0xff]
    %v3924 = vld [vmem:[#allocation8 + $0x100] sm:$0xff]
    %v3925 = vld [vmem:[#allocation8 + $0x108] sm:$0xff]
    %v3926 = vld [vmem:[#allocation8 + $0x110] sm:$0xff]
    %v3927 = vld [vmem:[#allocation8 + $0x118] sm:$0xff]
    %v3928 = vld [vmem:[#allocation8 + $0x120] sm:$0xff]
    %v3929 = vld [vmem:[#allocation8 + $0x128] sm:$0xff]
    %v3930 = vld [vmem:[#allocation8 + $0x130] sm:$0xff]
    %v3931 = vld [vmem:[#allocation8 + $0x138] sm:$0xff]
    %v3932 = vld [vmem:[#allocation8 + $0x140] sm:$0xff]
    %v3933 = vld [vmem:[#allocation8 + $0x148] sm:$0xff]
    %v3934 = vld [vmem:[#allocation8 + $0x150] sm:$0xff]
    %v3935 = vld [vmem:[#allocation8 + $0x158] sm:$0xff]
    %v3936 = vld [vmem:[#allocation8 + $0x160] sm:$0xff]
    %v3937 = vld [vmem:[#allocation8 + $0x168] sm:$0xff]
    %v3938 = vld [vmem:[#allocation8 + $0x170] sm:$0xff]
    %v3939 = vld [vmem:[#allocation8 + $0x178] sm:$0xff]
    %v3940 = vld [vmem:[#allocation8 + $0x180] sm:$0xff]
    %v3941 = vld [vmem:[#allocation8 + $0x188] sm:$0xff]
    %v3942 = vld [vmem:[#allocation8 + $0x190] sm:$0xff]
    %v3943 = vld [vmem:[#allocation8 + $0x198] sm:$0xff]
    %v3944 = vld [vmem:[#allocation8 + $0x1a0] sm:$0xff]
    %v3945 = vld [vmem:[#allocation8 + $0x1a8] sm:$0xff]
    %v3946 = vld [vmem:[#allocation8 + $0x1b0] sm:$0xff]
    %v3947 = vld [vmem:[#allocation8 + $0x1b8] sm:$0xff]
    %v3948 = vld [vmem:[#allocation8 + $0x1c0] sm:$0xff]
    %v3949 = vld [vmem:[#allocation8 + $0x1c8] sm:$0xff]
    %v3950 = vld [vmem:[#allocation8 + $0x1d0] sm:$0xff]
    %v3951 = vld [vmem:[#allocation8 + $0x1d8] sm:$0xff]
    %v3952 = vld [vmem:[#allocation8 + $0x1e0] sm:$0xff]
    %v3953 = vld [vmem:[#allocation8 + $0x1e8] sm:$0xff]
    %v3954 = vld [vmem:[#allocation8 + $0x1f0] sm:$0xff]
    %v3955 = vld [vmem:[#allocation8 + $0x1f8] sm:$0xff]
    %v3956 = vld [vmem:[#allocation8 + $0x200] sm:$0xff]
    %v3957 = vld [vmem:[#allocation8 + $0x208] sm:$0xff]
    %v3958 = vld [vmem:[#allocation8 + $0x210] sm:$0xff]
    %v3959 = vld [vmem:[#allocation8 + $0x218] sm:$0xff]
    %v3960 = vld [vmem:[#allocation8 + $0x220] sm:$0xff]
    %v3961 = vld [vmem:[#allocation8 + $0x228] sm:$0xff]
    %v3962 = vld [vmem:[#allocation8 + $0x230] sm:$0xff]
    %v3963 = vld [vmem:[#allocation8 + $0x238] sm:$0xff]
    %v3964 = vld [vmem:[#allocation8 + $0x240] sm:$0xff]
    %v3965 = vld [vmem:[#allocation8 + $0x248] sm:$0xff]
    %v3966 = vld [vmem:[#allocation8 + $0x250] sm:$0xff]
    %v3967 = vld [vmem:[#allocation8 + $0x258] sm:$0xff]
    %v3968 = vld [vmem:[#allocation8 + $0x260] sm:$0xff]
    %v3969 = vld [vmem:[#allocation8 + $0x268] sm:$0xff]
    %v3970 = vld [vmem:[#allocation8 + $0x270] sm:$0xff]
    %v3971 = vld [vmem:[#allocation8 + $0x278] sm:$0xff]
    %v3972 = vld [vmem:[#allocation8 + $0x280] sm:$0xff]
    %v3973 = vld [vmem:[#allocation8 + $0x288] sm:$0xff]
    %v3974 = vld [vmem:[#allocation8 + $0x290] sm:$0xff]
    %v3975 = vld [vmem:[#allocation8 + $0x298] sm:$0xff]
    %v3976 = vld [vmem:[#allocation8 + $0x2a0] sm:$0xff]
    %v3977 = vld [vmem:[#allocation8 + $0x2a8] sm:$0xff]
    %v3978 = vld [vmem:[#allocation8 + $0x2b0] sm:$0xff]
    %v3979 = vld [vmem:[#allocation8 + $0x2b8] sm:$0xff]
    %v3980 = vld [vmem:[#allocation8 + $0x2c0] sm:$0xff]
    %v3981 = vld [vmem:[#allocation8 + $0x2c8] sm:$0xff]
    %v3982 = vld [vmem:[#allocation8 + $0x2d0] sm:$0xff]
    %v3983 = vld [vmem:[#allocation8 + $0x2d8] sm:$0xff]
    %v3984 = vld [vmem:[#allocation8 + $0x2e0] sm:$0xff]
    %v3985 = vld [vmem:[#allocation8 + $0x2e8] sm:$0xff]
    %v3986 = vld [vmem:[#allocation8 + $0x2f0] sm:$0xff]
    %v3987 = vld [vmem:[#allocation8 + $0x2f8] sm:$0xff]
    %v3988 = vld [vmem:[#allocation8 + $0x300] sm:$0xff]
    %v3989 = vld [vmem:[#allocation8 + $0x308] sm:$0xff]
    %v3990 = vld [vmem:[#allocation8 + $0x310] sm:$0xff]
    %v3991 = vld [vmem:[#allocation8 + $0x318] sm:$0xff]
    %v3992 = vld [vmem:[#allocation8 + $0x320] sm:$0xff]
    %v3993 = vld [vmem:[#allocation8 + $0x328] sm:$0xff]
    %v3994 = vld [vmem:[#allocation8 + $0x330] sm:$0xff]
    %v3995 = vld [vmem:[#allocation8 + $0x338] sm:$0xff]
    %v3996 = vld [vmem:[#allocation8 + $0x340] sm:$0xff]
    %v3997 = vld [vmem:[#allocation8 + $0x348] sm:$0xff]
    %v3998 = vld [vmem:[#allocation8 + $0x350] sm:$0xff]
    %v3999 = vld [vmem:[#allocation8 + $0x358] sm:$0xff]
    %v4000 = vld [vmem:[#allocation8 + $0x360] sm:$0xff]
    %v4001 = vld [vmem:[#allocation8 + $0x368] sm:$0xff]
    %v4002 = vld [vmem:[#allocation8 + $0x370] sm:$0xff]
    %v4003 = vld [vmem:[#allocation8 + $0x378] sm:$0xff]
    %v4004 = vld [vmem:[#allocation8 + $0x380] sm:$0xff]
    %v4005 = vld [vmem:[#allocation8 + $0x388] sm:$0xff]
    %v4006 = vld [vmem:[#allocation8 + $0x390] sm:$0xff]
    %v4007 = vld [vmem:[#allocation8 + $0x398] sm:$0xff]
    %v4008 = vld [vmem:[#allocation8 + $0x3a0] sm:$0xff]
    %v4009 = vld [vmem:[#allocation8 + $0x3a8] sm:$0xff]
    %v4010 = vld [vmem:[#allocation8 + $0x3b0] sm:$0xff]
    %v4011 = vld [vmem:[#allocation8 + $0x3b8] sm:$0xff]
    %v4012 = vld [vmem:[#allocation8 + $0x3c0] sm:$0xff]
    %v4013 = vld [vmem:[#allocation8 + $0x3c8] sm:$0xff]
    %v4014 = vld [vmem:[#allocation8 + $0x3d0] sm:$0xff]
    %v4015 = vld [vmem:[#allocation8 + $0x3d8] sm:$0xff]
    %v4016 = vld [vmem:[#allocation8 + $0x3e0] sm:$0xff]
    %v4017 = vld [vmem:[#allocation8 + $0x3e8] sm:$0xff]
    %v4018 = vld [vmem:[#allocation8 + $0x3f0] sm:$0xff]
    %v4019 = vld [vmem:[#allocation8 + $0x3f8] sm:$0xff]
    %v4020 = vld [vmem:[#allocation10] sm:$0x3]
    %v4022 = vlaneseq
    %v4023 = vshrl.u32 %v4022, 7
    %v4024 = vsub.s32 0, %v4023
    %v4025 = vrot.slane %v4020, %v4024
    %v4026 = vlaneseq
    %v4027 = vshrl.u32 %v4026, 7
    %v4028 = vsub.s32 1, %v4027
    %v4029 = vrot.slane %v4020, %v4028
    %v4160 = vunpack.c.l.b16 %v3892
    %v4161 = vunpack.c.h.b16 %v3892
    %v4162 = vunpack.c.l.b16 %v3893
    %v4163 = vunpack.c.h.b16 %v3893
    %v4164 = vunpack.c.l.b16 %v3894
    %v4165 = vunpack.c.h.b16 %v3894
    %v4166 = vunpack.c.l.b16 %v3895
    %v4167 = vunpack.c.h.b16 %v3895
    %v4168 = vunpack.c.l.b16 %v3896
    %v4169 = vunpack.c.h.b16 %v3896
    %v4170 = vunpack.c.l.b16 %v3897
    %v4171 = vunpack.c.h.b16 %v3897
    %v4172 = vunpack.c.l.b16 %v3898
    %v4173 = vunpack.c.h.b16 %v3898
    %v4174 = vunpack.c.l.b16 %v3899
    %v4175 = vunpack.c.h.b16 %v3899
    %v4176 = vunpack.c.l.b16 %v3900
    %v4177 = vunpack.c.h.b16 %v3900
    %v4178 = vunpack.c.l.b16 %v3901
    %v4179 = vunpack.c.h.b16 %v3901
    %v4180 = vunpack.c.l.b16 %v3902
    %v4181 = vunpack.c.h.b16 %v3902
    %v4182 = vunpack.c.l.b16 %v3903
    %v4183 = vunpack.c.h.b16 %v3903
    %v4184 = vunpack.c.l.b16 %v3904
    %v4185 = vunpack.c.h.b16 %v3904
    %v4186 = vunpack.c.l.b16 %v3905
    %v4187 = vunpack.c.h.b16 %v3905
    %v4188 = vunpack.c.l.b16 %v3906
    %v4189 = vunpack.c.h.b16 %v3906
    %v4190 = vunpack.c.l.b16 %v3907
    %v4191 = vunpack.c.h.b16 %v3907
    %v4192 = vunpack.c.l.b16 %v3908
    %v4193 = vunpack.c.h.b16 %v3908
    %v4194 = vunpack.c.l.b16 %v3909
    %v4195 = vunpack.c.h.b16 %v3909
    %v4196 = vunpack.c.l.b16 %v3910
    %v4197 = vunpack.c.h.b16 %v3910
    %v4198 = vunpack.c.l.b16 %v3911
    %v4199 = vunpack.c.h.b16 %v3911
    %v4200 = vunpack.c.l.b16 %v3912
    %v4201 = vunpack.c.h.b16 %v3912
    %v4202 = vunpack.c.l.b16 %v3913
    %v4203 = vunpack.c.h.b16 %v3913
    %v4204 = vunpack.c.l.b16 %v3914
    %v4205 = vunpack.c.h.b16 %v3914
    %v4206 = vunpack.c.l.b16 %v3915
    %v4207 = vunpack.c.h.b16 %v3915
    %v4208 = vunpack.c.l.b16 %v3916
    %v4209 = vunpack.c.h.b16 %v3916
    %v4210 = vunpack.c.l.b16 %v3917
    %v4211 = vunpack.c.h.b16 %v3917
    %v4212 = vunpack.c.l.b16 %v3918
    %v4213 = vunpack.c.h.b16 %v3918
    %v4214 = vunpack.c.l.b16 %v3919
    %v4215 = vunpack.c.h.b16 %v3919
    %v4216 = vunpack.c.l.b16 %v3920
    %v4217 = vunpack.c.h.b16 %v3920
    %v4218 = vunpack.c.l.b16 %v3921
    %v4219 = vunpack.c.h.b16 %v3921
    %v4220 = vunpack.c.l.b16 %v3922
    %v4221 = vunpack.c.h.b16 %v3922
    %v4222 = vunpack.c.l.b16 %v3923
    %v4223 = vunpack.c.h.b16 %v3923
    %v4224 = vunpack.c.l.b16 %v3924
    %v4225 = vunpack.c.h.b16 %v3924
    %v4226 = vunpack.c.l.b16 %v3925
    %v4227 = vunpack.c.h.b16 %v3925
    %v4228 = vunpack.c.l.b16 %v3926
    %v4229 = vunpack.c.h.b16 %v3926
    %v4230 = vunpack.c.l.b16 %v3927
    %v4231 = vunpack.c.h.b16 %v3927
    %v4232 = vunpack.c.l.b16 %v3928
    %v4233 = vunpack.c.h.b16 %v3928
    %v4234 = vunpack.c.l.b16 %v3929
    %v4235 = vunpack.c.h.b16 %v3929
    %v4236 = vunpack.c.l.b16 %v3930
    %v4237 = vunpack.c.h.b16 %v3930
    %v4238 = vunpack.c.l.b16 %v3931
    %v4239 = vunpack.c.h.b16 %v3931
    %v4240 = vunpack.c.l.b16 %v3932
    %v4241 = vunpack.c.h.b16 %v3932
    %v4242 = vunpack.c.l.b16 %v3933
    %v4243 = vunpack.c.h.b16 %v3933
    %v4244 = vunpack.c.l.b16 %v3934
    %v4245 = vunpack.c.h.b16 %v3934
    %v4246 = vunpack.c.l.b16 %v3935
    %v4247 = vunpack.c.h.b16 %v3935
    %v4248 = vunpack.c.l.b16 %v3936
    %v4249 = vunpack.c.h.b16 %v3936
    %v4250 = vunpack.c.l.b16 %v3937
    %v4251 = vunpack.c.h.b16 %v3937
    %v4252 = vunpack.c.l.b16 %v3938
    %v4253 = vunpack.c.h.b16 %v3938
    %v4254 = vunpack.c.l.b16 %v3939
    %v4255 = vunpack.c.h.b16 %v3939
    %v4256 = vunpack.c.l.b16 %v3940
    %v4257 = vunpack.c.h.b16 %v3940
    %v4258 = vunpack.c.l.b16 %v3941
    %v4259 = vunpack.c.h.b16 %v3941
    %v4260 = vunpack.c.l.b16 %v3942
    %v4261 = vunpack.c.h.b16 %v3942
    %v4262 = vunpack.c.l.b16 %v3943
    %v4263 = vunpack.c.h.b16 %v3943
    %v4264 = vunpack.c.l.b16 %v3944
    %v4265 = vunpack.c.h.b16 %v3944
    %v4266 = vunpack.c.l.b16 %v3945
    %v4267 = vunpack.c.h.b16 %v3945
    %v4268 = vunpack.c.l.b16 %v3946
    %v4269 = vunpack.c.h.b16 %v3946
    %v4270 = vunpack.c.l.b16 %v3947
    %v4271 = vunpack.c.h.b16 %v3947
    %v4272 = vunpack.c.l.b16 %v3948
    %v4273 = vunpack.c.h.b16 %v3948
    %v4274 = vunpack.c.l.b16 %v3949
    %v4275 = vunpack.c.h.b16 %v3949
    %v4276 = vunpack.c.l.b16 %v3950
    %v4277 = vunpack.c.h.b16 %v3950
    %v4278 = vunpack.c.l.b16 %v3951
    %v4279 = vunpack.c.h.b16 %v3951
    %v4280 = vunpack.c.l.b16 %v3952
    %v4281 = vunpack.c.h.b16 %v3952
    %v4282 = vunpack.c.l.b16 %v3953
    %v4283 = vunpack.c.h.b16 %v3953
    %v4284 = vunpack.c.l.b16 %v3954
    %v4285 = vunpack.c.h.b16 %v3954
    %v4286 = vunpack.c.l.b16 %v3955
    %v4287 = vunpack.c.h.b16 %v3955
    %v4288 = vunpack.c.l.b16 %v3956
    %v4289 = vunpack.c.h.b16 %v3956
    %v4290 = vunpack.c.l.b16 %v3957
    %v4291 = vunpack.c.h.b16 %v3957
    %v4292 = vunpack.c.l.b16 %v3958
    %v4293 = vunpack.c.h.b16 %v3958
    %v4294 = vunpack.c.l.b16 %v3959
    %v4295 = vunpack.c.h.b16 %v3959
    %v4296 = vunpack.c.l.b16 %v3960
    %v4297 = vunpack.c.h.b16 %v3960
    %v4298 = vunpack.c.l.b16 %v3961
    %v4299 = vunpack.c.h.b16 %v3961
    %v4300 = vunpack.c.l.b16 %v3962
    %v4301 = vunpack.c.h.b16 %v3962
    %v4302 = vunpack.c.l.b16 %v3963
    %v4303 = vunpack.c.h.b16 %v3963
    %v4304 = vunpack.c.l.b16 %v3964
    %v4305 = vunpack.c.h.b16 %v3964
    %v4306 = vunpack.c.l.b16 %v3965
    %v4307 = vunpack.c.h.b16 %v3965
    %v4308 = vunpack.c.l.b16 %v3966
    %v4309 = vunpack.c.h.b16 %v3966
    %v4310 = vunpack.c.l.b16 %v3967
    %v4311 = vunpack.c.h.b16 %v3967
    %v4312 = vunpack.c.l.b16 %v3968
    %v4313 = vunpack.c.h.b16 %v3968
    %v4314 = vunpack.c.l.b16 %v3969
    %v4315 = vunpack.c.h.b16 %v3969
    %v4316 = vunpack.c.l.b16 %v3970
    %v4317 = vunpack.c.h.b16 %v3970
    %v4318 = vunpack.c.l.b16 %v3971
    %v4319 = vunpack.c.h.b16 %v3971
    %v4320 = vunpack.c.l.b16 %v3972
    %v4321 = vunpack.c.h.b16 %v3972
    %v4322 = vunpack.c.l.b16 %v3973
    %v4323 = vunpack.c.h.b16 %v3973
    %v4324 = vunpack.c.l.b16 %v3974
    %v4325 = vunpack.c.h.b16 %v3974
    %v4326 = vunpack.c.l.b16 %v3975
    %v4327 = vunpack.c.h.b16 %v3975
    %v4328 = vunpack.c.l.b16 %v3976
    %v4329 = vunpack.c.h.b16 %v3976
    %v4330 = vunpack.c.l.b16 %v3977
    %v4331 = vunpack.c.h.b16 %v3977
    %v4332 = vunpack.c.l.b16 %v3978
    %v4333 = vunpack.c.h.b16 %v3978
    %v4334 = vunpack.c.l.b16 %v3979
    %v4335 = vunpack.c.h.b16 %v3979
    %v4336 = vunpack.c.l.b16 %v3980
    %v4337 = vunpack.c.h.b16 %v3980
    %v4338 = vunpack.c.l.b16 %v3981
    %v4339 = vunpack.c.h.b16 %v3981
    %v4340 = vunpack.c.l.b16 %v3982
    %v4341 = vunpack.c.h.b16 %v3982
    %v4342 = vunpack.c.l.b16 %v3983
    %v4343 = vunpack.c.h.b16 %v3983
    %v4344 = vunpack.c.l.b16 %v3984
    %v4345 = vunpack.c.h.b16 %v3984
    %v4346 = vunpack.c.l.b16 %v3985
    %v4347 = vunpack.c.h.b16 %v3985
    %v4348 = vunpack.c.l.b16 %v3986
    %v4349 = vunpack.c.h.b16 %v3986
    %v4350 = vunpack.c.l.b16 %v3987
    %v4351 = vunpack.c.h.b16 %v3987
    %v4352 = vunpack.c.l.b16 %v3988
    %v4353 = vunpack.c.h.b16 %v3988
    %v4354 = vunpack.c.l.b16 %v3989
    %v4355 = vunpack.c.h.b16 %v3989
    %v4356 = vunpack.c.l.b16 %v3990
    %v4357 = vunpack.c.h.b16 %v3990
    %v4358 = vunpack.c.l.b16 %v3991
    %v4359 = vunpack.c.h.b16 %v3991
    %v4360 = vunpack.c.l.b16 %v3992
    %v4361 = vunpack.c.h.b16 %v3992
    %v4362 = vunpack.c.l.b16 %v3993
    %v4363 = vunpack.c.h.b16 %v3993
    %v4364 = vunpack.c.l.b16 %v3994
    %v4365 = vunpack.c.h.b16 %v3994
    %v4366 = vunpack.c.l.b16 %v3995
    %v4367 = vunpack.c.h.b16 %v3995
    %v4368 = vunpack.c.l.b16 %v3996
    %v4369 = vunpack.c.h.b16 %v3996
    %v4370 = vunpack.c.l.b16 %v3997
    %v4371 = vunpack.c.h.b16 %v3997
    %v4372 = vunpack.c.l.b16 %v3998
    %v4373 = vunpack.c.h.b16 %v3998
    %v4374 = vunpack.c.l.b16 %v3999
    %v4375 = vunpack.c.h.b16 %v3999
    %v4376 = vunpack.c.l.b16 %v4000
    %v4377 = vunpack.c.h.b16 %v4000
    %v4378 = vunpack.c.l.b16 %v4001
    %v4379 = vunpack.c.h.b16 %v4001
    %v4380 = vunpack.c.l.b16 %v4002
    %v4381 = vunpack.c.h.b16 %v4002
    %v4382 = vunpack.c.l.b16 %v4003
    %v4383 = vunpack.c.h.b16 %v4003
    %v4384 = vunpack.c.l.b16 %v4004
    %v4385 = vunpack.c.h.b16 %v4004
    %v4386 = vunpack.c.l.b16 %v4005
    %v4387 = vunpack.c.h.b16 %v4005
    %v4388 = vunpack.c.l.b16 %v4006
    %v4389 = vunpack.c.h.b16 %v4006
    %v4390 = vunpack.c.l.b16 %v4007
    %v4391 = vunpack.c.h.b16 %v4007
    %v4392 = vunpack.c.l.b16 %v4008
    %v4393 = vunpack.c.h.b16 %v4008
    %v4394 = vunpack.c.l.b16 %v4009
    %v4395 = vunpack.c.h.b16 %v4009
    %v4396 = vunpack.c.l.b16 %v4010
    %v4397 = vunpack.c.h.b16 %v4010
    %v4398 = vunpack.c.l.b16 %v4011
    %v4399 = vunpack.c.h.b16 %v4011
    %v4400 = vunpack.c.l.b16 %v4012
    %v4401 = vunpack.c.h.b16 %v4012
    %v4402 = vunpack.c.l.b16 %v4013
    %v4403 = vunpack.c.h.b16 %v4013
    %v4404 = vunpack.c.l.b16 %v4014
    %v4405 = vunpack.c.h.b16 %v4014
    %v4406 = vunpack.c.l.b16 %v4015
    %v4407 = vunpack.c.h.b16 %v4015
    %v4408 = vunpack.c.l.b16 %v4016
    %v4409 = vunpack.c.h.b16 %v4016
    %v4410 = vunpack.c.l.b16 %v4017
    %v4411 = vunpack.c.h.b16 %v4017
    %v4412 = vunpack.c.l.b16 %v4018
    %v4413 = vunpack.c.h.b16 %v4018
    %v4414 = vunpack.c.l.b16 %v4019
    %v4415 = vunpack.c.h.b16 %v4019
    %v4416 = vpack.c.b16 %v4162, %v4160
    %v4417 = vpack.c.b16 %v4163, %v4161
    %v4418 = vpack.c.b16 %v4166, %v4164
    %v4419 = vpack.c.b16 %v4167, %v4165
    %v4420 = vpack.c.b16 %v4170, %v4168
    %v4421 = vpack.c.b16 %v4171, %v4169
    %v4422 = vpack.c.b16 %v4174, %v4172
    %v4423 = vpack.c.b16 %v4175, %v4173
    %v4424 = vpack.c.b16 %v4178, %v4176
    %v4425 = vpack.c.b16 %v4179, %v4177
    %v4426 = vpack.c.b16 %v4182, %v4180
    %v4427 = vpack.c.b16 %v4183, %v4181
    %v4428 = vpack.c.b16 %v4186, %v4184
    %v4429 = vpack.c.b16 %v4187, %v4185
    %v4430 = vpack.c.b16 %v4190, %v4188
    %v4431 = vpack.c.b16 %v4191, %v4189
    %v4432 = vpack.c.b16 %v4194, %v4192
    %v4433 = vpack.c.b16 %v4195, %v4193
    %v4434 = vpack.c.b16 %v4198, %v4196
    %v4435 = vpack.c.b16 %v4199, %v4197
    %v4436 = vpack.c.b16 %v4202, %v4200
    %v4437 = vpack.c.b16 %v4203, %v4201
    %v4438 = vpack.c.b16 %v4206, %v4204
    %v4439 = vpack.c.b16 %v4207, %v4205
    %v4440 = vpack.c.b16 %v4210, %v4208
    %v4441 = vpack.c.b16 %v4211, %v4209
    %v4442 = vpack.c.b16 %v4214, %v4212
    %v4443 = vpack.c.b16 %v4215, %v4213
    %v4444 = vpack.c.b16 %v4218, %v4216
    %v4445 = vpack.c.b16 %v4219, %v4217
    %v4446 = vpack.c.b16 %v4222, %v4220
    %v4447 = vpack.c.b16 %v4223, %v4221
    %v4448 = vpack.c.b16 %v4226, %v4224
    %v4449 = vpack.c.b16 %v4227, %v4225
    %v4450 = vpack.c.b16 %v4230, %v4228
    %v4451 = vpack.c.b16 %v4231, %v4229
    %v4452 = vpack.c.b16 %v4234, %v4232
    %v4453 = vpack.c.b16 %v4235, %v4233
    %v4454 = vpack.c.b16 %v4238, %v4236
    %v4455 = vpack.c.b16 %v4239, %v4237
    %v4456 = vpack.c.b16 %v4242, %v4240
    %v4457 = vpack.c.b16 %v4243, %v4241
    %v4458 = vpack.c.b16 %v4246, %v4244
    %v4459 = vpack.c.b16 %v4247, %v4245
    %v4460 = vpack.c.b16 %v4250, %v4248
    %v4461 = vpack.c.b16 %v4251, %v4249
    %v4462 = vpack.c.b16 %v4254, %v4252
    %v4463 = vpack.c.b16 %v4255, %v4253
    %v4464 = vpack.c.b16 %v4258, %v4256
    %v4465 = vpack.c.b16 %v4259, %v4257
    %v4466 = vpack.c.b16 %v4262, %v4260
    %v4467 = vpack.c.b16 %v4263, %v4261
    %v4468 = vpack.c.b16 %v4266, %v4264
    %v4469 = vpack.c.b16 %v4267, %v4265
    %v4470 = vpack.c.b16 %v4270, %v4268
    %v4471 = vpack.c.b16 %v4271, %v4269
    %v4472 = vpack.c.b16 %v4274, %v4272
    %v4473 = vpack.c.b16 %v4275, %v4273
    %v4474 = vpack.c.b16 %v4278, %v4276
    %v4475 = vpack.c.b16 %v4279, %v4277
    %v4476 = vpack.c.b16 %v4282, %v4280
    %v4477 = vpack.c.b16 %v4283, %v4281
    %v4478 = vpack.c.b16 %v4286, %v4284
    %v4479 = vpack.c.b16 %v4287, %v4285
    %v4480 = vpack.c.b16 %v4290, %v4288
    %v4481 = vpack.c.b16 %v4291, %v4289
    %v4482 = vpack.c.b16 %v4294, %v4292
    %v4483 = vpack.c.b16 %v4295, %v4293
    %v4484 = vpack.c.b16 %v4298, %v4296
    %v4485 = vpack.c.b16 %v4299, %v4297
    %v4486 = vpack.c.b16 %v4302, %v4300
    %v4487 = vpack.c.b16 %v4303, %v4301
    %v4488 = vpack.c.b16 %v4306, %v4304
    %v4489 = vpack.c.b16 %v4307, %v4305
    %v4490 = vpack.c.b16 %v4310, %v4308
    %v4491 = vpack.c.b16 %v4311, %v4309
    %v4492 = vpack.c.b16 %v4314, %v4312
    %v4493 = vpack.c.b16 %v4315, %v4313
    %v4494 = vpack.c.b16 %v4318, %v4316
    %v4495 = vpack.c.b16 %v4319, %v4317
    %v4496 = vpack.c.b16 %v4322, %v4320
    %v4497 = vpack.c.b16 %v4323, %v4321
    %v4498 = vpack.c.b16 %v4326, %v4324
    %v4499 = vpack.c.b16 %v4327, %v4325
    %v4500 = vpack.c.b16 %v4330, %v4328
    %v4501 = vpack.c.b16 %v4331, %v4329
    %v4502 = vpack.c.b16 %v4334, %v4332
    %v4503 = vpack.c.b16 %v4335, %v4333
    %v4504 = vpack.c.b16 %v4338, %v4336
    %v4505 = vpack.c.b16 %v4339, %v4337
    %v4506 = vpack.c.b16 %v4342, %v4340
    %v4507 = vpack.c.b16 %v4343, %v4341
    %v4508 = vpack.c.b16 %v4346, %v4344
    %v4509 = vpack.c.b16 %v4347, %v4345
    %v4510 = vpack.c.b16 %v4350, %v4348
    %v4511 = vpack.c.b16 %v4351, %v4349
    %v4512 = vpack.c.b16 %v4354, %v4352
    %v4513 = vpack.c.b16 %v4355, %v4353
    %v4514 = vpack.c.b16 %v4358, %v4356
    %v4515 = vpack.c.b16 %v4359, %v4357
    %v4516 = vpack.c.b16 %v4362, %v4360
    %v4517 = vpack.c.b16 %v4363, %v4361
    %v4518 = vpack.c.b16 %v4366, %v4364
    %v4519 = vpack.c.b16 %v4367, %v4365
    %v4520 = vpack.c.b16 %v4370, %v4368
    %v4521 = vpack.c.b16 %v4371, %v4369
    %v4522 = vpack.c.b16 %v4374, %v4372
    %v4523 = vpack.c.b16 %v4375, %v4373
    %v4524 = vpack.c.b16 %v4378, %v4376
    %v4525 = vpack.c.b16 %v4379, %v4377
    %v4526 = vpack.c.b16 %v4382, %v4380
    %v4527 = vpack.c.b16 %v4383, %v4381
    %v4528 = vpack.c.b16 %v4386, %v4384
    %v4529 = vpack.c.b16 %v4387, %v4385
    %v4530 = vpack.c.b16 %v4390, %v4388
    %v4531 = vpack.c.b16 %v4391, %v4389
    %v4532 = vpack.c.b16 %v4394, %v4392
    %v4533 = vpack.c.b16 %v4395, %v4393
    %v4534 = vpack.c.b16 %v4398, %v4396
    %v4535 = vpack.c.b16 %v4399, %v4397
    %v4536 = vpack.c.b16 %v4402, %v4400
    %v4537 = vpack.c.b16 %v4403, %v4401
    %v4538 = vpack.c.b16 %v4406, %v4404
    %v4539 = vpack.c.b16 %v4407, %v4405
    %v4540 = vpack.c.b16 %v4410, %v4408
    %v4541 = vpack.c.b16 %v4411, %v4409
    %v4542 = vpack.c.b16 %v4414, %v4412
    %v4543 = vpack.c.b16 %v4415, %v4413
    %4672 = vmatprep.subr.bf16.mxu0 %v4417
    %4673 = vmatpush1.bf16.msra.mxu0 %v4416
    %4674 = vmatprep.subr.bf16.mxu0 %v4419
    %4675 = vmatpush1.bf16.msra.mxu0 %v4418
    %4676 = vmatprep.subr.bf16.mxu0 %v4421
    %4677 = vmatpush1.bf16.msra.mxu0 %v4420
    %4678 = vmatprep.subr.bf16.mxu0 %v4423
    %4679 = vmatpush1.bf16.msra.mxu0 %v4422
    %4680 = vmatprep.subr.bf16.mxu0 %v4425
    %4681 = vmatpush1.bf16.msra.mxu0 %v4424
    %4682 = vmatprep.subr.bf16.mxu0 %v4427
    %4683 = vmatpush1.bf16.msra.mxu0 %v4426
    %4684 = vmatprep.subr.bf16.mxu0 %v4429
    %4685 = vmatpush1.bf16.msra.mxu0 %v4428
    %4686 = vmatprep.subr.bf16.mxu0 %v4431
    %4687 = vmatpush1.bf16.msra.mxu0 %v4430
    %4688 = vmatprep.subr.bf16.mxu0 %v4433
    %4689 = vmatpush1.bf16.msra.mxu0 %v4432
    %4690 = vmatprep.subr.bf16.mxu0 %v4435
    %4691 = vmatpush1.bf16.msra.mxu0 %v4434
    %4692 = vmatprep.subr.bf16.mxu0 %v4437
    %4693 = vmatpush1.bf16.msra.mxu0 %v4436
    %4694 = vmatprep.subr.bf16.mxu0 %v4439
    %4695 = vmatpush1.bf16.msra.mxu0 %v4438
    %4696 = vmatprep.subr.bf16.mxu0 %v4441
    %4697 = vmatpush1.bf16.msra.mxu0 %v4440
    %4698 = vmatprep.subr.bf16.mxu0 %v4443
    %4699 = vmatpush1.bf16.msra.mxu0 %v4442
    %4700 = vmatprep.subr.bf16.mxu0 %v4445
    %4701 = vmatpush1.bf16.msra.mxu0 %v4444
    %4702 = vmatprep.subr.bf16.mxu0 %v4447
    %4703 = vmatpush1.bf16.msra.mxu0 %v4446
    %4704 = vmatprep.mubr.bf16.mxu0 %v3885
    %4705 = vmatmul.mubr.bf16.gmra.mrb[0].mxu0 %v3884
    %v4706 = vpop.f32.mrb[0].mxu0
    %v4707 = vadd.f32 %v4025, %v4706
    %v4708 = vpop.f32.mrb[0].mxu0
    %v4709 = vadd.f32 %v4029, %v4708
    %v4710 = vpop.f32.mrb[0].mxu0
    %v4711 = vpop.f32.mrb[0].mxu0
    %4712 = vdwg.mxu0
    %4713 = vmatprep.subr.bf16.mxu0 %v4449
    %4714 = vmatpush1.bf16.msra.mxu0 %v4448
    %4715 = vmatprep.subr.bf16.mxu0 %v4451
    %4716 = vmatpush1.bf16.msra.mxu0 %v4450
    %4717 = vmatprep.subr.bf16.mxu0 %v4453
    %4718 = vmatpush1.bf16.msra.mxu0 %v4452
    %4719 = vmatprep.subr.bf16.mxu0 %v4455
    %4720 = vmatpush1.bf16.msra.mxu0 %v4454
    %4721 = vmatprep.subr.bf16.mxu0 %v4457
    %4722 = vmatpush1.bf16.msra.mxu0 %v4456
    %4723 = vmatprep.subr.bf16.mxu0 %v4459
    %4724 = vmatpush1.bf16.msra.mxu0 %v4458
    %4725 = vmatprep.subr.bf16.mxu0 %v4461
    %4726 = vmatpush1.bf16.msra.mxu0 %v4460
    %4727 = vmatprep.subr.bf16.mxu0 %v4463
    %4728 = vmatpush1.bf16.msra.mxu0 %v4462
    %4729 = vmatprep.subr.bf16.mxu0 %v4465
    %4730 = vmatpush1.bf16.msra.mxu0 %v4464
    %4731 = vmatprep.subr.bf16.mxu0 %v4467
    %4732 = vmatpush1.bf16.msra.mxu0 %v4466
    %4733 = vmatprep.subr.bf16.mxu0 %v4469
    %4734 = vmatpush1.bf16.msra.mxu0 %v4468
    %4735 = vmatprep.subr.bf16.mxu0 %v4471
    %4736 = vmatpush1.bf16.msra.mxu0 %v4470
    %4737 = vmatprep.subr.bf16.mxu0 %v4473
    %4738 = vmatpush1.bf16.msra.mxu0 %v4472
    %4739 = vmatprep.subr.bf16.mxu0 %v4475
    %4740 = vmatpush1.bf16.msra.mxu0 %v4474
    %4741 = vmatprep.subr.bf16.mxu0 %v4477
    %4742 = vmatpush1.bf16.msra.mxu0 %v4476
    %4743 = vmatprep.subr.bf16.mxu0 %v4479
    %4744 = vmatpush1.bf16.msra.mxu0 %v4478
    %4745 = vmatprep.mubr.bf16.mxu0 %v3887
    %4746 = vmatmul.mubr.bf16.gmra.mrb[0].mxu0 %v3886
    %v4747 = vpop.f32.mrb[0].mxu0
    %v4748 = vadd.f32 %v4707, %v4747
    %v4749 = vpop.f32.mrb[0].mxu0
    %v4750 = vadd.f32 %v4709, %v4749
    %v4751 = vpop.f32.mrb[0].mxu0
    %v4752 = vpop.f32.mrb[0].mxu0
    %4753 = vdwg.mxu0
    %4754 = vmatprep.subr.bf16.mxu0 %v4481
    %4755 = vmatpush1.bf16.msra.mxu0 %v4480
    %4756 = vmatprep.subr.bf16.mxu0 %v4483
    %4757 = vmatpush1.bf16.msra.mxu0 %v4482
    %4758 = vmatprep.subr.bf16.mxu0 %v4485
    %4759 = vmatpush1.bf16.msra.mxu0 %v4484
    %4760 = vmatprep.subr.bf16.mxu0 %v4487
    %4761 = vmatpush1.bf16.msra.mxu0 %v4486
    %4762 = vmatprep.subr.bf16.mxu0 %v4489
    %4763 = vmatpush1.bf16.msra.mxu0 %v4488
    %4764 = vmatprep.subr.bf16.mxu0 %v4491
    %4765 = vmatpush1.bf16.msra.mxu0 %v4490
    %4766 = vmatprep.subr.bf16.mxu0 %v4493
    %4767 = vmatpush1.bf16.msra.mxu0 %v4492
    %4768 = vmatprep.subr.bf16.mxu0 %v4495
    %4769 = vmatpush1.bf16.msra.mxu0 %v4494
    %4770 = vmatprep.subr.bf16.mxu0 %v4497
    %4771 = vmatpush1.bf16.msra.mxu0 %v4496
    %4772 = vmatprep.subr.bf16.mxu0 %v4499
    %4773 = vmatpush1.bf16.msra.mxu0 %v4498
    %4774 = vmatprep.subr.bf16.mxu0 %v4501
    %4775 = vmatpush1.bf16.msra.mxu0 %v4500
    %4776 = vmatprep.subr.bf16.mxu0 %v4503
    %4777 = vmatpush1.bf16.msra.mxu0 %v4502
    %4778 = vmatprep.subr.bf16.mxu0 %v4505
    %4779 = vmatpush1.bf16.msra.mxu0 %v4504
    %4780 = vmatprep.subr.bf16.mxu0 %v4507
    %4781 = vmatpush1.bf16.msra.mxu0 %v4506
    %4782 = vmatprep.subr.bf16.mxu0 %v4509
    %4783 = vmatpush1.bf16.msra.mxu0 %v4508
    %4784 = vmatprep.subr.bf16.mxu0 %v4511
    %4785 = vmatpush1.bf16.msra.mxu0 %v4510
    %4786 = vmatprep.mubr.bf16.mxu0 %v3889
    %4787 = vmatmul.mubr.bf16.gmra.mrb[0].mxu0 %v3888
    %v4788 = vpop.f32.mrb[0].mxu0
    %v4789 = vadd.f32 %v4748, %v4788
    %v4790 = vpop.f32.mrb[0].mxu0
    %v4791 = vadd.f32 %v4750, %v4790
    %v4792 = vpop.f32.mrb[0].mxu0
    %v4793 = vpop.f32.mrb[0].mxu0
    %4794 = vdwg.mxu0
    %4795 = vmatprep.subr.bf16.mxu0 %v4513
    %4796 = vmatpush1.bf16.msra.mxu0 %v4512
    %4797 = vmatprep.subr.bf16.mxu0 %v4515
    %4798 = vmatpush1.bf16.msra.mxu0 %v4514
    %4799 = vmatprep.subr.bf16.mxu0 %v4517
    %4800 = vmatpush1.bf16.msra.mxu0 %v4516
    %4801 = vmatprep.subr.bf16.mxu0 %v4519
    %4802 = vmatpush1.bf16.msra.mxu0 %v4518
    %4803 = vmatprep.subr.bf16.mxu0 %v4521
    %4804 = vmatpush1.bf16.msra.mxu0 %v4520
    %4805 = vmatprep.subr.bf16.mxu0 %v4523
    %4806 = vmatpush1.bf16.msra.mxu0 %v4522
    %4807 = vmatprep.subr.bf16.mxu0 %v4525
    %4808 = vmatpush1.bf16.msra.mxu0 %v4524
    %4809 = vmatprep.subr.bf16.mxu0 %v4527
    %4810 = vmatpush1.bf16.msra.mxu0 %v4526
    %4811 = vmatprep.subr.bf16.mxu0 %v4529
    %4812 = vmatpush1.bf16.msra.mxu0 %v4528
    %4813 = vmatprep.subr.bf16.mxu0 %v4531
    %4814 = vmatpush1.bf16.msra.mxu0 %v4530
    %4815 = vmatprep.subr.bf16.mxu0 %v4533
    %4816 = vmatpush1.bf16.msra.mxu0 %v4532
    %4817 = vmatprep.subr.bf16.mxu0 %v4535
    %4818 = vmatpush1.bf16.msra.mxu0 %v4534
    %4819 = vmatprep.subr.bf16.mxu0 %v4537
    %4820 = vmatpush1.bf16.msra.mxu0 %v4536
    %4821 = vmatprep.subr.bf16.mxu0 %v4539
    %4822 = vmatpush1.bf16.msra.mxu0 %v4538
    %4823 = vmatprep.subr.bf16.mxu0 %v4541
    %4824 = vmatpush1.bf16.msra.mxu0 %v4540
    %4825 = vmatprep.subr.bf16.mxu0 %v4543
    %4826 = vmatpush1.bf16.msra.mxu0 %v4542
    %4827 = vmatprep.mubr.bf16.mxu0 %v3891
    %4828 = vmatmul.mubr.bf16.gmra.mrb[0].mxu0 %v3890
    %v4829 = vpop.f32.mrb[0].mxu0
    %v4830 = vadd.f32 %v4789, %v4829
    %v4831 = vpop.f32.mrb[0].mxu0
    %v4832 = vadd.f32 %v4791, %v4831
    %v4833 = vpop.f32.mrb[0].mxu0
    %v4834 = vpop.f32.mrb[0].mxu0
    %4835 = vdwg.mxu0
    %v4836 = vmax.f32 %v4830, 0.0
    %v4837 = vmax.f32 %v4832, 0.0
    %v4838 = vld [vmem:[%s5] sm:$0xff]
    %v4839 = vld [vmem:[%s5 + $0x8] sm:$0xff]
    %v4840 = vld [vmem:[%s5 + $0x10] sm:$0xff]
    %v4841 = vld [vmem:[%s5 + $0x18] sm:$0xff]
    %v4842 = vld [vmem:[%s5 + $0x20] sm:$0xff]
    %v4843 = vld [vmem:[%s5 + $0x28] sm:$0xff]
    %v4844 = vld [vmem:[%s5 + $0x30] sm:$0xff]
    %v4845 = vld [vmem:[%s5 + $0x38] sm:$0xff]
    %v4846 = vld [vmem:[%s5 + $0x40] sm:$0xff]
    %v4847 = vld [vmem:[%s5 + $0x48] sm:$0xff]
    %v4848 = vld [vmem:[%s5 + $0x50] sm:$0xff]
    %v4849 = vld [vmem:[%s5 + $0x58] sm:$0xff]
    %v4850 = vld [vmem:[%s5 + $0x60] sm:$0xff]
    %v4851 = vld [vmem:[%s5 + $0x68] sm:$0xff]
    %v4852 = vld [vmem:[%s5 + $0x70] sm:$0xff]
    %v4853 = vld [vmem:[%s5 + $0x78] sm:$0xff]
    %v4854 = vld [vmem:[%s5 + $0x80] sm:$0xff]
    %v4855 = vld [vmem:[%s5 + $0x88] sm:$0xff]
    %v4856 = vld [vmem:[%s5 + $0x90] sm:$0xff]
    %v4857 = vld [vmem:[%s5 + $0x98] sm:$0xff]
    %v4858 = vld [vmem:[%s5 + $0xa0] sm:$0xff]
    %v4859 = vld [vmem:[%s5 + $0xa8] sm:$0xff]
    %v4860 = vld [vmem:[%s5 + $0xb0] sm:$0xff]
    %v4861 = vld [vmem:[%s5 + $0xb8] sm:$0xff]
    %v4862 = vld [vmem:[%s5 + $0xc0] sm:$0xff]
    %v4863 = vld [vmem:[%s5 + $0xc8] sm:$0xff]
    %v4864 = vld [vmem:[%s5 + $0xd0] sm:$0xff]
    %v4865 = vld [vmem:[%s5 + $0xd8] sm:$0xff]
    %v4866 = vld [vmem:[%s5 + $0xe0] sm:$0xff]
    %v4867 = vld [vmem:[%s5 + $0xe8] sm:$0xff]
    %v4868 = vld [vmem:[%s5 + $0xf0] sm:$0xff]
    %v4869 = vld [vmem:[%s5 + $0xf8] sm:$0xff]
    %v4870 = vld [vmem:[#allocation11] sm:$0x1]
    %v4872 = vlaneseq
    %v4873 = vshrl.u32 %v4872, 7
    %v4874 = vsub.s32 0, %v4873
    %v4875 = vrot.slane %v4870, %v4874
    %4877 = vmatprep.subr.mxu0 0.0
    %4878 = vmatpush1.msra.mxu0 %v4838
    %4879 = vmatprep.subr.mxu0 0.0
    %4880 = vmatpush1.msra.mxu0 %v4839
    %4881 = vmatprep.subr.mxu0 0.0
    %4882 = vmatpush1.msra.mxu0 %v4840
    %4883 = vmatprep.subr.mxu0 0.0
    %4884 = vmatpush1.msra.mxu0 %v4841
    %4885 = vmatprep.subr.mxu0 0.0
    %4886 = vmatpush1.msra.mxu0 %v4842
    %4887 = vmatprep.subr.mxu0 0.0
    %4888 = vmatpush1.msra.mxu0 %v4843
    %4889 = vmatprep.subr.mxu0 0.0
    %4890 = vmatpush1.msra.mxu0 %v4844
    %4891 = vmatprep.subr.mxu0 0.0
    %4892 = vmatpush1.msra.mxu0 %v4845
    %4893 = vmatprep.subr.mxu0 0.0
    %4894 = vmatpush1.msra.mxu0 %v4846
    %4895 = vmatprep.subr.mxu0 0.0
    %4896 = vmatpush1.msra.mxu0 %v4847
    %4897 = vmatprep.subr.mxu0 0.0
    %4898 = vmatpush1.msra.mxu0 %v4848
    %4899 = vmatprep.subr.mxu0 0.0
    %4900 = vmatpush1.msra.mxu0 %v4849
    %4901 = vmatprep.subr.mxu0 0.0
    %4902 = vmatpush1.msra.mxu0 %v4850
    %4903 = vmatprep.subr.mxu0 0.0
    %4904 = vmatpush1.msra.mxu0 %v4851
    %4905 = vmatprep.subr.mxu0 0.0
    %4906 = vmatpush1.msra.mxu0 %v4852
    %4907 = vmatprep.subr.mxu0 0.0
    %4908 = vmatpush1.msra.mxu0 %v4853
    %4909 = vmatprep.subr.mxu0 0.0
    %4910 = vmatpush1.msra.mxu0 %v4854
    %4911 = vmatprep.subr.mxu0 0.0
    %4912 = vmatpush1.msra.mxu0 %v4855
    %4913 = vmatprep.subr.mxu0 0.0
    %4914 = vmatpush1.msra.mxu0 %v4856
    %4915 = vmatprep.subr.mxu0 0.0
    %4916 = vmatpush1.msra.mxu0 %v4857
    %4917 = vmatprep.subr.mxu0 0.0
    %4918 = vmatpush1.msra.mxu0 %v4858
    %4919 = vmatprep.subr.mxu0 0.0
    %4920 = vmatpush1.msra.mxu0 %v4859
    %4921 = vmatprep.subr.mxu0 0.0
    %4922 = vmatpush1.msra.mxu0 %v4860
    %4923 = vmatprep.subr.mxu0 0.0
    %4924 = vmatpush1.msra.mxu0 %v4861
    %4925 = vmatprep.subr.mxu0 0.0
    %4926 = vmatpush1.msra.mxu0 %v4862
    %4927 = vmatprep.subr.mxu0 0.0
    %4928 = vmatpush1.msra.mxu0 %v4863
    %4929 = vmatprep.subr.mxu0 0.0
    %4930 = vmatpush1.msra.mxu0 %v4864
    %4931 = vmatprep.subr.mxu0 0.0
    %4932 = vmatpush1.msra.mxu0 %v4865
    %4933 = vmatprep.subr.mxu0 0.0
    %4934 = vmatpush1.msra.mxu0 %v4866
    %4935 = vmatprep.subr.mxu0 0.0
    %4936 = vmatpush1.msra.mxu0 %v4867
    %4937 = vmatprep.subr.mxu0 0.0
    %4938 = vmatpush1.msra.mxu0 %v4868
    %4939 = vmatprep.subr.mxu0 0.0
    %4940 = vmatpush1.msra.mxu0 %v4869
    %4941 = vmatprep.mubr.f32.mxu0 %v4837
    %4942 = vmatmul.mubr.f32.gmra.mrb[0].mxu0 %v4836
    %v4943 = vpop.f32.mrb[0].mxu0
    %v4944 = vadd.f32 %v4875, %v4943
    %v4945 = vpop.f32.mrb[0].mxu0
    %4946 = vdwg.mxu0
    %v4947 = vmax.f32 %v4944, 0.0
    %v4948 = vld [vmem:[#allocation13] sm:$0xff]
    %v4949 = vld [vmem:[#allocation13 + $0x8] sm:$0xff]
    %v4950 = vld [vmem:[#allocation13 + $0x10] sm:$0xff]
    %v4951 = vld [vmem:[#allocation13 + $0x18] sm:$0xff]
    %v4952 = vld [vmem:[#allocation13 + $0x20] sm:$0xff]
    %v4953 = vld [vmem:[#allocation13 + $0x28] sm:$0xff]
    %v4954 = vld [vmem:[#allocation13 + $0x30] sm:$0xff]
    %v4955 = vld [vmem:[#allocation13 + $0x38] sm:$0xff]
    %v4956 = vld [vmem:[#allocation14] sm:$0x1]
    %v4958 = vlaneseq
    %v4959 = vshrl.u32 %v4958, 7
    %v4960 = vsub.s32 0, %v4959
    %v4961 = vrot.slane %v4956, %v4960
    %vm4963 = vcmask 523264
    %v4965 = vsel %vm4963, %v4947, 0
    %4967 = vmatprep.subr.mxu0 0.0
    %4968 = vmatpush1.msra.mxu0 %v4948
    %4969 = vmatprep.subr.mxu0 0.0
    %4970 = vmatpush1.msra.mxu0 %v4949
    %4971 = vmatprep.subr.mxu0 0.0
    %4972 = vmatpush1.msra.mxu0 %v4950
    %4973 = vmatprep.subr.mxu0 0.0
    %4974 = vmatpush1.msra.mxu0 %v4951
    %4975 = vmatprep.subr.mxu0 0.0
    %4976 = vmatpush1.msra.mxu0 %v4952
    %4977 = vmatprep.subr.mxu0 0.0
    %4978 = vmatpush1.msra.mxu0 %v4953
    %4979 = vmatprep.subr.mxu0 0.0
    %4980 = vmatpush1.msra.mxu0 %v4954
    %4981 = vmatprep.subr.mxu0 0.0
    %4982 = vmatpush1.msra.mxu0 %v4955
    %4983 = vmatprep.subr.mxu0 0.0
    %4984 = vmatpush1.msra.mxu0 0.0
    %4985 = vmatprep.subr.mxu0 0.0
    %4986 = vmatpush1.msra.mxu0 0.0
    %4987 = vmatprep.subr.mxu0 0.0
    %4988 = vmatpush1.msra.mxu0 0.0
    %4989 = vmatprep.subr.mxu0 0.0
    %4990 = vmatpush1.msra.mxu0 0.0
    %4991 = vmatprep.subr.mxu0 0.0
    %4992 = vmatpush1.msra.mxu0 0.0
    %4993 = vmatprep.subr.mxu0 0.0
    %4994 = vmatpush1.msra.mxu0 0.0
    %4995 = vmatprep.subr.mxu0 0.0
    %4996 = vmatpush1.msra.mxu0 0.0
    %4997 = vmatprep.subr.mxu0 0.0
    %4998 = vmatpush1.msra.mxu0 0.0
    %4999 = vmatprep.subr.mxu0 0.0
    %5000 = vmatpush1.msra.mxu0 0.0
    %5001 = vmatprep.subr.mxu0 0.0
    %5002 = vmatpush1.msra.mxu0 0.0
    %5003 = vmatprep.subr.mxu0 0.0
    %5004 = vmatpush1.msra.mxu0 0.0
    %5005 = vmatprep.subr.mxu0 0.0
    %5006 = vmatpush1.msra.mxu0 0.0
    %5007 = vmatprep.subr.mxu0 0.0
    %5008 = vmatpush1.msra.mxu0 0.0
    %5009 = vmatprep.subr.mxu0 0.0
    %5010 = vmatpush1.msra.mxu0 0.0
    %5011 = vmatprep.subr.mxu0 0.0
    %5012 = vmatpush1.msra.mxu0 0.0
    %5013 = vmatprep.subr.mxu0 0.0
    %5014 = vmatpush1.msra.mxu0 0.0
    %5015 = vmatprep.subr.mxu0 0.0
    %5016 = vmatpush1.msra.mxu0 0.0
    %5017 = vmatprep.subr.mxu0 0.0
    %5018 = vmatpush1.msra.mxu0 0.0
    %5019 = vmatprep.subr.mxu0 0.0
    %5020 = vmatpush1.msra.mxu0 0.0
    %5021 = vmatprep.subr.mxu0 0.0
    %5022 = vmatpush1.msra.mxu0 0.0
    %5023 = vmatprep.subr.mxu0 0.0
    %5024 = vmatpush1.msra.mxu0 0.0
    %5025 = vmatprep.subr.mxu0 0.0
    %5026 = vmatpush1.msra.mxu0 0.0
    %5027 = vmatprep.subr.mxu0 0.0
    %5028 = vmatpush1.msra.mxu0 0.0
    %5029 = vmatprep.subr.mxu0 0.0
    %5030 = vmatpush1.msra.mxu0 0.0
    %5031 = vmatprep.mubr.f32.mxu0 0.0
    %5032 = vmatmul.mubr.f32.gmra.mrb[0].mxu0 %v4965
    %v5033 = vpop.f32.mrb[0].mxu0
    %v5034 = vadd.f32 %v4961, %v5033
    %v5035 = vpop.f32.mrb[0].mxu0
    %5036 = vdwg.mxu0
    %5037 = vst [vmem:[#allocation16] sm:$0xff] %v5034
    // Predicated region
    $region70: #{tpu_custom_call.1} parent=1 // pred_check
      _
    $region71: #{tpu_custom_call.1} parent=1 // pred_check_branch
      %5039 = sbr.rel (0) target = $region73
    $region72: #{tpu_custom_call.1} parent=1 // pred_region
      %s5041 = ssub.s32 128, 128
      %5042 = vsyncadd [#allocation4], %s5041
      %s5044 = sshll.u32 [#allocation16], 4
      %s5045 = int_to_ptr.vmem [resolvable:$true] %s5044
      %5047 = dma.vmem_to_hbm [thread:$0]  %s5045, 128, %s9, [#allocation4]
    $region73: #{tpu_custom_call.1} parent=1 // pred_fallthru
      _
    // Predicated region
    $region74: #{tpu_custom_call.1} parent=1 // pred_check
      _
    $region75: #{tpu_custom_call.1} parent=1 // pred_check_branch
      %5049 = sbr.rel (0) target = $region77
    $region76: #{tpu_custom_call.1} parent=1 // pred_region
      %5050 = dma.done [#allocation4], 128
    $region77: #{tpu_custom_call.1} parent=1 // pred_fallthru
      _
    %5051 = vsyncpa [#allocation3], 1
    %5052 = vsyncpa [#allocation6], 1
    %5053 = vsyncpa [#allocation9], 1
    %5054 = vsyncpa [#allocation12], 1
    %5055 = vsyncpa [#allocation15], 1
    %5056 = vsyncpa [#allocation4], 1

</llo_original>
